<compile_context>
chip_gen: v6e
topology: v6e:2x2x1
jax: 0.10.0
libtpu: 0.0.40
codegen_flags: <defaults>
</compile_context>

<pallas_src>
import functools
import math

import jax
import jax.numpy as jnp
from jax import lax
from jax.experimental import pallas as pl
from jax.experimental.pallas import tpu as pltpu


# ----------------------------------------------------------------------------
# tiling helpers
# ----------------------------------------------------------------------------

def _row_tile(r, cap=2048):
    """Largest power-of-two <= cap (>=8) dividing r, else r itself (full dim)."""
    t = cap
    while t >= 8:
        if t <= r and r % t == 0:
            return t
        t //= 2
    return r


def _lane_fold(rows, c, cap=1024):
    """How many consecutive spatial rows to fold into the lane dim so the
    elementwise kernels see a lane width of m*c (>=128 when possible)."""
    m = 1
    while rows % (m * 2) == 0 and (m * 2) * c <= cap:
        m *= 2
    return m


# ----------------------------------------------------------------------------
# Pallas kernels
# ----------------------------------------------------------------------------

def _conv_stats_kernel(p_ref, w_ref, b_ref, y_ref, s_ref, *, apply_silu):
    # p: (tr, K) bf16, w: (K, C) bf16, b: (1, C) f32
    y = jnp.dot(p_ref[...], w_ref[...], preferred_element_type=jnp.float32)
    y = y + b_ref[...]
    if apply_silu:
        y = y * jax.nn.sigmoid(y)
    y_ref[...] = y.astype(y_ref.dtype)
    # per-channel partial [sum, sumsq] for the following GroupNorm (f32)
    s_ref[0:1, :] = jnp.sum(y, axis=0, keepdims=True)
    s_ref[1:2, :] = jnp.sum(y * y, axis=0, keepdims=True)


def _up_conv_stats_kernel(x_ref, h_ref, wx_ref, wh_ref, b_ref, y_ref, s_ref):
    # concat-free 1x1 conv on [x, skip*skip_scale] + bias + fused SiLU + GN stats
    y = jnp.dot(x_ref[...], wx_ref[...], preferred_element_type=jnp.float32)
    y = y + jnp.dot(h_ref[...], wh_ref[...], preferred_element_type=jnp.float32)
    y = y + b_ref[...]
    y = y * jax.nn.sigmoid(y)
    y_ref[...] = y.astype(y_ref.dtype)
    s_ref[0:1, :] = jnp.sum(y, axis=0, keepdims=True)
    s_ref[1:2, :] = jnp.sum(y * y, axis=0, keepdims=True)


def _scale_shift_silu_kernel(x_ref, a_ref, b_ref, o_ref):
    # GroupNorm affine normalize (precomputed per-(n,channel) scale/shift) + SiLU
    y = x_ref[...].astype(jnp.float32) * a_ref[...] + b_ref[...]
    o_ref[...] = (y * jax.nn.sigmoid(y)).astype(o_ref.dtype)


def _add_silu_kernel(x_ref, r_ref, o_ref):
    y = x_ref[...].astype(jnp.float32) + r_ref[...].astype(jnp.float32)
    o_ref[...] = (y * jax.nn.sigmoid(y)).astype(o_ref.dtype)


# ----------------------------------------------------------------------------
# Pallas wrappers
# ----------------------------------------------------------------------------

def conv_matmul_stats(patches, wmat, bias, *, apply_silu, out_dtype=jnp.bfloat16):
    """patches: (N, R, K); wmat: (K, C); bias: (C,).  Returns y (N, R, C) and
    per-tile per-channel [sum, sumsq] partials (N, T, 2, C) in f32."""
    N, R, K = patches.shape
    C = wmat.shape[1]
    tr = _row_tile(R, cap=2048)
    T = R // tr
    b2 = bias.astype(jnp.float32).reshape(1, C)
    kernel = functools.partial(_conv_stats_kernel, apply_silu=apply_silu)
    y, stats = pl.pallas_call(
        kernel,
        out_shape=(jax.ShapeDtypeStruct((N, R, C), out_dtype),
                   jax.ShapeDtypeStruct((N, T, 2, C), jnp.float32)),
        grid=(N, T),
        in_specs=[
            pl.BlockSpec((None, tr, K), lambda n, t: (n, t, 0)),
            pl.BlockSpec((K, C), lambda n, t: (0, 0)),
            pl.BlockSpec((1, C), lambda n, t: (0, 0)),
        ],
        out_specs=(
            pl.BlockSpec((None, tr, C), lambda n, t: (n, t, 0)),
            pl.BlockSpec((None, None, 2, C), lambda n, t: (n, t, 0, 0)),
        ),
        compiler_params=pltpu.CompilerParams(
            dimension_semantics=("parallel", "parallel")),
    )(patches, wmat, b2)
    return y, stats


def up_conv_stats(x_rows, h_rows, wx, wh, bias, *, out_dtype=jnp.bfloat16):
    """Fused PixelShuffleUpsample conv: y = SiLU(x@wx + h@wh + b) plus GN stats."""
    N, R, M = x_rows.shape
    C = wx.shape[1]
    tr = _row_tile(R, cap=2048)
    T = R // tr
    b2 = bias.astype(jnp.float32).reshape(1, C)
    y, stats = pl.pallas_call(
        _up_conv_stats_kernel,
        out_shape=(jax.ShapeDtypeStruct((N, R, C), out_dtype),
                   jax.ShapeDtypeStruct((N, T, 2, C), jnp.float32)),
        grid=(N, T),
        in_specs=[
            pl.BlockSpec((None, tr, M), lambda n, t: (n, t, 0)),
            pl.BlockSpec((None, tr, M), lambda n, t: (n, t, 0)),
            pl.BlockSpec((M, C), lambda n, t: (0, 0)),
            pl.BlockSpec((M, C), lambda n, t: (0, 0)),
            pl.BlockSpec((1, C), lambda n, t: (0, 0)),
        ],
        out_specs=(
            pl.BlockSpec((None, tr, C), lambda n, t: (n, t, 0)),
            pl.BlockSpec((None, None, 2, C), lambda n, t: (n, t, 0, 0)),
        ),
        compiler_params=pltpu.CompilerParams(
            dimension_semantics=("parallel", "parallel")),
    )(x_rows, h_rows, wx, wh, b2)
    return y, stats


def scale_shift_silu(y, scale, shift, *, out_dtype):
    """y: (N, R, C); scale/shift: (N, C) f32.  Lane-dense normalize + SiLU."""
    N, R, C = y.shape
    m = _lane_fold(R, C)
    L = m * C
    R2 = R // m
    yv = y.reshape(N, R2, L)
    a = jnp.tile(scale, (1, m)).reshape(N, 1, L)
    b = jnp.tile(shift, (1, m)).reshape(N, 1, L)
    tr = _row_tile(R2, cap=512)
    out = pl.pallas_call(
        _scale_shift_silu_kernel,
        out_shape=jax.ShapeDtypeStruct((N, R2, L), out_dtype),
        grid=(N, R2 // tr),
        in_specs=[
            pl.BlockSpec((None, tr, L), lambda n, t: (n, t, 0)),
            pl.BlockSpec((None, 1, L), lambda n, t: (n, 0, 0)),
            pl.BlockSpec((None, 1, L), lambda n, t: (n, 0, 0)),
        ],
        out_specs=pl.BlockSpec((None, tr, L), lambda n, t: (n, t, 0)),
        compiler_params=pltpu.CompilerParams(
            dimension_semantics=("parallel", "parallel")),
    )(yv, a, b)
    return out.reshape(N, R, C)


def add_silu(x, residual, *, out_dtype):
    """x, residual: (N, F, H, W, C).  Returns SiLU(x + residual) lane-dense."""
    N = x.shape[0]
    C = x.shape[-1]
    R = math.prod(x.shape[1:-1])
    m = _lane_fold(R, C)
    L = m * C
    R2 = R // m
    xv = x.reshape(N, R2, L)
    rv = residual.reshape(N, R2, L)
    tr = _row_tile(R2, cap=512)
    out = pl.pallas_call(
        _add_silu_kernel,
        out_shape=jax.ShapeDtypeStruct((N, R2, L), out_dtype),
        grid=(N, R2 // tr),
        in_specs=[
            pl.BlockSpec((None, tr, L), lambda n, t: (n, t, 0)),
            pl.BlockSpec((None, tr, L), lambda n, t: (n, t, 0)),
        ],
        out_specs=pl.BlockSpec((None, tr, L), lambda n, t: (n, t, 0)),
        compiler_params=pltpu.CompilerParams(
            dimension_semantics=("parallel", "parallel")),
    )(xv, rv)
    return out.reshape(x.shape)


# ----------------------------------------------------------------------------
# GroupNorm coefficients from fused partial stats (matches torch.nn.GroupNorm)
# ----------------------------------------------------------------------------

def gn_scale_shift(stats, gamma, beta, groups, stat_rows, out_channels, eps=1e-5):
    N, _, _, c_pre = stats.shape
    G = groups
    s = jnp.sum(stats, axis=1)                                 # (N, 2, Cpre)
    per_g = jnp.sum(s.reshape(N, 2, G, c_pre // G), axis=-1)   # (N, 2, G)
    count = (c_pre // G) * stat_rows
    mean = per_g[:, 0] / count
    var = per_g[:, 1] / count - mean * mean                    # biased, like torch
    inv = lax.rsqrt(jnp.maximum(var, 0.0) + eps)
    cg = out_channels // G
    scale = gamma.astype(jnp.float32)[None, :] * jnp.repeat(inv, cg, axis=1)
    shift = beta.astype(jnp.float32)[None, :] - jnp.repeat(mean, cg, axis=1) * scale
    return scale, shift                                        # (N, C) f32 each


# ----------------------------------------------------------------------------
# layout / im2col glue (JAX, channels-last)
# ----------------------------------------------------------------------------

def _prep_conv_weight(w):
    """(Cout, Cin, 1, KH, KW) torch layout -> (KH*KW*Cin, Cout) bf16, rows
    ordered (kh, kw, cin) to match the tap-concat patch layout."""
    c_out, c_in, _, kh, kw = w.shape
    wk = jnp.transpose(w[:, :, 0], (2, 3, 1, 0)).reshape(kh * kw * c_in, c_out)
    return wk.astype(jnp.bfloat16)


def _conv_patches(x_cl, kh, kw, stride):
    """im2col for a (1, kh, kw) conv (pad (0,1,1)).  x_cl: (N, F, H, W, C) bf16
    -> patches (N, F*Ho*Wo, kh*kw*C), dims (N, F, Ho, Wo)."""
    N, F, H, W, C = x_cl.shape
    Ho, Wo = H // stride, W // stride
    xp = jnp.pad(x_cl, ((0, 0), (0, 0), (1, 1), (1, 1), (0, 0)))
    taps = []
    for i in range(kh):
        for j in range(kw):
            taps.append(xp[:, :, i:i + stride * Ho:stride,
                           j:j + stride * Wo:stride, :])
    patches = jnp.concatenate(taps, axis=-1)        # (..., kh*kw*C), (kh,kw,cin)
    return patches.reshape(N, F * Ho * Wo, kh * kw * C), (N, F, Ho, Wo)


def pixel_shuffle_cl(y, dims, c_out):
    """y: (N, F*h*w, 4*c_out) with channel layout (c, r, s) ->
    (N, F, 2h, 2w, c_out), i.e. 'b (c r s) f h w -> b c f (h r) (w s)'."""
    N, F, h, w = dims
    y = y.reshape(N, F, h, w, c_out, 2, 2)
    y = jnp.transpose(y, (0, 1, 2, 5, 3, 6, 4))     # (N, F, h, r, w, s, c)
    return y.reshape(N, F, 2 * h, 2 * w, c_out)


# ----------------------------------------------------------------------------
# NestedResidualUnet forward
# ----------------------------------------------------------------------------

def nested_residual_unet_forward(x, params, *, depth, groups, add_residual=False,
                                 eps=1e-5):
    """x: (N, C, F, H, W) float32 (PyTorch NCDHW).  Returns same shape/dtype."""
    N, _, F, H, W = x.shape
    x_cl = jnp.transpose(x, (0, 2, 3, 4, 1))        # channels-last, f32
    residual = x_cl
    xc = x_cl.astype(jnp.bfloat16)

    hiddens = []
    for ind in range(depth):
        p = params["downs"][ind]
        patches, dims = _conv_patches(xc, 4, 4, stride=2)
        wk = _prep_conv_weight(p["conv_w"])
        y, stats = conv_matmul_stats(patches, wk, p["conv_b"], apply_silu=False)
        _, Fd, Ho, Wo = dims
        R = Fd * Ho * Wo
        C = p["conv_w"].shape[0]
        scale, shift = gn_scale_shift(stats, p["gn_w"], p["gn_b"], groups, R, C, eps)
        xn = scale_shift_silu(y, scale, shift, out_dtype=jnp.bfloat16)
        xc = xn.reshape(N, Fd, Ho, Wo, C)
        hiddens.append(xc)

    pm = params["mid"]
    patches, dims = _conv_patches(xc, 3, 3, stride=1)
    wk = _prep_conv_weight(pm["conv_w"])
    y, stats = conv_matmul_stats(patches, wk, pm["conv_b"], apply_silu=False)
    _, Fd, Ho, Wo = dims
    R = Fd * Ho * Wo
    C = pm["conv_w"].shape[0]
    scale, shift = gn_scale_shift(stats, pm["gn_w"], pm["gn_b"], groups, R, C, eps)
    xn = scale_shift_silu(y, scale, shift, out_dtype=jnp.bfloat16)
    xc = xn.reshape(N, Fd, Ho, Wo, C)

    for ind in reversed(range(depth)):
        p = params["ups"][ind]
        h_skip = hiddens.pop()
        _, Fc, hh, ww, M = xc.shape
        R = Fc * hh * ww
        x_rows = xc.reshape(N, R, M)
        h_rows = h_skip.reshape(N, R, M)
        c4 = p["conv_w_scaled"].shape[0]
        c_out = c4 // 4
        wm = jnp.transpose(p["conv_w_scaled"].reshape(c4, 2 * M), (1, 0))
        wx = wm[:M].astype(jnp.bfloat16)
        wh = wm[M:].astype(jnp.bfloat16)              # skip_scale folded (exact)
        y, stats = up_conv_stats(x_rows, h_rows, wx, wh, p["conv_b"])
        x_ps = pixel_shuffle_cl(y, (N, Fc, hh, ww), c_out)   # (N, F, 2h, 2w, c)
        scale, shift = gn_scale_shift(stats, p["gn_w"], p["gn_b"], groups, R,
                                      c_out, eps)
        is_last = ind == 0
        out_dt = x.dtype if (is_last and not add_residual) else jnp.bfloat16
        xn = scale_shift_silu(x_ps.reshape(N, R * 4, c_out), scale, shift,
                              out_dtype=out_dt)
        xc = xn.reshape(N, Fc, 2 * hh, 2 * ww, c_out)

    if add_residual:
        xc = add_silu(xc, residual, out_dtype=x.dtype)

    return jnp.transpose(xc, (0, 4, 1, 2, 3)).astype(x.dtype)


# ----------------------------------------------------------------------------
# Deterministic parameter init (shapes follow the PyTorch __init__)
# ----------------------------------------------------------------------------

def init_params(key, *, dim, depth, M, skip_scale):
    def nxt():
        nonlocal key
        key, sub = jax.random.split(key)
        return sub

    def normal(shape, scale=0.05):
        return (scale * jax.random.normal(nxt(), shape)).astype(jnp.float32)

    downs, ups = [], []
    for ind in range(depth):
        dim_in = dim if ind == 0 else M
        downs.append(dict(
            conv_w=normal((M, dim_in, 1, 4, 4)),
            conv_b=normal((M,)),
            gn_w=1.0 + normal((M,)),
            gn_b=normal((M,)),
        ))
        up_w = normal((4 * dim_in, 2 * M, 1, 1, 1))
        # fold skip connection scale into input channels M..2M-1 of the 1x1 conv
        up_w = up_w.at[:, M:].multiply(skip_scale)
        ups.append(dict(
            conv_w_scaled=up_w,
            conv_b=normal((4 * dim_in,)),
            gn_w=1.0 + normal((dim_in,)),
            gn_b=normal((dim_in,)),
        ))
    mid = dict(
        conv_w=normal((M, M, 1, 3, 3)),
        conv_b=normal((M,)),
        gn_w=1.0 + normal((M,)),
        gn_b=normal((M,)),
    )
    return dict(downs=downs, ups=ups, mid=mid)


# ----------------------------------------------------------------------------

if __name__ == "__main__":
    dim, depth, M, groups = 4, 2, 32, 4
    skip_scale = 2 ** (-0.5)

    key = jax.random.PRNGKey(0)
    pkey, xkey = jax.random.split(key)
    params = init_params(pkey, dim=dim, depth=depth, M=M, skip_scale=skip_scale)

    # video input (N, C, F, H, W); H == W and divisible by 2**depth
    x = jax.random.normal(xkey, (2, dim, 2, 16, 16), dtype=jnp.float32)

    fwd = jax.jit(functools.partial(
        nested_residual_unet_forward, depth=depth, groups=groups,
        add_residual=False))
    out = fwd(x, params)
    jax.block_until_ready(out)
    assert out.shape == x.shape and out.dtype == x.dtype
    print("KERNEL_OK")
</pallas_src>

<mosaic_0001>
module attributes {stable_mosaic.version = 11 : i64} {
  func.func @_conv_stats_kernel(%arg0: i32, %arg1: i32, %arg2: memref<1x128x64xbf16, #tpu.memory_space<vmem>>, %arg3: memref<64x32xbf16, #tpu.memory_space<vmem>>, %arg4: memref<1x32xf32, #tpu.memory_space<vmem>>, %arg5: memref<1x128x32xbf16, #tpu.memory_space<vmem>>, %arg6: memref<1x1x2x32xf32, #tpu.memory_space<vmem>>) attributes {dimension_semantics = [#tpu.dimension_semantics<parallel>, #tpu.dimension_semantics<parallel>], iteration_bounds = array<i64: 2, 1>, scalar_prefetch = 0 : i64, scratch_operands = 0 : i64, tpu.core_type = #tpu.core_type<tc>, window_params = [{transform_indices = @transform_0, window_bounds = array<i64: 1, 128, 64>}, {pipeline_mode = #tpu.pipeline_mode<synchronous>, transform_indices = @transform_1, window_bounds = array<i64: 64, 32>}, {pipeline_mode = #tpu.pipeline_mode<synchronous>, transform_indices = @transform_2, window_bounds = array<i64: 1, 32>}, {transform_indices = @transform_3, window_bounds = array<i64: 1, 128, 32>}, {transform_indices = @transform_4, window_bounds = array<i64: 1, 1, 2, 32>}]} {
    %c0 = arith.constant 0 : index
    %c0_0 = arith.constant 0 : index
    %c0_1 = arith.constant 0 : index
    %0 = vector.load %arg2[%c0, %c0_0, %c0_1] : memref<1x128x64xbf16, #tpu.memory_space<vmem>>, vector<1x128x64xbf16>
    %1 = vector.shape_cast %0 : vector<1x128x64xbf16> to vector<128x64xbf16>
    %c0_2 = arith.constant 0 : index
    %c0_3 = arith.constant 0 : index
    %2 = vector.load %arg3[%c0_2, %c0_3] : memref<64x32xbf16, #tpu.memory_space<vmem>>, vector<64x32xbf16>
    %cst = arith.constant dense<0.000000e+00> : vector<128x32xf32>
    %3 = tpu.matmul %1, %2, %cst {dimension_numbers = #tpu.dot_dimension_numbers<[1], [0], [0], [1], [0, 0, 1, 1], [], []>} : vector<128x64xbf16>, vector<64x32xbf16>, vector<128x32xf32> -> vector<128x32xf32>
    %c0_4 = arith.constant 0 : index
    %c0_5 = arith.constant 0 : index
    %4 = vector.load %arg4[%c0_4, %c0_5] : memref<1x32xf32, #tpu.memory_space<vmem>>, vector<1x32xf32>
    %5 = vector.broadcast %4 : vector<1x32xf32> to vector<128x32xf32>
    %6 = arith.addf %3, %5 : vector<128x32xf32>
    %7 = arith.truncf %6 : vector<128x32xf32> to vector<128x32xbf16>
    %c0_6 = arith.constant 0 : index
    %c0_7 = arith.constant 0 : index
    %c0_8 = arith.constant 0 : index
    %8 = vector.load %arg5[%c0_6, %c0_7, %c0_8] : memref<1x128x32xbf16, #tpu.memory_space<vmem>>, vector<1x128x32xbf16>
    %9 = vector.shape_cast %8 : vector<1x128x32xbf16> to vector<128x32xbf16>
    %10 = vector.shape_cast %7 : vector<128x32xbf16> to vector<1x128x32xbf16>
    tpu.vector_store %arg5[%c0_6, %c0_7, %c0_8], %10 {strides = array<i32>} : memref<1x128x32xbf16, #tpu.memory_space<vmem>>, vector<1x128x32xbf16>,
    %cst_9 = arith.constant dense<0.000000e+00> : vector<32xf32>
    %11 = vector.multi_reduction <add>, %6, %cst_9 [0] : vector<128x32xf32> to vector<32xf32>
    %12 = vector.shape_cast %11 : vector<32xf32> to vector<1x32xf32>
    %c0_10 = arith.constant 0 : index
    %c0_11 = arith.constant 0 : index
    %c0_12 = arith.constant 0 : index
    %c0_13 = arith.constant 0 : index
    %13 = vector.load %arg6[%c0_10, %c0_11, %c0_12, %c0_13] : memref<1x1x2x32xf32, #tpu.memory_space<vmem>>, vector<1x1x1x32xf32>
    %14 = vector.shape_cast %13 : vector<1x1x1x32xf32> to vector<1x32xf32>
    %15 = vector.shape_cast %12 : vector<1x32xf32> to vector<1x1x1x32xf32>
    tpu.vector_store %arg6[%c0_10, %c0_11, %c0_12, %c0_13], %15 {strides = array<i32>} : memref<1x1x2x32xf32, #tpu.memory_space<vmem>>, vector<1x1x1x32xf32>,
    %16 = arith.mulf %6, %6 : vector<128x32xf32>
    %cst_14 = arith.constant dense<0.000000e+00> : vector<32xf32>
    %17 = vector.multi_reduction <add>, %16, %cst_14 [0] : vector<128x32xf32> to vector<32xf32>
    %18 = vector.shape_cast %17 : vector<32xf32> to vector<1x32xf32>
    %c0_15 = arith.constant 0 : index
    %c0_16 = arith.constant 0 : index
    %c1 = arith.constant 1 : index
    %c0_17 = arith.constant 0 : index
    %19 = vector.load %arg6[%c0_15, %c0_16, %c1, %c0_17] : memref<1x1x2x32xf32, #tpu.memory_space<vmem>>, vector<1x1x1x32xf32>
    %20 = vector.shape_cast %19 : vector<1x1x1x32xf32> to vector<1x32xf32>
    %21 = vector.shape_cast %18 : vector<1x32xf32> to vector<1x1x1x32xf32>
    tpu.vector_store %arg6[%c0_15, %c0_16, %c1, %c0_17], %21 {strides = array<i32>} : memref<1x1x2x32xf32, #tpu.memory_space<vmem>>, vector<1x1x1x32xf32>,
    return
  }
  func.func @transform_0(%arg0: i32, %arg1: i32) -> (i32, i32, i32) {
    %c0_i32 = arith.constant 0 : i32
    %c0_i32_0 = arith.constant 0 : i32
    return %arg0, %arg1, %c0_i32 : i32, i32, i32
  }
  func.func @transform_1(%arg0: i32, %arg1: i32) -> (i32, i32) {
    %c0_i32 = arith.constant 0 : i32
    %c0_i32_0 = arith.constant 0 : i32
    %c0_i32_1 = arith.constant 0 : i32
    return %c0_i32, %c0_i32_0 : i32, i32
  }
  func.func @transform_2(%arg0: i32, %arg1: i32) -> (i32, i32) {
    %c0_i32 = arith.constant 0 : i32
    %c0_i32_0 = arith.constant 0 : i32
    %c0_i32_1 = arith.constant 0 : i32
    return %c0_i32, %c0_i32_0 : i32, i32
  }
  func.func @transform_3(%arg0: i32, %arg1: i32) -> (i32, i32, i32) {
    %c0_i32 = arith.constant 0 : i32
    %c0_i32_0 = arith.constant 0 : i32
    return %arg0, %arg1, %c0_i32 : i32, i32, i32
  }
  func.func @transform_4(%arg0: i32, %arg1: i32) -> (i32, i32, i32, i32) {
    %c0_i32 = arith.constant 0 : i32
    %c0_i32_0 = arith.constant 0 : i32
    %c0_i32_1 = arith.constant 0 : i32
    return %arg0, %arg1, %c0_i32, %c0_i32_0 : i32, i32, i32, i32
  }
}

module attributes {stable_mosaic.version = 11 : i64} {
  func.func @_scale_shift_silu_kernel(%arg0: i32, %arg1: i32, %arg2: memref<1x4x1024xbf16, #tpu.memory_space<vmem>>, %arg3: memref<1x1x1024xf32, #tpu.memory_space<vmem>>, %arg4: memref<1x1x1024xf32, #tpu.memory_space<vmem>>, %arg5: memref<1x4x1024xbf16, #tpu.memory_space<vmem>>) attributes {dimension_semantics = [#tpu.dimension_semantics<parallel>, #tpu.dimension_semantics<parallel>], iteration_bounds = array<i64: 2, 1>, scalar_prefetch = 0 : i64, scratch_operands = 0 : i64, tpu.core_type = #tpu.core_type<tc>, window_params = [{transform_indices = @transform_0, window_bounds = array<i64: 1, 4, 1024>}, {transform_indices = @transform_1, window_bounds = array<i64: 1, 1, 1024>}, {transform_indices = @transform_2, window_bounds = array<i64: 1, 1, 1024>}, {transform_indices = @transform_3, window_bounds = array<i64: 1, 4, 1024>}]} {
    %c0 = arith.constant 0 : index
    %c0_0 = arith.constant 0 : index
    %c0_1 = arith.constant 0 : index
    %0 = vector.load %arg2[%c0, %c0_0, %c0_1] : memref<1x4x1024xbf16, #tpu.memory_space<vmem>>, vector<1x4x1024xbf16>
    %1 = vector.shape_cast %0 : vector<1x4x1024xbf16> to vector<4x1024xbf16>
    %2 = arith.extf %1 : vector<4x1024xbf16> to vector<4x1024xf32>
    %c0_2 = arith.constant 0 : index
    %c0_3 = arith.constant 0 : index
    %c0_4 = arith.constant 0 : index
    %3 = vector.load %arg3[%c0_2, %c0_3, %c0_4] : memref<1x1x1024xf32, #tpu.memory_space<vmem>>, vector<1x1x1024xf32>
    %4 = vector.shape_cast %3 : vector<1x1x1024xf32> to vector<1x1024xf32>
    %5 = vector.broadcast %4 : vector<1x1024xf32> to vector<4x1024xf32>
    %6 = arith.mulf %2, %5 : vector<4x1024xf32>
    %c0_5 = arith.constant 0 : index
    %c0_6 = arith.constant 0 : index
    %c0_7 = arith.constant 0 : index
    %7 = vector.load %arg4[%c0_5, %c0_6, %c0_7] : memref<1x1x1024xf32, #tpu.memory_space<vmem>>, vector<1x1x1024xf32>
    %8 = vector.shape_cast %7 : vector<1x1x1024xf32> to vector<1x1024xf32>
    %9 = vector.broadcast %8 : vector<1x1024xf32> to vector<4x1024xf32>
    %10 = arith.addf %6, %9 : vector<4x1024xf32>
    %11 = arith.negf %10 : vector<4x1024xf32>
    %12 = math.exp %11 : vector<4x1024xf32>
    %cst = arith.constant 1.000000e+00 : f32
    %13 = vector.broadcast %cst : f32 to vector<4x1024xf32>
    %14 = arith.addf %13, %12 : vector<4x1024xf32>
    %15 = arith.divf %13, %14 : vector<4x1024xf32>
    %16 = arith.mulf %10, %15 : vector<4x1024xf32>
    %17 = arith.truncf %16 : vector<4x1024xf32> to vector<4x1024xbf16>
    %c0_8 = arith.constant 0 : index
    %c0_9 = arith.constant 0 : index
    %c0_10 = arith.constant 0 : index
    %18 = vector.load %arg5[%c0_8, %c0_9, %c0_10] : memref<1x4x1024xbf16, #tpu.memory_space<vmem>>, vector<1x4x1024xbf16>
    %19 = vector.shape_cast %18 : vector<1x4x1024xbf16> to vector<4x1024xbf16>
    %20 = vector.shape_cast %17 : vector<4x1024xbf16> to vector<1x4x1024xbf16>
    tpu.vector_store %arg5[%c0_8, %c0_9, %c0_10], %20 {strides = array<i32>} : memref<1x4x1024xbf16, #tpu.memory_space<vmem>>, vector<1x4x1024xbf16>,
    return
  }
  func.func @transform_0(%arg0: i32, %arg1: i32) -> (i32, i32, i32) {
    %c0_i32 = arith.constant 0 : i32
    %c0_i32_0 = arith.constant 0 : i32
    return %arg0, %arg1, %c0_i32 : i32, i32, i32
  }
  func.func @transform_1(%arg0: i32, %arg1: i32) -> (i32, i32, i32) {
    %c0_i32 = arith.constant 0 : i32
    %c0_i32_0 = arith.constant 0 : i32
    %c0_i32_1 = arith.constant 0 : i32
    return %arg0, %c0_i32, %c0_i32_0 : i32, i32, i32
  }
  func.func @transform_2(%arg0: i32, %arg1: i32) -> (i32, i32, i32) {
    %c0_i32 = arith.constant 0 : i32
    %c0_i32_0 = arith.constant 0 : i32
    %c0_i32_1 = arith.constant 0 : i32
    return %arg0, %c0_i32, %c0_i32_0 : i32, i32, i32
  }
  func.func @transform_3(%arg0: i32, %arg1: i32) -> (i32, i32, i32) {
    %c0_i32 = arith.constant 0 : i32
    %c0_i32_0 = arith.constant 0 : i32
    return %arg0, %arg1, %c0_i32 : i32, i32, i32
  }
}

module attributes {stable_mosaic.version = 11 : i64} {
  func.func @_conv_stats_kernel(%arg0: i32, %arg1: i32, %arg2: memref<1x32x512xbf16, #tpu.memory_space<vmem>>, %arg3: memref<512x32xbf16, #tpu.memory_space<vmem>>, %arg4: memref<1x32xf32, #tpu.memory_space<vmem>>, %arg5: memref<1x32x32xbf16, #tpu.memory_space<vmem>>, %arg6: memref<1x1x2x32xf32, #tpu.memory_space<vmem>>) attributes {dimension_semantics = [#tpu.dimension_semantics<parallel>, #tpu.dimension_semantics<parallel>], iteration_bounds = array<i64: 2, 1>, scalar_prefetch = 0 : i64, scratch_operands = 0 : i64, tpu.core_type = #tpu.core_type<tc>, window_params = [{transform_indices = @transform_0, window_bounds = array<i64: 1, 32, 512>}, {pipeline_mode = #tpu.pipeline_mode<synchronous>, transform_indices = @transform_1, window_bounds = array<i64: 512, 32>}, {pipeline_mode = #tpu.pipeline_mode<synchronous>, transform_indices = @transform_2, window_bounds = array<i64: 1, 32>}, {transform_indices = @transform_3, window_bounds = array<i64: 1, 32, 32>}, {transform_indices = @transform_4, window_bounds = array<i64: 1, 1, 2, 32>}]} {
    %c0 = arith.constant 0 : index
    %c0_0 = arith.constant 0 : index
    %c0_1 = arith.constant 0 : index
    %0 = vector.load %arg2[%c0, %c0_0, %c0_1] : memref<1x32x512xbf16, #tpu.memory_space<vmem>>, vector<1x32x512xbf16>
    %1 = vector.shape_cast %0 : vector<1x32x512xbf16> to vector<32x512xbf16>
    %c0_2 = arith.constant 0 : index
    %c0_3 = arith.constant 0 : index
    %2 = vector.load %arg3[%c0_2, %c0_3] : memref<512x32xbf16, #tpu.memory_space<vmem>>, vector<512x32xbf16>
    %cst = arith.constant dense<0.000000e+00> : vector<32x32xf32>
    %3 = tpu.matmul %1, %2, %cst {dimension_numbers = #tpu.dot_dimension_numbers<[1], [0], [0], [1], [0, 0, 1, 1], [], []>} : vector<32x512xbf16>, vector<512x32xbf16>, vector<32x32xf32> -> vector<32x32xf32>
    %c0_4 = arith.constant 0 : index
    %c0_5 = arith.constant 0 : index
    %4 = vector.load %arg4[%c0_4, %c0_5] : memref<1x32xf32, #tpu.memory_space<vmem>>, vector<1x32xf32>
    %5 = vector.broadcast %4 : vector<1x32xf32> to vector<32x32xf32>
    %6 = arith.addf %3, %5 : vector<32x32xf32>
    %7 = arith.truncf %6 : vector<32x32xf32> to vector<32x32xbf16>
    %c0_6 = arith.constant 0 : index
    %c0_7 = arith.constant 0 : index
    %c0_8 = arith.constant 0 : index
    %8 = vector.load %arg5[%c0_6, %c0_7, %c0_8] : memref<1x32x32xbf16, #tpu.memory_space<vmem>>, vector<1x32x32xbf16>
    %9 = vector.shape_cast %8 : vector<1x32x32xbf16> to vector<32x32xbf16>
    %10 = vector.shape_cast %7 : vector<32x32xbf16> to vector<1x32x32xbf16>
    tpu.vector_store %arg5[%c0_6, %c0_7, %c0_8], %10 {strides = array<i32>} : memref<1x32x32xbf16, #tpu.memory_space<vmem>>, vector<1x32x32xbf16>,
    %cst_9 = arith.constant dense<0.000000e+00> : vector<32xf32>
    %11 = vector.multi_reduction <add>, %6, %cst_9 [0] : vector<32x32xf32> to vector<32xf32>
    %12 = vector.shape_cast %11 : vector<32xf32> to vector<1x32xf32>
    %c0_10 = arith.constant 0 : index
    %c0_11 = arith.constant 0 : index
    %c0_12 = arith.constant 0 : index
    %c0_13 = arith.constant 0 : index
    %13 = vector.load %arg6[%c0_10, %c0_11, %c0_12, %c0_13] : memref<1x1x2x32xf32, #tpu.memory_space<vmem>>, vector<1x1x1x32xf32>
    %14 = vector.shape_cast %13 : vector<1x1x1x32xf32> to vector<1x32xf32>
    %15 = vector.shape_cast %12 : vector<1x32xf32> to vector<1x1x1x32xf32>
    tpu.vector_store %arg6[%c0_10, %c0_11, %c0_12, %c0_13], %15 {strides = array<i32>} : memref<1x1x2x32xf32, #tpu.memory_space<vmem>>, vector<1x1x1x32xf32>,
    %16 = arith.mulf %6, %6 : vector<32x32xf32>
    %cst_14 = arith.constant dense<0.000000e+00> : vector<32xf32>
    %17 = vector.multi_reduction <add>, %16, %cst_14 [0] : vector<32x32xf32> to vector<32xf32>
    %18 = vector.shape_cast %17 : vector<32xf32> to vector<1x32xf32>
    %c0_15 = arith.constant 0 : index
    %c0_16 = arith.constant 0 : index
    %c1 = arith.constant 1 : index
    %c0_17 = arith.constant 0 : index
    %19 = vector.load %arg6[%c0_15, %c0_16, %c1, %c0_17] : memref<1x1x2x32xf32, #tpu.memory_space<vmem>>, vector<1x1x1x32xf32>
    %20 = vector.shape_cast %19 : vector<1x1x1x32xf32> to vector<1x32xf32>
    %21 = vector.shape_cast %18 : vector<1x32xf32> to vector<1x1x1x32xf32>
    tpu.vector_store %arg6[%c0_15, %c0_16, %c1, %c0_17], %21 {strides = array<i32>} : memref<1x1x2x32xf32, #tpu.memory_space<vmem>>, vector<1x1x1x32xf32>,
    return
  }
  func.func @transform_0(%arg0: i32, %arg1: i32) -> (i32, i32, i32) {
    %c0_i32 = arith.constant 0 : i32
    %c0_i32_0 = arith.constant 0 : i32
    return %arg0, %arg1, %c0_i32 : i32, i32, i32
  }
  func.func @transform_1(%arg0: i32, %arg1: i32) -> (i32, i32) {
    %c0_i32 = arith.constant 0 : i32
    %c0_i32_0 = arith.constant 0 : i32
    %c0_i32_1 = arith.constant 0 : i32
    return %c0_i32, %c0_i32_0 : i32, i32
  }
  func.func @transform_2(%arg0: i32, %arg1: i32) -> (i32, i32) {
    %c0_i32 = arith.constant 0 : i32
    %c0_i32_0 = arith.constant 0 : i32
    %c0_i32_1 = arith.constant 0 : i32
    return %c0_i32, %c0_i32_0 : i32, i32
  }
  func.func @transform_3(%arg0: i32, %arg1: i32) -> (i32, i32, i32) {
    %c0_i32 = arith.constant 0 : i32
    %c0_i32_0 = arith.constant 0 : i32
    return %arg0, %arg1, %c0_i32 : i32, i32, i32
  }
  func.func @transform_4(%arg0: i32, %arg1: i32) -> (i32, i32, i32, i32) {
    %c0_i32 = arith.constant 0 : i32
    %c0_i32_0 = arith.constant 0 : i32
    %c0_i32_1 = arith.constant 0 : i32
    return %arg0, %arg1, %c0_i32, %c0_i32_0 : i32, i32, i32, i32
  }
}

module attributes {stable_mosaic.version = 11 : i64} {
  func.func @_scale_shift_silu_kernel(%arg0: i32, %arg1: i32, %arg2: memref<1x1x1024xbf16, #tpu.memory_space<vmem>>, %arg3: memref<1x1x1024xf32, #tpu.memory_space<vmem>>, %arg4: memref<1x1x1024xf32, #tpu.memory_space<vmem>>, %arg5: memref<1x1x1024xbf16, #tpu.memory_space<vmem>>) attributes {dimension_semantics = [#tpu.dimension_semantics<parallel>, #tpu.dimension_semantics<parallel>], iteration_bounds = array<i64: 2, 1>, scalar_prefetch = 0 : i64, scratch_operands = 0 : i64, tpu.core_type = #tpu.core_type<tc>, window_params = [{transform_indices = @transform_0, window_bounds = array<i64: 1, 1, 1024>}, {transform_indices = @transform_1, window_bounds = array<i64: 1, 1, 1024>}, {transform_indices = @transform_2, window_bounds = array<i64: 1, 1, 1024>}, {transform_indices = @transform_3, window_bounds = array<i64: 1, 1, 1024>}]} {
    %c0 = arith.constant 0 : index
    %c0_0 = arith.constant 0 : index
    %c0_1 = arith.constant 0 : index
    %0 = vector.load %arg2[%c0, %c0_0, %c0_1] : memref<1x1x1024xbf16, #tpu.memory_space<vmem>>, vector<1x1x1024xbf16>
    %1 = vector.shape_cast %0 : vector<1x1x1024xbf16> to vector<1x1024xbf16>
    %2 = arith.extf %1 : vector<1x1024xbf16> to vector<1x1024xf32>
    %c0_2 = arith.constant 0 : index
    %c0_3 = arith.constant 0 : index
    %c0_4 = arith.constant 0 : index
    %3 = vector.load %arg3[%c0_2, %c0_3, %c0_4] : memref<1x1x1024xf32, #tpu.memory_space<vmem>>, vector<1x1x1024xf32>
    %4 = vector.shape_cast %3 : vector<1x1x1024xf32> to vector<1x1024xf32>
    %5 = arith.mulf %2, %4 : vector<1x1024xf32>
    %c0_5 = arith.constant 0 : index
    %c0_6 = arith.constant 0 : index
    %c0_7 = arith.constant 0 : index
    %6 = vector.load %arg4[%c0_5, %c0_6, %c0_7] : memref<1x1x1024xf32, #tpu.memory_space<vmem>>, vector<1x1x1024xf32>
    %7 = vector.shape_cast %6 : vector<1x1x1024xf32> to vector<1x1024xf32>
    %8 = arith.addf %5, %7 : vector<1x1024xf32>
    %9 = arith.negf %8 : vector<1x1024xf32>
    %10 = math.exp %9 : vector<1x1024xf32>
    %cst = arith.constant 1.000000e+00 : f32
    %11 = vector.broadcast %cst : f32 to vector<1x1024xf32>
    %12 = arith.addf %11, %10 : vector<1x1024xf32>
    %13 = arith.divf %11, %12 : vector<1x1024xf32>
    %14 = arith.mulf %8, %13 : vector<1x1024xf32>
    %15 = arith.truncf %14 : vector<1x1024xf32> to vector<1x1024xbf16>
    %c0_8 = arith.constant 0 : index
    %c0_9 = arith.constant 0 : index
    %c0_10 = arith.constant 0 : index
    %16 = vector.load %arg5[%c0_8, %c0_9, %c0_10] : memref<1x1x1024xbf16, #tpu.memory_space<vmem>>, vector<1x1x1024xbf16>
    %17 = vector.shape_cast %16 : vector<1x1x1024xbf16> to vector<1x1024xbf16>
    %18 = vector.shape_cast %15 : vector<1x1024xbf16> to vector<1x1x1024xbf16>
    tpu.vector_store %arg5[%c0_8, %c0_9, %c0_10], %18 {strides = array<i32>} : memref<1x1x1024xbf16, #tpu.memory_space<vmem>>, vector<1x1x1024xbf16>,
    return
  }
  func.func @transform_0(%arg0: i32, %arg1: i32) -> (i32, i32, i32) {
    %c0_i32 = arith.constant 0 : i32
    %c0_i32_0 = arith.constant 0 : i32
    return %arg0, %arg1, %c0_i32 : i32, i32, i32
  }
  func.func @transform_1(%arg0: i32, %arg1: i32) -> (i32, i32, i32) {
    %c0_i32 = arith.constant 0 : i32
    %c0_i32_0 = arith.constant 0 : i32
    %c0_i32_1 = arith.constant 0 : i32
    return %arg0, %c0_i32, %c0_i32_0 : i32, i32, i32
  }
  func.func @transform_2(%arg0: i32, %arg1: i32) -> (i32, i32, i32) {
    %c0_i32 = arith.constant 0 : i32
    %c0_i32_0 = arith.constant 0 : i32
    %c0_i32_1 = arith.constant 0 : i32
    return %arg0, %c0_i32, %c0_i32_0 : i32, i32, i32
  }
  func.func @transform_3(%arg0: i32, %arg1: i32) -> (i32, i32, i32) {
    %c0_i32 = arith.constant 0 : i32
    %c0_i32_0 = arith.constant 0 : i32
    return %arg0, %arg1, %c0_i32 : i32, i32, i32
  }
}

module attributes {stable_mosaic.version = 11 : i64} {
  func.func @_conv_stats_kernel(%arg0: i32, %arg1: i32, %arg2: memref<1x32x288xbf16, #tpu.memory_space<vmem>>, %arg3: memref<288x32xbf16, #tpu.memory_space<vmem>>, %arg4: memref<1x32xf32, #tpu.memory_space<vmem>>, %arg5: memref<1x32x32xbf16, #tpu.memory_space<vmem>>, %arg6: memref<1x1x2x32xf32, #tpu.memory_space<vmem>>) attributes {dimension_semantics = [#tpu.dimension_semantics<parallel>, #tpu.dimension_semantics<parallel>], iteration_bounds = array<i64: 2, 1>, scalar_prefetch = 0 : i64, scratch_operands = 0 : i64, tpu.core_type = #tpu.core_type<tc>, window_params = [{transform_indices = @transform_0, window_bounds = array<i64: 1, 32, 288>}, {pipeline_mode = #tpu.pipeline_mode<synchronous>, transform_indices = @transform_1, window_bounds = array<i64: 288, 32>}, {pipeline_mode = #tpu.pipeline_mode<synchronous>, transform_indices = @transform_2, window_bounds = array<i64: 1, 32>}, {transform_indices = @transform_3, window_bounds = array<i64: 1, 32, 32>}, {transform_indices = @transform_4, window_bounds = array<i64: 1, 1, 2, 32>}]} {
    %c0 = arith.constant 0 : index
    %c0_0 = arith.constant 0 : index
    %c0_1 = arith.constant 0 : index
    %0 = vector.load %arg2[%c0, %c0_0, %c0_1] : memref<1x32x288xbf16, #tpu.memory_space<vmem>>, vector<1x32x288xbf16>
    %1 = vector.shape_cast %0 : vector<1x32x288xbf16> to vector<32x288xbf16>
    %c0_2 = arith.constant 0 : index
    %c0_3 = arith.constant 0 : index
    %2 = vector.load %arg3[%c0_2, %c0_3] : memref<288x32xbf16, #tpu.memory_space<vmem>>, vector<288x32xbf16>
    %cst = arith.constant dense<0.000000e+00> : vector<32x32xf32>
    %3 = tpu.matmul %1, %2, %cst {dimension_numbers = #tpu.dot_dimension_numbers<[1], [0], [0], [1], [0, 0, 1, 1], [], []>} : vector<32x288xbf16>, vector<288x32xbf16>, vector<32x32xf32> -> vector<32x32xf32>
    %c0_4 = arith.constant 0 : index
    %c0_5 = arith.constant 0 : index
    %4 = vector.load %arg4[%c0_4, %c0_5] : memref<1x32xf32, #tpu.memory_space<vmem>>, vector<1x32xf32>
    %5 = vector.broadcast %4 : vector<1x32xf32> to vector<32x32xf32>
    %6 = arith.addf %3, %5 : vector<32x32xf32>
    %7 = arith.truncf %6 : vector<32x32xf32> to vector<32x32xbf16>
    %c0_6 = arith.constant 0 : index
    %c0_7 = arith.constant 0 : index
    %c0_8 = arith.constant 0 : index
    %8 = vector.load %arg5[%c0_6, %c0_7, %c0_8] : memref<1x32x32xbf16, #tpu.memory_space<vmem>>, vector<1x32x32xbf16>
    %9 = vector.shape_cast %8 : vector<1x32x32xbf16> to vector<32x32xbf16>
    %10 = vector.shape_cast %7 : vector<32x32xbf16> to vector<1x32x32xbf16>
    tpu.vector_store %arg5[%c0_6, %c0_7, %c0_8], %10 {strides = array<i32>} : memref<1x32x32xbf16, #tpu.memory_space<vmem>>, vector<1x32x32xbf16>,
    %cst_9 = arith.constant dense<0.000000e+00> : vector<32xf32>
    %11 = vector.multi_reduction <add>, %6, %cst_9 [0] : vector<32x32xf32> to vector<32xf32>
    %12 = vector.shape_cast %11 : vector<32xf32> to vector<1x32xf32>
    %c0_10 = arith.constant 0 : index
    %c0_11 = arith.constant 0 : index
    %c0_12 = arith.constant 0 : index
    %c0_13 = arith.constant 0 : index
    %13 = vector.load %arg6[%c0_10, %c0_11, %c0_12, %c0_13] : memref<1x1x2x32xf32, #tpu.memory_space<vmem>>, vector<1x1x1x32xf32>
    %14 = vector.shape_cast %13 : vector<1x1x1x32xf32> to vector<1x32xf32>
    %15 = vector.shape_cast %12 : vector<1x32xf32> to vector<1x1x1x32xf32>
    tpu.vector_store %arg6[%c0_10, %c0_11, %c0_12, %c0_13], %15 {strides = array<i32>} : memref<1x1x2x32xf32, #tpu.memory_space<vmem>>, vector<1x1x1x32xf32>,
    %16 = arith.mulf %6, %6 : vector<32x32xf32>
    %cst_14 = arith.constant dense<0.000000e+00> : vector<32xf32>
    %17 = vector.multi_reduction <add>, %16, %cst_14 [0] : vector<32x32xf32> to vector<32xf32>
    %18 = vector.shape_cast %17 : vector<32xf32> to vector<1x32xf32>
    %c0_15 = arith.constant 0 : index
    %c0_16 = arith.constant 0 : index
    %c1 = arith.constant 1 : index
    %c0_17 = arith.constant 0 : index
    %19 = vector.load %arg6[%c0_15, %c0_16, %c1, %c0_17] : memref<1x1x2x32xf32, #tpu.memory_space<vmem>>, vector<1x1x1x32xf32>
    %20 = vector.shape_cast %19 : vector<1x1x1x32xf32> to vector<1x32xf32>
    %21 = vector.shape_cast %18 : vector<1x32xf32> to vector<1x1x1x32xf32>
    tpu.vector_store %arg6[%c0_15, %c0_16, %c1, %c0_17], %21 {strides = array<i32>} : memref<1x1x2x32xf32, #tpu.memory_space<vmem>>, vector<1x1x1x32xf32>,
    return
  }
  func.func @transform_0(%arg0: i32, %arg1: i32) -> (i32, i32, i32) {
    %c0_i32 = arith.constant 0 : i32
    %c0_i32_0 = arith.constant 0 : i32
    return %arg0, %arg1, %c0_i32 : i32, i32, i32
  }
  func.func @transform_1(%arg0: i32, %arg1: i32) -> (i32, i32) {
    %c0_i32 = arith.constant 0 : i32
    %c0_i32_0 = arith.constant 0 : i32
    %c0_i32_1 = arith.constant 0 : i32
    return %c0_i32, %c0_i32_0 : i32, i32
  }
  func.func @transform_2(%arg0: i32, %arg1: i32) -> (i32, i32) {
    %c0_i32 = arith.constant 0 : i32
    %c0_i32_0 = arith.constant 0 : i32
    %c0_i32_1 = arith.constant 0 : i32
    return %c0_i32, %c0_i32_0 : i32, i32
  }
  func.func @transform_3(%arg0: i32, %arg1: i32) -> (i32, i32, i32) {
    %c0_i32 = arith.constant 0 : i32
    %c0_i32_0 = arith.constant 0 : i32
    return %arg0, %arg1, %c0_i32 : i32, i32, i32
  }
  func.func @transform_4(%arg0: i32, %arg1: i32) -> (i32, i32, i32, i32) {
    %c0_i32 = arith.constant 0 : i32
    %c0_i32_0 = arith.constant 0 : i32
    %c0_i32_1 = arith.constant 0 : i32
    return %arg0, %arg1, %c0_i32, %c0_i32_0 : i32, i32, i32, i32
  }
}

module attributes {stable_mosaic.version = 11 : i64} {
  func.func @_up_conv_stats_kernel(%arg0: i32, %arg1: i32, %arg2: memref<1x32x32xbf16, #tpu.memory_space<vmem>>, %arg3: memref<1x32x32xbf16, #tpu.memory_space<vmem>>, %arg4: memref<32x128xbf16, #tpu.memory_space<vmem>>, %arg5: memref<32x128xbf16, #tpu.memory_space<vmem>>, %arg6: memref<1x128xf32, #tpu.memory_space<vmem>>, %arg7: memref<1x32x128xbf16, #tpu.memory_space<vmem>>, %arg8: memref<1x1x2x128xf32, #tpu.memory_space<vmem>>) attributes {dimension_semantics = [#tpu.dimension_semantics<parallel>, #tpu.dimension_semantics<parallel>], iteration_bounds = array<i64: 2, 1>, scalar_prefetch = 0 : i64, scratch_operands = 0 : i64, tpu.core_type = #tpu.core_type<tc>, window_params = [{transform_indices = @transform_0, window_bounds = array<i64: 1, 32, 32>}, {transform_indices = @transform_1, window_bounds = array<i64: 1, 32, 32>}, {pipeline_mode = #tpu.pipeline_mode<synchronous>, transform_indices = @transform_2, window_bounds = array<i64: 32, 128>}, {pipeline_mode = #tpu.pipeline_mode<synchronous>, transform_indices = @transform_3, window_bounds = array<i64: 32, 128>}, {pipeline_mode = #tpu.pipeline_mode<synchronous>, transform_indices = @transform_4, window_bounds = array<i64: 1, 128>}, {transform_indices = @transform_5, window_bounds = array<i64: 1, 32, 128>}, {transform_indices = @transform_6, window_bounds = array<i64: 1, 1, 2, 128>}]} {
    %c0 = arith.constant 0 : index
    %c0_0 = arith.constant 0 : index
    %c0_1 = arith.constant 0 : index
    %0 = vector.load %arg2[%c0, %c0_0, %c0_1] : memref<1x32x32xbf16, #tpu.memory_space<vmem>>, vector<1x32x32xbf16>
    %1 = vector.shape_cast %0 : vector<1x32x32xbf16> to vector<32x32xbf16>
    %c0_2 = arith.constant 0 : index
    %c0_3 = arith.constant 0 : index
    %2 = vector.load %arg4[%c0_2, %c0_3] : memref<32x128xbf16, #tpu.memory_space<vmem>>, vector<32x128xbf16>
    %cst = arith.constant dense<0.000000e+00> : vector<32x128xf32>
    %3 = tpu.matmul %1, %2, %cst {dimension_numbers = #tpu.dot_dimension_numbers<[1], [0], [0], [1], [0, 0, 1, 1], [], []>} : vector<32x32xbf16>, vector<32x128xbf16>, vector<32x128xf32> -> vector<32x128xf32>
    %c0_4 = arith.constant 0 : index
    %c0_5 = arith.constant 0 : index
    %c0_6 = arith.constant 0 : index
    %4 = vector.load %arg3[%c0_4, %c0_5, %c0_6] : memref<1x32x32xbf16, #tpu.memory_space<vmem>>, vector<1x32x32xbf16>
    %5 = vector.shape_cast %4 : vector<1x32x32xbf16> to vector<32x32xbf16>
    %c0_7 = arith.constant 0 : index
    %c0_8 = arith.constant 0 : index
    %6 = vector.load %arg5[%c0_7, %c0_8] : memref<32x128xbf16, #tpu.memory_space<vmem>>, vector<32x128xbf16>
    %cst_9 = arith.constant dense<0.000000e+00> : vector<32x128xf32>
    %7 = tpu.matmul %5, %6, %cst_9 {dimension_numbers = #tpu.dot_dimension_numbers<[1], [0], [0], [1], [0, 0, 1, 1], [], []>} : vector<32x32xbf16>, vector<32x128xbf16>, vector<32x128xf32> -> vector<32x128xf32>
    %8 = arith.addf %3, %7 : vector<32x128xf32>
    %c0_10 = arith.constant 0 : index
    %c0_11 = arith.constant 0 : index
    %9 = vector.load %arg6[%c0_10, %c0_11] : memref<1x128xf32, #tpu.memory_space<vmem>>, vector<1x128xf32>
    %10 = vector.broadcast %9 : vector<1x128xf32> to vector<32x128xf32>
    %11 = arith.addf %8, %10 : vector<32x128xf32>
    %12 = arith.negf %11 : vector<32x128xf32>
    %13 = math.exp %12 : vector<32x128xf32>
    %cst_12 = arith.constant 1.000000e+00 : f32
    %14 = vector.broadcast %cst_12 : f32 to vector<32x128xf32>
    %15 = arith.addf %14, %13 : vector<32x128xf32>
    %16 = arith.divf %14, %15 : vector<32x128xf32>
    %17 = arith.mulf %11, %16 : vector<32x128xf32>
    %18 = arith.truncf %17 : vector<32x128xf32> to vector<32x128xbf16>
    %c0_13 = arith.constant 0 : index
    %c0_14 = arith.constant 0 : index
    %c0_15 = arith.constant 0 : index
    %19 = vector.load %arg7[%c0_13, %c0_14, %c0_15] : memref<1x32x128xbf16, #tpu.memory_space<vmem>>, vector<1x32x128xbf16>
    %20 = vector.shape_cast %19 : vector<1x32x128xbf16> to vector<32x128xbf16>
    %21 = vector.shape_cast %18 : vector<32x128xbf16> to vector<1x32x128xbf16>
    tpu.vector_store %arg7[%c0_13, %c0_14, %c0_15], %21 {strides = array<i32>} : memref<1x32x128xbf16, #tpu.memory_space<vmem>>, vector<1x32x128xbf16>,
    %cst_16 = arith.constant dense<0.000000e+00> : vector<128xf32>
    %22 = vector.multi_reduction <add>, %17, %cst_16 [0] : vector<32x128xf32> to vector<128xf32>
    %23 = vector.shape_cast %22 : vector<128xf32> to vector<1x128xf32>
    %c0_17 = arith.constant 0 : index
    %c0_18 = arith.constant 0 : index
    %c0_19 = arith.constant 0 : index
    %c0_20 = arith.constant 0 : index
    %24 = vector.load %arg8[%c0_17, %c0_18, %c0_19, %c0_20] : memref<1x1x2x128xf32, #tpu.memory_space<vmem>>, vector<1x1x1x128xf32>
    %25 = vector.shape_cast %24 : vector<1x1x1x128xf32> to vector<1x128xf32>
    %26 = vector.shape_cast %23 : vector<1x128xf32> to vector<1x1x1x128xf32>
    tpu.vector_store %arg8[%c0_17, %c0_18, %c0_19, %c0_20], %26 {strides = array<i32>} : memref<1x1x2x128xf32, #tpu.memory_space<vmem>>, vector<1x1x1x128xf32>,
    %27 = arith.mulf %17, %17 : vector<32x128xf32>
    %cst_21 = arith.constant dense<0.000000e+00> : vector<128xf32>
    %28 = vector.multi_reduction <add>, %27, %cst_21 [0] : vector<32x128xf32> to vector<128xf32>
    %29 = vector.shape_cast %28 : vector<128xf32> to vector<1x128xf32>
    %c0_22 = arith.constant 0 : index
    %c0_23 = arith.constant 0 : index
    %c1 = arith.constant 1 : index
    %c0_24 = arith.constant 0 : index
    %30 = vector.load %arg8[%c0_22, %c0_23, %c1, %c0_24] : memref<1x1x2x128xf32, #tpu.memory_space<vmem>>, vector<1x1x1x128xf32>
    %31 = vector.shape_cast %30 : vector<1x1x1x128xf32> to vector<1x128xf32>
    %32 = vector.shape_cast %29 : vector<1x128xf32> to vector<1x1x1x128xf32>
    tpu.vector_store %arg8[%c0_22, %c0_23, %c1, %c0_24], %32 {strides = array<i32>} : memref<1x1x2x128xf32, #tpu.memory_space<vmem>>, vector<1x1x1x128xf32>,
    return
  }
  func.func @transform_0(%arg0: i32, %arg1: i32) -> (i32, i32, i32) {
    %c0_i32 = arith.constant 0 : i32
    %c0_i32_0 = arith.constant 0 : i32
    return %arg0, %arg1, %c0_i32 : i32, i32, i32
  }
  func.func @transform_1(%arg0: i32, %arg1: i32) -> (i32, i32, i32) {
    %c0_i32 = arith.constant 0 : i32
    %c0_i32_0 = arith.constant 0 : i32
    return %arg0, %arg1, %c0_i32 : i32, i32, i32
  }
  func.func @transform_2(%arg0: i32, %arg1: i32) -> (i32, i32) {
    %c0_i32 = arith.constant 0 : i32
    %c0_i32_0 = arith.constant 0 : i32
    %c0_i32_1 = arith.constant 0 : i32
    return %c0_i32, %c0_i32_0 : i32, i32
  }
  func.func @transform_3(%arg0: i32, %arg1: i32) -> (i32, i32) {
    %c0_i32 = arith.constant 0 : i32
    %c0_i32_0 = arith.constant 0 : i32
    %c0_i32_1 = arith.constant 0 : i32
    return %c0_i32, %c0_i32_0 : i32, i32
  }
  func.func @transform_4(%arg0: i32, %arg1: i32) -> (i32, i32) {
    %c0_i32 = arith.constant 0 : i32
    %c0_i32_0 = arith.constant 0 : i32
    %c0_i32_1 = arith.constant 0 : i32
    return %c0_i32, %c0_i32_0 : i32, i32
  }
  func.func @transform_5(%arg0: i32, %arg1: i32) -> (i32, i32, i32) {
    %c0_i32 = arith.constant 0 : i32
    %c0_i32_0 = arith.constant 0 : i32
    return %arg0, %arg1, %c0_i32 : i32, i32, i32
  }
  func.func @transform_6(%arg0: i32, %arg1: i32) -> (i32, i32, i32, i32) {
    %c0_i32 = arith.constant 0 : i32
    %c0_i32_0 = arith.constant 0 : i32
    %c0_i32_1 = arith.constant 0 : i32
    return %arg0, %arg1, %c0_i32, %c0_i32_0 : i32, i32, i32, i32
  }
}

module attributes {stable_mosaic.version = 11 : i64} {
  func.func @_up_conv_stats_kernel(%arg0: i32, %arg1: i32, %arg2: memref<1x128x32xbf16, #tpu.memory_space<vmem>>, %arg3: memref<1x128x32xbf16, #tpu.memory_space<vmem>>, %arg4: memref<32x16xbf16, #tpu.memory_space<vmem>>, %arg5: memref<32x16xbf16, #tpu.memory_space<vmem>>, %arg6: memref<1x16xf32, #tpu.memory_space<vmem>>, %arg7: memref<1x128x16xbf16, #tpu.memory_space<vmem>>, %arg8: memref<1x1x2x16xf32, #tpu.memory_space<vmem>>) attributes {dimension_semantics = [#tpu.dimension_semantics<parallel>, #tpu.dimension_semantics<parallel>], iteration_bounds = array<i64: 2, 1>, scalar_prefetch = 0 : i64, scratch_operands = 0 : i64, tpu.core_type = #tpu.core_type<tc>, window_params = [{transform_indices = @transform_0, window_bounds = array<i64: 1, 128, 32>}, {transform_indices = @transform_1, window_bounds = array<i64: 1, 128, 32>}, {pipeline_mode = #tpu.pipeline_mode<synchronous>, transform_indices = @transform_2, window_bounds = array<i64: 32, 16>}, {pipeline_mode = #tpu.pipeline_mode<synchronous>, transform_indices = @transform_3, window_bounds = array<i64: 32, 16>}, {pipeline_mode = #tpu.pipeline_mode<synchronous>, transform_indices = @transform_4, window_bounds = array<i64: 1, 16>}, {transform_indices = @transform_5, window_bounds = array<i64: 1, 128, 16>}, {transform_indices = @transform_6, window_bounds = array<i64: 1, 1, 2, 16>}]} {
    %c0 = arith.constant 0 : index
    %c0_0 = arith.constant 0 : index
    %c0_1 = arith.constant 0 : index
    %0 = vector.load %arg2[%c0, %c0_0, %c0_1] : memref<1x128x32xbf16, #tpu.memory_space<vmem>>, vector<1x128x32xbf16>
    %1 = vector.shape_cast %0 : vector<1x128x32xbf16> to vector<128x32xbf16>
    %c0_2 = arith.constant 0 : index
    %c0_3 = arith.constant 0 : index
    %2 = vector.load %arg4[%c0_2, %c0_3] : memref<32x16xbf16, #tpu.memory_space<vmem>>, vector<32x16xbf16>
    %cst = arith.constant dense<0.000000e+00> : vector<128x16xf32>
    %3 = tpu.matmul %1, %2, %cst {dimension_numbers = #tpu.dot_dimension_numbers<[1], [0], [0], [1], [0, 0, 1, 1], [], []>} : vector<128x32xbf16>, vector<32x16xbf16>, vector<128x16xf32> -> vector<128x16xf32>
    %c0_4 = arith.constant 0 : index
    %c0_5 = arith.constant 0 : index
    %c0_6 = arith.constant 0 : index
    %4 = vector.load %arg3[%c0_4, %c0_5, %c0_6] : memref<1x128x32xbf16, #tpu.memory_space<vmem>>, vector<1x128x32xbf16>
    %5 = vector.shape_cast %4 : vector<1x128x32xbf16> to vector<128x32xbf16>
    %c0_7 = arith.constant 0 : index
    %c0_8 = arith.constant 0 : index
    %6 = vector.load %arg5[%c0_7, %c0_8] : memref<32x16xbf16, #tpu.memory_space<vmem>>, vector<32x16xbf16>
    %cst_9 = arith.constant dense<0.000000e+00> : vector<128x16xf32>
    %7 = tpu.matmul %5, %6, %cst_9 {dimension_numbers = #tpu.dot_dimension_numbers<[1], [0], [0], [1], [0, 0, 1, 1], [], []>} : vector<128x32xbf16>, vector<32x16xbf16>, vector<128x16xf32> -> vector<128x16xf32>
    %8 = arith.addf %3, %7 : vector<128x16xf32>
    %c0_10 = arith.constant 0 : index
    %c0_11 = arith.constant 0 : index
    %9 = vector.load %arg6[%c0_10, %c0_11] : memref<1x16xf32, #tpu.memory_space<vmem>>, vector<1x16xf32>
    %10 = vector.broadcast %9 : vector<1x16xf32> to vector<128x16xf32>
    %11 = arith.addf %8, %10 : vector<128x16xf32>
    %12 = arith.negf %11 : vector<128x16xf32>
    %13 = math.exp %12 : vector<128x16xf32>
    %cst_12 = arith.constant 1.000000e+00 : f32
    %14 = vector.broadcast %cst_12 : f32 to vector<128x16xf32>
    %15 = arith.addf %14, %13 : vector<128x16xf32>
    %16 = arith.divf %14, %15 : vector<128x16xf32>
    %17 = arith.mulf %11, %16 : vector<128x16xf32>
    %18 = arith.truncf %17 : vector<128x16xf32> to vector<128x16xbf16>
    %c0_13 = arith.constant 0 : index
    %c0_14 = arith.constant 0 : index
    %c0_15 = arith.constant 0 : index
    %19 = vector.load %arg7[%c0_13, %c0_14, %c0_15] : memref<1x128x16xbf16, #tpu.memory_space<vmem>>, vector<1x128x16xbf16>
    %20 = vector.shape_cast %19 : vector<1x128x16xbf16> to vector<128x16xbf16>
    %21 = vector.shape_cast %18 : vector<128x16xbf16> to vector<1x128x16xbf16>
    tpu.vector_store %arg7[%c0_13, %c0_14, %c0_15], %21 {strides = array<i32>} : memref<1x128x16xbf16, #tpu.memory_space<vmem>>, vector<1x128x16xbf16>,
    %cst_16 = arith.constant dense<0.000000e+00> : vector<16xf32>
    %22 = vector.multi_reduction <add>, %17, %cst_16 [0] : vector<128x16xf32> to vector<16xf32>
    %23 = vector.shape_cast %22 : vector<16xf32> to vector<1x16xf32>
    %c0_17 = arith.constant 0 : index
    %c0_18 = arith.constant 0 : index
    %c0_19 = arith.constant 0 : index
    %c0_20 = arith.constant 0 : index
    %24 = vector.load %arg8[%c0_17, %c0_18, %c0_19, %c0_20] : memref<1x1x2x16xf32, #tpu.memory_space<vmem>>, vector<1x1x1x16xf32>
    %25 = vector.shape_cast %24 : vector<1x1x1x16xf32> to vector<1x16xf32>
    %26 = vector.shape_cast %23 : vector<1x16xf32> to vector<1x1x1x16xf32>
    tpu.vector_store %arg8[%c0_17, %c0_18, %c0_19, %c0_20], %26 {strides = array<i32>} : memref<1x1x2x16xf32, #tpu.memory_space<vmem>>, vector<1x1x1x16xf32>,
    %27 = arith.mulf %17, %17 : vector<128x16xf32>
    %cst_21 = arith.constant dense<0.000000e+00> : vector<16xf32>
    %28 = vector.multi_reduction <add>, %27, %cst_21 [0] : vector<128x16xf32> to vector<16xf32>
    %29 = vector.shape_cast %28 : vector<16xf32> to vector<1x16xf32>
    %c0_22 = arith.constant 0 : index
    %c0_23 = arith.constant 0 : index
    %c1 = arith.constant 1 : index
    %c0_24 = arith.constant 0 : index
    %30 = vector.load %arg8[%c0_22, %c0_23, %c1, %c0_24] : memref<1x1x2x16xf32, #tpu.memory_space<vmem>>, vector<1x1x1x16xf32>
    %31 = vector.shape_cast %30 : vector<1x1x1x16xf32> to vector<1x16xf32>
    %32 = vector.shape_cast %29 : vector<1x16xf32> to vector<1x1x1x16xf32>
    tpu.vector_store %arg8[%c0_22, %c0_23, %c1, %c0_24], %32 {strides = array<i32>} : memref<1x1x2x16xf32, #tpu.memory_space<vmem>>, vector<1x1x1x16xf32>,
    return
  }
  func.func @transform_0(%arg0: i32, %arg1: i32) -> (i32, i32, i32) {
    %c0_i32 = arith.constant 0 : i32
    %c0_i32_0 = arith.constant 0 : i32
    return %arg0, %arg1, %c0_i32 : i32, i32, i32
  }
  func.func @transform_1(%arg0: i32, %arg1: i32) -> (i32, i32, i32) {
    %c0_i32 = arith.constant 0 : i32
    %c0_i32_0 = arith.constant 0 : i32
    return %arg0, %arg1, %c0_i32 : i32, i32, i32
  }
  func.func @transform_2(%arg0: i32, %arg1: i32) -> (i32, i32) {
    %c0_i32 = arith.constant 0 : i32
    %c0_i32_0 = arith.constant 0 : i32
    %c0_i32_1 = arith.constant 0 : i32
    return %c0_i32, %c0_i32_0 : i32, i32
  }
  func.func @transform_3(%arg0: i32, %arg1: i32) -> (i32, i32) {
    %c0_i32 = arith.constant 0 : i32
    %c0_i32_0 = arith.constant 0 : i32
    %c0_i32_1 = arith.constant 0 : i32
    return %c0_i32, %c0_i32_0 : i32, i32
  }
  func.func @transform_4(%arg0: i32, %arg1: i32) -> (i32, i32) {
    %c0_i32 = arith.constant 0 : i32
    %c0_i32_0 = arith.constant 0 : i32
    %c0_i32_1 = arith.constant 0 : i32
    return %c0_i32, %c0_i32_0 : i32, i32
  }
  func.func @transform_5(%arg0: i32, %arg1: i32) -> (i32, i32, i32) {
    %c0_i32 = arith.constant 0 : i32
    %c0_i32_0 = arith.constant 0 : i32
    return %arg0, %arg1, %c0_i32 : i32, i32, i32
  }
  func.func @transform_6(%arg0: i32, %arg1: i32) -> (i32, i32, i32, i32) {
    %c0_i32 = arith.constant 0 : i32
    %c0_i32_0 = arith.constant 0 : i32
    %c0_i32_1 = arith.constant 0 : i32
    return %arg0, %arg1, %c0_i32, %c0_i32_0 : i32, i32, i32, i32
  }
}

module attributes {stable_mosaic.version = 11 : i64} {
  func.func @_scale_shift_silu_kernel(%arg0: i32, %arg1: i32, %arg2: memref<1x2x1024xbf16, #tpu.memory_space<vmem>>, %arg3: memref<1x1x1024xf32, #tpu.memory_space<vmem>>, %arg4: memref<1x1x1024xf32, #tpu.memory_space<vmem>>, %arg5: memref<1x2x1024xf32, #tpu.memory_space<vmem>>) attributes {dimension_semantics = [#tpu.dimension_semantics<parallel>, #tpu.dimension_semantics<parallel>], iteration_bounds = array<i64: 2, 1>, scalar_prefetch = 0 : i64, scratch_operands = 0 : i64, tpu.core_type = #tpu.core_type<tc>, window_params = [{transform_indices = @transform_0, window_bounds = array<i64: 1, 2, 1024>}, {transform_indices = @transform_1, window_bounds = array<i64: 1, 1, 1024>}, {transform_indices = @transform_2, window_bounds = array<i64: 1, 1, 1024>}, {transform_indices = @transform_3, window_bounds = array<i64: 1, 2, 1024>}]} {
    %c0 = arith.constant 0 : index
    %c0_0 = arith.constant 0 : index
    %c0_1 = arith.constant 0 : index
    %0 = vector.load %arg2[%c0, %c0_0, %c0_1] : memref<1x2x1024xbf16, #tpu.memory_space<vmem>>, vector<1x2x1024xbf16>
    %1 = vector.shape_cast %0 : vector<1x2x1024xbf16> to vector<2x1024xbf16>
    %2 = arith.extf %1 : vector<2x1024xbf16> to vector<2x1024xf32>
    %c0_2 = arith.constant 0 : index
    %c0_3 = arith.constant 0 : index
    %c0_4 = arith.constant 0 : index
    %3 = vector.load %arg3[%c0_2, %c0_3, %c0_4] : memref<1x1x1024xf32, #tpu.memory_space<vmem>>, vector<1x1x1024xf32>
    %4 = vector.shape_cast %3 : vector<1x1x1024xf32> to vector<1x1024xf32>
    %5 = vector.broadcast %4 : vector<1x1024xf32> to vector<2x1024xf32>
    %6 = arith.mulf %2, %5 : vector<2x1024xf32>
    %c0_5 = arith.constant 0 : index
    %c0_6 = arith.constant 0 : index
    %c0_7 = arith.constant 0 : index
    %7 = vector.load %arg4[%c0_5, %c0_6, %c0_7] : memref<1x1x1024xf32, #tpu.memory_space<vmem>>, vector<1x1x1024xf32>
    %8 = vector.shape_cast %7 : vector<1x1x1024xf32> to vector<1x1024xf32>
    %9 = vector.broadcast %8 : vector<1x1024xf32> to vector<2x1024xf32>
    %10 = arith.addf %6, %9 : vector<2x1024xf32>
    %11 = arith.negf %10 : vector<2x1024xf32>
    %12 = math.exp %11 : vector<2x1024xf32>
    %cst = arith.constant 1.000000e+00 : f32
    %13 = vector.broadcast %cst : f32 to vector<2x1024xf32>
    %14 = arith.addf %13, %12 : vector<2x1024xf32>
    %15 = arith.divf %13, %14 : vector<2x1024xf32>
    %16 = arith.mulf %10, %15 : vector<2x1024xf32>
    %c0_8 = arith.constant 0 : index
    %c0_9 = arith.constant 0 : index
    %c0_10 = arith.constant 0 : index
    %17 = vector.load %arg5[%c0_8, %c0_9, %c0_10] : memref<1x2x1024xf32, #tpu.memory_space<vmem>>, vector<1x2x1024xf32>
    %18 = vector.shape_cast %17 : vector<1x2x1024xf32> to vector<2x1024xf32>
    %19 = vector.shape_cast %16 : vector<2x1024xf32> to vector<1x2x1024xf32>
    tpu.vector_store %arg5[%c0_8, %c0_9, %c0_10], %19 {strides = array<i32>} : memref<1x2x1024xf32, #tpu.memory_space<vmem>>, vector<1x2x1024xf32>,
    return
  }
  func.func @transform_0(%arg0: i32, %arg1: i32) -> (i32, i32, i32) {
    %c0_i32 = arith.constant 0 : i32
    %c0_i32_0 = arith.constant 0 : i32
    return %arg0, %arg1, %c0_i32 : i32, i32, i32
  }
  func.func @transform_1(%arg0: i32, %arg1: i32) -> (i32, i32, i32) {
    %c0_i32 = arith.constant 0 : i32
    %c0_i32_0 = arith.constant 0 : i32
    %c0_i32_1 = arith.constant 0 : i32
    return %arg0, %c0_i32, %c0_i32_0 : i32, i32, i32
  }
  func.func @transform_2(%arg0: i32, %arg1: i32) -> (i32, i32, i32) {
    %c0_i32 = arith.constant 0 : i32
    %c0_i32_0 = arith.constant 0 : i32
    %c0_i32_1 = arith.constant 0 : i32
    return %arg0, %c0_i32, %c0_i32_0 : i32, i32, i32
  }
  func.func @transform_3(%arg0: i32, %arg1: i32) -> (i32, i32, i32) {
    %c0_i32 = arith.constant 0 : i32
    %c0_i32_0 = arith.constant 0 : i32
    return %arg0, %arg1, %c0_i32 : i32, i32, i32
  }
}

</mosaic_0001>

<llo_original>
// kernel: nested_residual_unet_forward.11
$region0: #{nested_residual_unet_forward.11}
  #allocation0 [shape = 'u32[]', space=smem, size = 0x4, offset = 0x4, fixed_abs, tag = 'smem constant byte address 0x4 - core index']
  #allocation1 [shape = 'u32[144,128]{1,0:T(1,128)}', space=vmem, size = 0x12000, scoped, tag = 'internal scratch']
  %s0 = inlined_call_operand.vmem [shape: bf16[2,4,1024], index: 0, kind: input, shape index: {}]
  %s1 = inlined_call_operand.vmem [shape: f32[2,1,1024], index: 1, kind: input, shape index: {}]
  %s2 = inlined_call_operand.vmem [shape: f32[2,1,1024], index: 2, kind: input, shape index: {}]
  %s3 = inlined_call_operand.vmem [shape: bf16[2,4,1024], index: 3, kind: output, shape index: {}]
  %s4 = sld [smem:[#allocation0]]
  $region45: #{nested_residual_unet_forward.11} parent=0
    _
  %s6 = ssub.s32 1, %s4
  %s7 = scalar_select 0, %s6, %s4
  loop: start=0, step=1, limit=4
  $region2: #{nested_residual_unet_forward.11} parent=0 // loop_pre_header
    _
  $region3: #{nested_residual_unet_forward.11} parent=0 // loop_header
    %s9 = sphi 0, %s13
    %p10 = scmp.ge.s32.totalorder %s9, 4
    %s16 = sphi 0, %s28
    %s17 = sphi 0, %s24
    %s18 = sphi 0, %s16
    %s19 = sphi 0, %s17
    %s20 = sphi 0, %s18
    %s21 = sphi 0, %s19
    %s33 = sphi 0, %s35
    %s36 = sphi 0, %s33
    %s37 = sphi 0, %s36
    %s53 = sphi 0, %s37
    %s59 = sphi 0, %s61
    %s62 = sphi 0, %s59
    %s63 = sphi 0, %s62
    %s79 = sphi 0, %s63
    %s85 = sphi 0, %s87
    %s88 = sphi 0, %s85
    %s89 = sphi 0, %s88
    %s105 = sphi 0, %s89
    %s113 = sphi 0, %s115
    %s116 = sphi 0, %s113
    %s117 = sphi 0, %s116
    %s133 = sphi 0, %s117
  $region4: #{nested_residual_unet_forward.11} parent=0 // loop_header_branch
    %12 = sbr.rel (%p10) target = $region8
  $region5: #{nested_residual_unet_forward.11} parent=0 // loop_body
    %s14 = ssub.s32 %s9, 1
    %s15 = ssub.s32 %s9, 2
    %s22 = sadd.s32 1, %s17
    %p23 = scmp.ge.s32.totalorder %s22, 1
    %s24 = scalar_select %p23, 0, %s22
    %s25 = sadd.s32 1, %s16
    %s26 = scalar_select %p23, %s25, %s16
    %p27 = scmp.ge.s32.totalorder %s26, 2
    %s28 = scalar_select %p27, 0, %s26
    %s29 = ssub.s32 %s16, %s28
    %s30 = ssub.s32 %s17, %s24
    %s31 = sor.u32 %s29, %s30
    %p32 = scmp.eq.s32.totalorder %s31, 0
    %s34 = sadd.s32 %s33, 1
    %s35 = scalar_select %p32, %s33, %s34
    %p38 = pneg %p32
    %p39 = scmp.eq.s32.totalorder %s9, 1
    %p40 = por %p38, %p39
    %p41 = scmp.ne.s32.totalorder %s33, %s36
    %p42 = scmp.eq.s32.totalorder %s9, 0
    %p43 = por %p41, %p42
    %p44 = scmp.ne.s32.totalorder %s33, %s36
    %p45 = scmp.eq.s32.totalorder %s14, 1
    %p46 = por %p44, %p45
    %p47 = scmp.ne.s32.totalorder %s36, %s37
    %p48 = scmp.eq.s32.totalorder %s14, 0
    %p49 = por %p47, %p48
    %p50 = scmp.ne.s32.totalorder %s36, %s37
    %p51 = scmp.eq.s32.totalorder %s15, 1
    %p52 = por %p50, %p51
    %p54 = scmp.ne.s32.totalorder %s37, %s53
    %p55 = scmp.eq.s32.totalorder %s15, 0
    %p56 = por %p54, %p55
    %s57 = ssub.s32 %s16, %s28
    %p58 = scmp.eq.s32.totalorder %s57, 0
    %s60 = sadd.s32 %s59, 1
    %s61 = scalar_select %p58, %s59, %s60
    %p64 = pneg %p58
    %p65 = scmp.eq.s32.totalorder %s9, 1
    %p66 = por %p64, %p65
    %p67 = scmp.ne.s32.totalorder %s59, %s62
    %p68 = scmp.eq.s32.totalorder %s9, 0
    %p69 = por %p67, %p68
    %p70 = scmp.ne.s32.totalorder %s59, %s62
    %p71 = scmp.eq.s32.totalorder %s14, 1
    %p72 = por %p70, %p71
    %p73 = scmp.ne.s32.totalorder %s62, %s63
    %p74 = scmp.eq.s32.totalorder %s14, 0
    %p75 = por %p73, %p74
    %p76 = scmp.ne.s32.totalorder %s62, %s63
    %p77 = scmp.eq.s32.totalorder %s15, 1
    %p78 = por %p76, %p77
    %p80 = scmp.ne.s32.totalorder %s63, %s79
    %p81 = scmp.eq.s32.totalorder %s15, 0
    %p82 = por %p80, %p81
    %s83 = ssub.s32 %s16, %s28
    %p84 = scmp.eq.s32.totalorder %s83, 0
    %s86 = sadd.s32 %s85, 1
    %s87 = scalar_select %p84, %s85, %s86
    %p90 = pneg %p84
    %p91 = scmp.eq.s32.totalorder %s9, 1
    %p92 = por %p90, %p91
    %p93 = scmp.ne.s32.totalorder %s85, %s88
    %p94 = scmp.eq.s32.totalorder %s9, 0
    %p95 = por %p93, %p94
    %p96 = scmp.ne.s32.totalorder %s85, %s88
    %p97 = scmp.eq.s32.totalorder %s14, 1
    %p98 = por %p96, %p97
    %p99 = scmp.ne.s32.totalorder %s88, %s89
    %p100 = scmp.eq.s32.totalorder %s14, 0
    %p101 = por %p99, %p100
    %p102 = scmp.ne.s32.totalorder %s88, %s89
    %p103 = scmp.eq.s32.totalorder %s15, 1
    %p104 = por %p102, %p103
    %p106 = scmp.ne.s32.totalorder %s89, %s105
    %p107 = scmp.eq.s32.totalorder %s15, 0
    %p108 = por %p106, %p107
    %s109 = ssub.s32 %s16, %s28
    %s110 = ssub.s32 %s17, %s24
    %s111 = sor.u32 %s109, %s110
    %p112 = scmp.eq.s32.totalorder %s111, 0
    %s114 = sadd.s32 %s113, 1
    %s115 = scalar_select %p112, %s113, %s114
    %p118 = pneg %p112
    %p119 = scmp.eq.s32.totalorder %s9, 1
    %p120 = por %p118, %p119
    %p121 = scmp.ne.s32.totalorder %s113, %s116
    %p122 = scmp.eq.s32.totalorder %s9, 0
    %p123 = por %p121, %p122
    %p124 = scmp.ne.s32.totalorder %s113, %s116
    %p125 = scmp.eq.s32.totalorder %s14, 1
    %p126 = por %p124, %p125
    %p127 = scmp.ne.s32.totalorder %s116, %s117
    %p128 = scmp.eq.s32.totalorder %s14, 0
    %p129 = por %p127, %p128
    %p130 = scmp.ne.s32.totalorder %s116, %s117
    %p131 = scmp.eq.s32.totalorder %s15, 1
    %p132 = por %p130, %p131
    %p134 = scmp.ne.s32.totalorder %s117, %s133
    %p135 = scmp.eq.s32.totalorder %s15, 0
    %p136 = por %p134, %p135
    %p137 = scmp.le.s32.totalorder 1, %s9
    %p138 = scmp.lt.s32.totalorder %s9, 3
    %p139 = pnand %p137, %p138
    %p140 = pneg %p139
    // Predicated region
    $region9: #{nested_residual_unet_forward.11} parent=5 // pred_check
      _
    $region10: #{nested_residual_unet_forward.11} parent=5 // pred_check_branch
      %142 = sbr.rel (%p139) target = $region12
    $region11: #{nested_residual_unet_forward.11} parent=5 // pred_region
      %s143 = ssub.s32 %s9, 1
    $region12: #{nested_residual_unet_forward.11} parent=5 // pred_fallthru
      _
    %p144 = scmp.lt.s32.totalorder %s9, 2
    // Predicated region
    $region13: #{nested_residual_unet_forward.11} parent=5 // pred_check
      %p145 = pneg %p144
    $region14: #{nested_residual_unet_forward.11} parent=5 // pred_check_branch
      %147 = sbr.rel (%p145) target = $region16
    $region15: #{nested_residual_unet_forward.11} parent=5 // pred_region
      // Predicated region
      $region17: #{nested_residual_unet_forward.11} parent=15 // pred_check
        %p148 = pneg %p43
      $region18: #{nested_residual_unet_forward.11} parent=15 // pred_check_branch
        %150 = sbr.rel (%p148) target = $region20
      $region19: #{nested_residual_unet_forward.11} parent=15 // pred_region
        %p151 = scmp.lt.s32.totalorder %s16, 1
        %s152 = scalar_select %p151, %s16, 1
        %p153 = scmp.lt.s32.totalorder %s17, 0
        %s154 = scalar_select %p153, %s17, 0
        %s155 = smul.addr %s154, 8
        %s156 = smul.addr %s152, 8
        %s157 = sadd.s32 %s155, %s156
        %s158 = smul.addr %s157, 2
        %s159 = scalar_lea.vmem %s0, %s158
      $region20: #{nested_residual_unet_forward.11} parent=15 // pred_fallthru
        _
      // Predicated region
      $region21: #{nested_residual_unet_forward.11} parent=15 // pred_check
        %p160 = pneg %p69
      $region22: #{nested_residual_unet_forward.11} parent=15 // pred_check_branch
        %162 = sbr.rel (%p160) target = $region24
      $region23: #{nested_residual_unet_forward.11} parent=15 // pred_region
        %p163 = scmp.lt.s32.totalorder %s16, 1
        %s164 = scalar_select %p163, %s16, 1
        %s165 = smul.addr %s164, 8
        %s166 = scalar_lea.vmem %s1, %s165
      $region24: #{nested_residual_unet_forward.11} parent=15 // pred_fallthru
        _
      // Predicated region
      $region25: #{nested_residual_unet_forward.11} parent=15 // pred_check
        %p167 = pneg %p95
      $region26: #{nested_residual_unet_forward.11} parent=15 // pred_check_branch
        %169 = sbr.rel (%p167) target = $region28
      $region27: #{nested_residual_unet_forward.11} parent=15 // pred_region
        %p170 = scmp.lt.s32.totalorder %s16, 1
        %s171 = scalar_select %p170, %s16, 1
        %s172 = smul.addr %s171, 8
        %s173 = scalar_lea.vmem %s2, %s172
      $region28: #{nested_residual_unet_forward.11} parent=15 // pred_fallthru
        _
    $region16: #{nested_residual_unet_forward.11} parent=5 // pred_fallthru
      _
    %p174 = scmp.le.s32.totalorder 1, %s9
    %p175 = scmp.lt.s32.totalorder %s9, 3
    %p176 = pnand %p174, %p175
    %p177 = pneg %p176
    // Predicated region
    $region29: #{nested_residual_unet_forward.11} parent=5 // pred_check
      _
    $region30: #{nested_residual_unet_forward.11} parent=5 // pred_check_branch
      %179 = sbr.rel (%p176) target = $region32
    $region31: #{nested_residual_unet_forward.11} parent=5 // pred_region
      %s180 = ssub.s32 %s9, 1
      %p181 = scmp.lt.s32.totalorder %s18, 1
      %s182 = scalar_select %p181, %s18, 1
      %p183 = scmp.lt.s32.totalorder %s19, 0
      %s184 = scalar_select %p183, %s19, 0
      %s185 = smul.addr %s184, 8
      %s186 = smul.addr %s182, 8
      %s187 = sadd.s32 %s185, %s186
      %s188 = smul.addr %s187, 2
      %s189 = scalar_lea.vmem %s0, %s188
      %p190 = pneg %p49
      %p191 = pneg %p46
      %p192 = scmp.lt.s32.totalorder %s18, 1
      %s193 = scalar_select %p192, %s18, 1
      %s194 = smul.addr %s193, 8
      %s195 = scalar_lea.vmem %s1, %s194
      %p196 = pneg %p75
      %p197 = pneg %p72
      %p198 = scmp.lt.s32.totalorder %s18, 1
      %s199 = scalar_select %p198, %s18, 1
      %s200 = smul.addr %s199, 8
      %s201 = scalar_lea.vmem %s2, %s200
      %p202 = pneg %p101
      %p203 = pneg %p98
      %p204 = pneg %p129
      %p205 = pneg %p126
      %p206 = scmp.lt.s32.totalorder %s18, 1
      %s207 = scalar_select %p206, %s18, 1
      %p208 = scmp.lt.s32.totalorder %s19, 0
      %s209 = scalar_select %p208, %s19, 0
      %s210 = smul.addr %s209, 8
      %s211 = smul.addr %s207, 8
      %s212 = sadd.s32 %s210, %s211
      %s213 = smul.addr %s212, 2
      %s214 = scalar_lea.vmem %s3, %s213
      %p215 = scmp.lt.s32.totalorder %s18, 1
      %s216 = scalar_select %p215, %s18, 1
      %p217 = scmp.lt.s32.totalorder %s19, 0
      %s218 = scalar_select %p217, %s19, 0
      %s219 = smul.addr %s218, 8
      %s220 = smul.addr %s216, 8
      %s221 = sadd.s32 %s219, %s220
      %s222 = smul.addr %s221, 2
      %s223 = scalar_lea.vmem %s0, %s222
      %p224 = scmp.lt.s32.totalorder %s18, 1
      %s225 = scalar_select %p224, %s18, 1
      %s226 = smul.addr %s225, 8
      %s227 = scalar_lea.vmem %s1, %s226
      %p228 = scmp.lt.s32.totalorder %s18, 1
      %s229 = scalar_select %p228, %s18, 1
      %s230 = smul.addr %s229, 8
      %s231 = scalar_lea.vmem %s2, %s230
      %p232 = scmp.lt.s32.totalorder %s18, 1
      %s233 = scalar_select %p232, %s18, 1
      %p234 = scmp.lt.s32.totalorder %s19, 0
      %s235 = scalar_select %p234, %s19, 0
      %s236 = smul.addr %s235, 8
      %s237 = smul.addr %s233, 8
      %s238 = sadd.s32 %s236, %s237
      %s239 = smul.addr %s238, 2
      %s240 = scalar_lea.vmem %s3, %s239
      %v241 = vld [vmem:[%s223] sm:$0xff]
      %v242 = vld [vmem:[%s223 + $0x8] sm:$0xff]
      %v243 = vunpack.c.l.bf16 %v241
      %v244 = vunpack.c.h.bf16 %v241
      %v245 = vunpack.c.l.bf16 %v242
      %v246 = vunpack.c.h.bf16 %v242
      %v247 = vld [vmem:[%s227] sm:$0xff]
      %v249 = vlaneseq
      %v250 = vshrl.u32 %v249, 7
      %v251 = vsub.s32 0, %v250
      %v252 = vrot.slane %v247, %v251
      %v253 = vlaneseq
      %v254 = vshrl.u32 %v253, 7
      %v255 = vsub.s32 1, %v254
      %v256 = vrot.slane %v247, %v255
      %v257 = vlaneseq
      %v258 = vshrl.u32 %v257, 7
      %v259 = vsub.s32 2, %v258
      %v260 = vrot.slane %v247, %v259
      %v261 = vlaneseq
      %v262 = vshrl.u32 %v261, 7
      %v263 = vsub.s32 3, %v262
      %v264 = vrot.slane %v247, %v263
      %v265 = vlaneseq
      %v266 = vshrl.u32 %v265, 7
      %v267 = vsub.s32 4, %v266
      %v268 = vrot.slane %v247, %v267
      %v269 = vlaneseq
      %v270 = vshrl.u32 %v269, 7
      %v271 = vsub.s32 5, %v270
      %v272 = vrot.slane %v247, %v271
      %v273 = vlaneseq
      %v274 = vshrl.u32 %v273, 7
      %v275 = vsub.s32 6, %v274
      %v276 = vrot.slane %v247, %v275
      %v277 = vlaneseq
      %v278 = vshrl.u32 %v277, 7
      %v279 = vsub.s32 7, %v278
      %v280 = vrot.slane %v247, %v279
      %v281 = vcombine.low %v252, %v256
      %v282 = vcombine.low %v260, %v264
      %v283 = vcombine.low %v268, %v272
      %v284 = vcombine.low %v276, %v280
      %v289 = vmul.f32 %v243, %v281
      %v290 = vmul.f32 %v244, %v282
      %v291 = vmul.f32 %v245, %v283
      %v292 = vmul.f32 %v246, %v284
      %v293 = vld [vmem:[%s231] sm:$0xff]
      %v295 = vlaneseq
      %v296 = vshrl.u32 %v295, 7
      %v297 = vsub.s32 0, %v296
      %v298 = vrot.slane %v293, %v297
      %v299 = vlaneseq
      %v300 = vshrl.u32 %v299, 7
      %v301 = vsub.s32 1, %v300
      %v302 = vrot.slane %v293, %v301
      %v303 = vlaneseq
      %v304 = vshrl.u32 %v303, 7
      %v305 = vsub.s32 2, %v304
      %v306 = vrot.slane %v293, %v305
      %v307 = vlaneseq
      %v308 = vshrl.u32 %v307, 7
      %v309 = vsub.s32 3, %v308
      %v310 = vrot.slane %v293, %v309
      %v311 = vlaneseq
      %v312 = vshrl.u32 %v311, 7
      %v313 = vsub.s32 4, %v312
      %v314 = vrot.slane %v293, %v313
      %v315 = vlaneseq
      %v316 = vshrl.u32 %v315, 7
      %v317 = vsub.s32 5, %v316
      %v318 = vrot.slane %v293, %v317
      %v319 = vlaneseq
      %v320 = vshrl.u32 %v319, 7
      %v321 = vsub.s32 6, %v320
      %v322 = vrot.slane %v293, %v321
      %v323 = vlaneseq
      %v324 = vshrl.u32 %v323, 7
      %v325 = vsub.s32 7, %v324
      %v326 = vrot.slane %v293, %v325
      %v327 = vcombine.low %v298, %v302
      %v328 = vcombine.low %v306, %v310
      %v329 = vcombine.low %v314, %v318
      %v330 = vcombine.low %v322, %v326
      %v335 = vadd.f32 %v289, %v327
      %v336 = vadd.f32 %v290, %v328
      %v337 = vadd.f32 %v291, %v329
      %v338 = vadd.f32 %v292, %v330
      %v339 = vxor.u32 %v335, 2147483648
      %v340 = vxor.u32 %v336, 2147483648
      %v341 = vxor.u32 %v337, 2147483648
      %v342 = vxor.u32 %v338, 2147483648
      %v343 = vmul.f32 %v339, 1.442695
      %v344 = vpow.pop %v343
      %v345 = vmul.f32 %v340, 1.442695
      %v346 = vpow.pop %v345
      %v347 = vmul.f32 %v341, 1.442695
      %v348 = vpow.pop %v347
      %v349 = vmul.f32 %v342, 1.442695
      %v350 = vpow.pop %v349
      %v351 = vadd.f32 %v344, 1.0
      %v352 = vadd.f32 %v346, 1.0
      %v353 = vadd.f32 %v348, 1.0
      %v354 = vadd.f32 %v350, 1.0
      %v355 = vrcp.pop %v351
      %v356 = vmul.f32 1.0, %v355
      %v357 = vrcp.pop %v352
      %v358 = vmul.f32 1.0, %v357
      %v359 = vrcp.pop %v353
      %v360 = vmul.f32 1.0, %v359
      %v361 = vrcp.pop %v354
      %v362 = vmul.f32 1.0, %v361
      %v363 = vmul.f32 %v335, %v356
      %v364 = vmul.f32 %v336, %v358
      %v365 = vmul.f32 %v337, %v360
      %v366 = vmul.f32 %v338, %v362
      %v371 = vcombine.high %v363, %v363
      %v372 = vcombine.high %v364, %v364
      %v373 = vcombine.high %v365, %v365
      %v374 = vcombine.high %v366, %v366
      %v379 = vpack.c.bf16 %v363, %v363
      %v380 = vpack.c.bf16 %v371, %v371
      %v381 = vpack.c.bf16 %v364, %v364
      %v382 = vpack.c.bf16 %v372, %v372
      %v383 = vpack.c.bf16 %v365, %v365
      %v384 = vpack.c.bf16 %v373, %v373
      %v385 = vpack.c.bf16 %v366, %v366
      %v386 = vpack.c.bf16 %v374, %v374
      %v395 = vcombine.low %v379, %v380
      %v396 = vcombine.low %v381, %v382
      %v398 = vunpack.c.l.s4 1983009808
      %v399 = vunpack.c.0.s8 %v398
      %v400 = vlaneseq
      %v401 = vshrl.u32 %v400, 7
      %v402 = vsub.s32 %v399, %v401
      %v403 = vrot.slane %v395, %v402
      %v405 = vunpack.c.l.s4 1983009808
      %v406 = vunpack.c.0.s8 %v405
      %v407 = vlaneseq
      %v408 = vshrl.u32 %v407, 7
      %v409 = vsub.s32 %v406, %v408
      %v410 = vrot.slane %v396, %v409
      %v411 = vcombine.low %v403, %v410
      %v412 = vcombine.low %v383, %v384
      %v413 = vcombine.low %v385, %v386
      %v415 = vunpack.c.l.s4 1983009808
      %v416 = vunpack.c.0.s8 %v415
      %v417 = vlaneseq
      %v418 = vshrl.u32 %v417, 7
      %v419 = vsub.s32 %v416, %v418
      %v420 = vrot.slane %v412, %v419
      %v422 = vunpack.c.l.s4 1983009808
      %v423 = vunpack.c.0.s8 %v422
      %v424 = vlaneseq
      %v425 = vshrl.u32 %v424, 7
      %v426 = vsub.s32 %v423, %v425
      %v427 = vrot.slane %v413, %v426
      %v428 = vcombine.low %v420, %v427
      %431 = vst [vmem:[%s240] sm:$0xff] %v411
      %432 = vst [vmem:[%s240 + $0x8] sm:$0xff] %v428
      %p433 = scmp.lt.s32.totalorder %s18, 1
      %s434 = scalar_select %p433, %s18, 1
      %p435 = scmp.lt.s32.totalorder %s19, 0
      %s436 = scalar_select %p435, %s19, 0
      %s437 = smul.addr %s436, 8
      %s438 = smul.addr %s434, 8
      %s439 = sadd.s32 %s437, %s438
      %s440 = smul.addr %s439, 2
      %s441 = scalar_lea.vmem %s3, %s440
      // Predicated region
      $region33: #{nested_residual_unet_forward.11} parent=31 // pred_check
        %p442 = pneg %p126
      $region34: #{nested_residual_unet_forward.11} parent=31 // pred_check_branch
        %444 = sbr.rel (%p442) target = $region36
      $region35: #{nested_residual_unet_forward.11} parent=31 // pred_region
        _
      $region36: #{nested_residual_unet_forward.11} parent=31 // pred_fallthru
        _
    $region32: #{nested_residual_unet_forward.11} parent=5 // pred_fallthru
      _
    %p445 = scmp.le.s32.totalorder 2, %s9
    // Predicated region
    $region37: #{nested_residual_unet_forward.11} parent=5 // pred_check
      %p446 = pneg %p445
    $region38: #{nested_residual_unet_forward.11} parent=5 // pred_check_branch
      %448 = sbr.rel (%p446) target = $region40
    $region39: #{nested_residual_unet_forward.11} parent=5 // pred_region
      %s449 = ssub.s32 %s9, 2
      // Predicated region
      $region41: #{nested_residual_unet_forward.11} parent=39 // pred_check
        %p450 = pneg %p132
      $region42: #{nested_residual_unet_forward.11} parent=39 // pred_check_branch
        %452 = sbr.rel (%p450) target = $region44
      $region43: #{nested_residual_unet_forward.11} parent=39 // pred_region
        %p453 = scmp.lt.s32.totalorder %s20, 1
        %s454 = scalar_select %p453, %s20, 1
        %p455 = scmp.lt.s32.totalorder %s21, 0
        %s456 = scalar_select %p455, %s21, 0
        %s457 = smul.addr %s456, 8
        %s458 = smul.addr %s454, 8
        %s459 = sadd.s32 %s457, %s458
        %s460 = smul.addr %s459, 2
        %s461 = scalar_lea.vmem %s3, %s460
      $region44: #{nested_residual_unet_forward.11} parent=39 // pred_fallthru
        _
    $region40: #{nested_residual_unet_forward.11} parent=5 // pred_fallthru
      _
  $region6: #{nested_residual_unet_forward.11} parent=0 // loop_footer
    %s13 = sadd.s32 1, %s9
  $region7: #{nested_residual_unet_forward.11} parent=0 // loop_footer_branch
    %8 = sbr.rel target = $region3
  $region8: #{nested_residual_unet_forward.11} parent=0 // loop_exit
    _

// kernel: nested_residual_unet_forward.10
$region0: #{nested_residual_unet_forward.10}
  #allocation0 [shape = 'u32[]', space=smem, size = 0x4, offset = 0x4, fixed_abs, tag = 'smem constant byte address 0x4 - core index']
  #allocation1 [shape = 'u32[144,128]{1,0:T(1,128)}', space=vmem, size = 0x12000, scoped, tag = 'internal scratch']
  %s0 = inlined_call_operand.vmem [shape: bf16[2,128,64], index: 0, kind: input, shape index: {}]
  %s1 = inlined_call_operand.vmem [shape: bf16[64,32], index: 1, kind: input, shape index: {}]
  %s2 = inlined_call_operand.vmem [shape: f32[1,32], index: 2, kind: input, shape index: {}]
  %s3 = inlined_call_operand.vmem [shape: bf16[2,128,32], index: 3, kind: output, shape index: {0}]
  %s4 = inlined_call_operand.vmem [shape: f32[2,1,2,32], index: 4, kind: output, shape index: {1}]
  %5 = xla_tuple %s3, %s4
  %s6 = sld [smem:[#allocation0]]
  $region53: #{nested_residual_unet_forward.10} parent=0
    _
  %s8 = ssub.s32 1, %s6
  %s9 = scalar_select 0, %s8, %s6
  loop: start=0, step=1, limit=4
  $region2: #{nested_residual_unet_forward.10} parent=0 // loop_pre_header
    _
  $region3: #{nested_residual_unet_forward.10} parent=0 // loop_header
    %s11 = sphi 0, %s15
    %p12 = scmp.ge.s32.totalorder %s11, 4
    %s18 = sphi 0, %s30
    %s19 = sphi 0, %s26
    %s20 = sphi 0, %s18
    %s21 = sphi 0, %s19
    %s22 = sphi 0, %s20
    %s23 = sphi 0, %s21
    %s35 = sphi 0, %s37
    %s38 = sphi 0, %s35
    %s39 = sphi 0, %s38
    %s55 = sphi 0, %s39
    %s59 = sphi 0, %s59
    %s61 = sphi 0, %s59
    %s62 = sphi 0, %s61
    %s76 = sphi 0, %s62
    %s80 = sphi 0, %s80
    %s82 = sphi 0, %s80
    %s83 = sphi 0, %s82
    %s97 = sphi 0, %s83
    %s105 = sphi 0, %s107
    %s108 = sphi 0, %s105
    %s109 = sphi 0, %s108
    %s125 = sphi 0, %s109
    %s133 = sphi 0, %s135
    %s136 = sphi 0, %s133
    %s137 = sphi 0, %s136
    %s153 = sphi 0, %s137
  $region4: #{nested_residual_unet_forward.10} parent=0 // loop_header_branch
    %14 = sbr.rel (%p12) target = $region8
  $region5: #{nested_residual_unet_forward.10} parent=0 // loop_body
    %s16 = ssub.s32 %s11, 1
    %s17 = ssub.s32 %s11, 2
    %s24 = sadd.s32 1, %s19
    %p25 = scmp.ge.s32.totalorder %s24, 1
    %s26 = scalar_select %p25, 0, %s24
    %s27 = sadd.s32 1, %s18
    %s28 = scalar_select %p25, %s27, %s18
    %p29 = scmp.ge.s32.totalorder %s28, 2
    %s30 = scalar_select %p29, 0, %s28
    %s31 = ssub.s32 %s18, %s30
    %s32 = ssub.s32 %s19, %s26
    %s33 = sor.u32 %s31, %s32
    %p34 = scmp.eq.s32.totalorder %s33, 0
    %s36 = sadd.s32 %s35, 1
    %s37 = scalar_select %p34, %s35, %s36
    %p40 = pneg %p34
    %p41 = scmp.eq.s32.totalorder %s11, 1
    %p42 = por %p40, %p41
    %p43 = scmp.ne.s32.totalorder %s35, %s38
    %p44 = scmp.eq.s32.totalorder %s11, 0
    %p45 = por %p43, %p44
    %p46 = scmp.ne.s32.totalorder %s35, %s38
    %p47 = scmp.eq.s32.totalorder %s16, 1
    %p48 = por %p46, %p47
    %p49 = scmp.ne.s32.totalorder %s38, %s39
    %p50 = scmp.eq.s32.totalorder %s16, 0
    %p51 = por %p49, %p50
    %p52 = scmp.ne.s32.totalorder %s38, %s39
    %p53 = scmp.eq.s32.totalorder %s17, 1
    %p54 = por %p52, %p53
    %p56 = scmp.ne.s32.totalorder %s39, %s55
    %p57 = scmp.eq.s32.totalorder %s17, 0
    %p58 = por %p56, %p57
    %s60 = sadd.s32 %s59, 1
    %p63 = scmp.eq.s32.totalorder %s11, 1
    %p64 = scmp.ne.s32.totalorder %s59, %s61
    %p65 = scmp.eq.s32.totalorder %s11, 0
    %p66 = por %p64, %p65
    %p67 = scmp.ne.s32.totalorder %s59, %s61
    %p68 = scmp.eq.s32.totalorder %s16, 1
    %p69 = por %p67, %p68
    %p70 = scmp.ne.s32.totalorder %s61, %s62
    %p71 = scmp.eq.s32.totalorder %s16, 0
    %p72 = por %p70, %p71
    %p73 = scmp.ne.s32.totalorder %s61, %s62
    %p74 = scmp.eq.s32.totalorder %s17, 1
    %p75 = por %p73, %p74
    %p77 = scmp.ne.s32.totalorder %s62, %s76
    %p78 = scmp.eq.s32.totalorder %s17, 0
    %p79 = por %p77, %p78
    %s81 = sadd.s32 %s80, 1
    %p84 = scmp.eq.s32.totalorder %s11, 1
    %p85 = scmp.ne.s32.totalorder %s80, %s82
    %p86 = scmp.eq.s32.totalorder %s11, 0
    %p87 = por %p85, %p86
    %p88 = scmp.ne.s32.totalorder %s80, %s82
    %p89 = scmp.eq.s32.totalorder %s16, 1
    %p90 = por %p88, %p89
    %p91 = scmp.ne.s32.totalorder %s82, %s83
    %p92 = scmp.eq.s32.totalorder %s16, 0
    %p93 = por %p91, %p92
    %p94 = scmp.ne.s32.totalorder %s82, %s83
    %p95 = scmp.eq.s32.totalorder %s17, 1
    %p96 = por %p94, %p95
    %p98 = scmp.ne.s32.totalorder %s83, %s97
    %p99 = scmp.eq.s32.totalorder %s17, 0
    %p100 = por %p98, %p99
    %s101 = ssub.s32 %s18, %s30
    %s102 = ssub.s32 %s19, %s26
    %s103 = sor.u32 %s101, %s102
    %p104 = scmp.eq.s32.totalorder %s103, 0
    %s106 = sadd.s32 %s105, 1
    %s107 = scalar_select %p104, %s105, %s106
    %p110 = pneg %p104
    %p111 = scmp.eq.s32.totalorder %s11, 1
    %p112 = por %p110, %p111
    %p113 = scmp.ne.s32.totalorder %s105, %s108
    %p114 = scmp.eq.s32.totalorder %s11, 0
    %p115 = por %p113, %p114
    %p116 = scmp.ne.s32.totalorder %s105, %s108
    %p117 = scmp.eq.s32.totalorder %s16, 1
    %p118 = por %p116, %p117
    %p119 = scmp.ne.s32.totalorder %s108, %s109
    %p120 = scmp.eq.s32.totalorder %s16, 0
    %p121 = por %p119, %p120
    %p122 = scmp.ne.s32.totalorder %s108, %s109
    %p123 = scmp.eq.s32.totalorder %s17, 1
    %p124 = por %p122, %p123
    %p126 = scmp.ne.s32.totalorder %s109, %s125
    %p127 = scmp.eq.s32.totalorder %s17, 0
    %p128 = por %p126, %p127
    %s129 = ssub.s32 %s18, %s30
    %s130 = ssub.s32 %s19, %s26
    %s131 = sor.u32 %s129, %s130
    %p132 = scmp.eq.s32.totalorder %s131, 0
    %s134 = sadd.s32 %s133, 1
    %s135 = scalar_select %p132, %s133, %s134
    %p138 = pneg %p132
    %p139 = scmp.eq.s32.totalorder %s11, 1
    %p140 = por %p138, %p139
    %p141 = scmp.ne.s32.totalorder %s133, %s136
    %p142 = scmp.eq.s32.totalorder %s11, 0
    %p143 = por %p141, %p142
    %p144 = scmp.ne.s32.totalorder %s133, %s136
    %p145 = scmp.eq.s32.totalorder %s16, 1
    %p146 = por %p144, %p145
    %p147 = scmp.ne.s32.totalorder %s136, %s137
    %p148 = scmp.eq.s32.totalorder %s16, 0
    %p149 = por %p147, %p148
    %p150 = scmp.ne.s32.totalorder %s136, %s137
    %p151 = scmp.eq.s32.totalorder %s17, 1
    %p152 = por %p150, %p151
    %p154 = scmp.ne.s32.totalorder %s137, %s153
    %p155 = scmp.eq.s32.totalorder %s17, 0
    %p156 = por %p154, %p155
    %p157 = scmp.le.s32.totalorder 1, %s11
    %p158 = scmp.lt.s32.totalorder %s11, 3
    %p159 = pnand %p157, %p158
    %p160 = pneg %p159
    // Predicated region
    $region9: #{nested_residual_unet_forward.10} parent=5 // pred_check
      _
    $region10: #{nested_residual_unet_forward.10} parent=5 // pred_check_branch
      %162 = sbr.rel (%p159) target = $region12
    $region11: #{nested_residual_unet_forward.10} parent=5 // pred_region
      %s163 = ssub.s32 %s11, 1
      // Predicated region
      $region13: #{nested_residual_unet_forward.10} parent=11 // pred_check
        %p164 = pneg %p72
      $region14: #{nested_residual_unet_forward.10} parent=11 // pred_check_branch
        %166 = sbr.rel (%p164) target = $region16
      $region15: #{nested_residual_unet_forward.10} parent=11 // pred_region
        _
      $region16: #{nested_residual_unet_forward.10} parent=11 // pred_fallthru
        _
      // Predicated region
      $region17: #{nested_residual_unet_forward.10} parent=11 // pred_check
        %p167 = pneg %p93
      $region18: #{nested_residual_unet_forward.10} parent=11 // pred_check_branch
        %169 = sbr.rel (%p167) target = $region20
      $region19: #{nested_residual_unet_forward.10} parent=11 // pred_region
        _
      $region20: #{nested_residual_unet_forward.10} parent=11 // pred_fallthru
        _
    $region12: #{nested_residual_unet_forward.10} parent=5 // pred_fallthru
      _
    %p170 = scmp.lt.s32.totalorder %s11, 2
    // Predicated region
    $region21: #{nested_residual_unet_forward.10} parent=5 // pred_check
      %p171 = pneg %p170
    $region22: #{nested_residual_unet_forward.10} parent=5 // pred_check_branch
      %173 = sbr.rel (%p171) target = $region24
    $region23: #{nested_residual_unet_forward.10} parent=5 // pred_region
      // Predicated region
      $region25: #{nested_residual_unet_forward.10} parent=23 // pred_check
        %p174 = pneg %p45
      $region26: #{nested_residual_unet_forward.10} parent=23 // pred_check_branch
        %176 = sbr.rel (%p174) target = $region28
      $region27: #{nested_residual_unet_forward.10} parent=23 // pred_region
        %s177 = smul.u32 16, %s19
        %p178 = scmp.lt.s32.totalorder %s18, 1
        %s179 = scalar_select %p178, %s18, 1
        %p180 = scmp.lt.s32.totalorder %s177, 15
        %s181 = scalar_select %p180, %s177, 15
        %s182 = smul.addr %s179, 16
        %s183 = sadd.s32 %s181, %s182
        %s184 = smul.addr %s183, 4
        %s185 = scalar_lea.vmem %s0, %s184
        %s186 = smul.u32 16, %s19
      $region28: #{nested_residual_unet_forward.10} parent=23 // pred_fallthru
        _
    $region24: #{nested_residual_unet_forward.10} parent=5 // pred_fallthru
      _
    %p187 = scmp.le.s32.totalorder 1, %s11
    %p188 = scmp.lt.s32.totalorder %s11, 3
    %p189 = pnand %p187, %p188
    %p190 = pneg %p189
    // Predicated region
    $region29: #{nested_residual_unet_forward.10} parent=5 // pred_check
      _
    $region30: #{nested_residual_unet_forward.10} parent=5 // pred_check_branch
      %192 = sbr.rel (%p189) target = $region32
    $region31: #{nested_residual_unet_forward.10} parent=5 // pred_region
      %s193 = ssub.s32 %s11, 1
      %s194 = smul.u32 16, %s21
      %p195 = scmp.lt.s32.totalorder %s20, 1
      %s196 = scalar_select %p195, %s20, 1
      %p197 = scmp.lt.s32.totalorder %s194, 15
      %s198 = scalar_select %p197, %s194, 15
      %s199 = smul.addr %s196, 16
      %s200 = sadd.s32 %s198, %s199
      %s201 = smul.addr %s200, 4
      %s202 = scalar_lea.vmem %s0, %s201
      %p203 = pneg %p51
      %p204 = pneg %p48
      %p205 = pneg %p72
      %p206 = pneg %p69
      %p207 = pneg %p93
      %p208 = pneg %p90
      %p209 = pneg %p121
      %p210 = pneg %p118
      %s211 = smul.u32 16, %s21
      %p212 = scmp.lt.s32.totalorder %s20, 1
      %s213 = scalar_select %p212, %s20, 1
      %p214 = scmp.lt.s32.totalorder %s211, 15
      %s215 = scalar_select %p214, %s211, 15
      %s216 = smul.addr %s213, 16
      %s217 = sadd.s32 %s215, %s216
      %s218 = smul.addr %s217, 4
      %s219 = scalar_lea.vmem %s3, %s218
      %p220 = pneg %p149
      %p221 = pneg %p146
      %p222 = scmp.lt.s32.totalorder %s20, 1
      %s223 = scalar_select %p222, %s20, 1
      %p224 = scmp.lt.s32.totalorder %s21, 0
      %s225 = scalar_select %p224, %s21, 0
      %s226 = sadd.s32 %s225, %s223
      %s227 = smul.addr %s226, 2
      %s228 = scalar_lea.vmem %s4, %s227
      %s229 = smul.u32 16, %s21
      %p230 = scmp.lt.s32.totalorder %s20, 1
      %s231 = scalar_select %p230, %s20, 1
      %p232 = scmp.lt.s32.totalorder %s229, 15
      %s233 = scalar_select %p232, %s229, 15
      %s234 = smul.addr %s231, 16
      %s235 = sadd.s32 %s233, %s234
      %s236 = smul.addr %s235, 4
      %s237 = scalar_lea.vmem %s0, %s236
      %s238 = smul.u32 16, %s21
      %s239 = smul.u32 16, %s21
      %p240 = scmp.lt.s32.totalorder %s20, 1
      %s241 = scalar_select %p240, %s20, 1
      %p242 = scmp.lt.s32.totalorder %s239, 15
      %s243 = scalar_select %p242, %s239, 15
      %s244 = smul.addr %s241, 16
      %s245 = sadd.s32 %s243, %s244
      %s246 = smul.addr %s245, 4
      %s247 = scalar_lea.vmem %s3, %s246
      %s248 = smul.u32 16, %s21
      %p249 = scmp.lt.s32.totalorder %s20, 1
      %s250 = scalar_select %p249, %s20, 1
      %p251 = scmp.lt.s32.totalorder %s21, 0
      %s252 = scalar_select %p251, %s21, 0
      %s253 = sadd.s32 %s252, %s250
      %s254 = smul.addr %s253, 2
      %s255 = scalar_lea.vmem %s4, %s254
      %v257 = vld [vmem:[%s237] sm:$0xf]
      %v258 = vld [vmem:[%s237 + $0x4] sm:$0xf]
      %v259 = vld [vmem:[%s237 + $0x8] sm:$0xf]
      %v260 = vld [vmem:[%s237 + $0xc] sm:$0xf]
      %v261 = vld [vmem:[%s237 + $0x10] sm:$0xf]
      %v262 = vld [vmem:[%s237 + $0x14] sm:$0xf]
      %v263 = vld [vmem:[%s237 + $0x18] sm:$0xf]
      %v264 = vld [vmem:[%s237 + $0x1c] sm:$0xf]
      %v265 = vld [vmem:[%s237 + $0x20] sm:$0xf]
      %v266 = vld [vmem:[%s237 + $0x24] sm:$0xf]
      %v267 = vld [vmem:[%s237 + $0x28] sm:$0xf]
      %v268 = vld [vmem:[%s237 + $0x2c] sm:$0xf]
      %v269 = vld [vmem:[%s237 + $0x30] sm:$0xf]
      %v270 = vld [vmem:[%s237 + $0x34] sm:$0xf]
      %v271 = vld [vmem:[%s237 + $0x38] sm:$0xf]
      %v272 = vld [vmem:[%s237 + $0x3c] sm:$0xf]
      %v273 = vld [vmem:[%s1] sm:$0xf]
      %v274 = vld [vmem:[%s1 + $0x4] sm:$0xf]
      %v275 = vld [vmem:[%s1 + $0x8] sm:$0xf]
      %v276 = vld [vmem:[%s1 + $0xc] sm:$0xf]
      %v277 = vld [vmem:[%s1 + $0x10] sm:$0xf]
      %v278 = vld [vmem:[%s1 + $0x14] sm:$0xf]
      %v279 = vld [vmem:[%s1 + $0x18] sm:$0xf]
      %v280 = vld [vmem:[%s1 + $0x1c] sm:$0xf]
      %v281 = vld [vmem:[%s2] sm:$0x1]
      %v283 = vlaneseq
      %v284 = vshrl.u32 %v283, 7
      %v285 = vsub.s32 0, %v284
      %v286 = vrot.slane %v281, %v285
      %v304 = vunpack.c.l.b16 %v257
      %v305 = vunpack.c.l.b16 %v258
      %v306 = vunpack.c.l.b16 %v259
      %v307 = vunpack.c.l.b16 %v260
      %v308 = vunpack.c.l.b16 %v261
      %v309 = vunpack.c.l.b16 %v262
      %v310 = vunpack.c.l.b16 %v263
      %v311 = vunpack.c.l.b16 %v264
      %v312 = vunpack.c.l.b16 %v265
      %v313 = vunpack.c.l.b16 %v266
      %v314 = vunpack.c.l.b16 %v267
      %v315 = vunpack.c.l.b16 %v268
      %v316 = vunpack.c.l.b16 %v269
      %v317 = vunpack.c.l.b16 %v270
      %v318 = vunpack.c.l.b16 %v271
      %v319 = vunpack.c.l.b16 %v272
      %v320 = vpack.c.b16 %v305, %v304
      %v321 = vpack.c.b16 %v307, %v306
      %v322 = vpack.c.b16 %v309, %v308
      %v323 = vpack.c.b16 %v311, %v310
      %v324 = vpack.c.b16 %v313, %v312
      %v325 = vpack.c.b16 %v315, %v314
      %v326 = vpack.c.b16 %v317, %v316
      %v327 = vpack.c.b16 %v319, %v318
      %v336 = vunpack.c.l.b16 %v273
      %v337 = vunpack.c.l.b16 %v274
      %v338 = vunpack.c.l.b16 %v275
      %v339 = vunpack.c.l.b16 %v276
      %v340 = vunpack.c.l.b16 %v277
      %v341 = vunpack.c.l.b16 %v278
      %v342 = vunpack.c.l.b16 %v279
      %v343 = vunpack.c.l.b16 %v280
      %v344 = vpack.c.b16 %v337, %v336
      %v345 = vpack.c.b16 %v339, %v338
      %v346 = vpack.c.b16 %v341, %v340
      %v347 = vpack.c.b16 %v343, %v342
      %vm352 = vcmask 523264
      %v354 = vsel %vm352, %v320, 0
      %v357 = vsel %vm352, %v321, 0
      %v360 = vsel %vm352, %v322, 0
      %v363 = vsel %vm352, %v323, 0
      %v366 = vsel %vm352, %v324, 0
      %v369 = vsel %vm352, %v325, 0
      %v372 = vsel %vm352, %v326, 0
      %v375 = vsel %vm352, %v327, 0
      %377 = vmatprep.subr.bf16.mxu0 0
      %378 = vmatpush1.bf16.msra.mxu0 0
      %379 = vmatprep.subr.bf16.mxu0 0
      %380 = vmatpush1.bf16.msra.mxu0 0
      %381 = vmatprep.subr.bf16.mxu0 0
      %382 = vmatpush1.bf16.msra.mxu0 0
      %383 = vmatprep.subr.bf16.mxu0 0
      %384 = vmatpush1.bf16.msra.mxu0 0
      %385 = vmatprep.subr.bf16.mxu0 0
      %386 = vmatpush1.bf16.msra.mxu0 %v347
      %387 = vmatprep.subr.bf16.mxu0 0
      %388 = vmatpush1.bf16.msra.mxu0 %v346
      %389 = vmatprep.subr.bf16.mxu0 0
      %390 = vmatpush1.bf16.msra.mxu0 %v345
      %391 = vmatprep.subr.bf16.mxu0 0
      %392 = vmatpush1.bf16.msra.mxu0 %v344
      %393 = vmatprep.subr.bf16.mxu0 0
      %394 = vmatpush2.bf16.msra.mxu0 0
      %395 = vmatprep.subr.bf16.mxu0 0
      %396 = vmatpush2.bf16.msra.mxu0 0
      %397 = vmatprep.subr.bf16.mxu0 0
      %398 = vmatpush2.bf16.msra.mxu0 0
      %399 = vmatprep.subr.bf16.mxu0 0
      %400 = vmatpush2.bf16.msra.mxu0 0
      %401 = vmatprep.subr.bf16.mxu0 0
      %402 = vmatpush2.bf16.msra.mxu0 0
      %403 = vmatprep.subr.bf16.mxu0 0
      %404 = vmatpush2.bf16.msra.mxu0 0
      %405 = vmatprep.subr.bf16.mxu0 0
      %406 = vmatpush2.bf16.msra.mxu0 0
      %407 = vmatprep.subr.bf16.mxu0 0
      %408 = vmatpush2.bf16.msra.mxu0 0
      %409 = vmatprep.mubr.bf16.mxu0 0
      %410 = vmatmul.mubr.bf16.gmra.mxu0 %v354
      %v411 = vpop.f32.mrf.mxu0
      %v412 = vadd.f32 %v286, %v411
      %v413 = vpop.f32.mrf.mxu0
      %v414 = vpop.f32.mrf.mxu0
      %v415 = vadd.f32 %v286, %v414
      %v416 = vpop.f32.mrf.mxu0
      %417 = vmatprep.mubr.bf16.mxu0 0
      %418 = vmatmul.mubr.bf16.gmra.mxu0 %v357
      %v419 = vpop.f32.mrf.mxu0
      %v420 = vadd.f32 %v286, %v419
      %v421 = vpop.f32.mrf.mxu0
      %v422 = vpop.f32.mrf.mxu0
      %v423 = vadd.f32 %v286, %v422
      %v424 = vpop.f32.mrf.mxu0
      %425 = vmatprep.mubr.bf16.mxu0 0
      %426 = vmatmul.mubr.bf16.gmra.mxu0 %v360
      %v427 = vpop.f32.mrf.mxu0
      %v428 = vadd.f32 %v286, %v427
      %v429 = vpop.f32.mrf.mxu0
      %v430 = vpop.f32.mrf.mxu0
      %v431 = vadd.f32 %v286, %v430
      %v432 = vpop.f32.mrf.mxu0
      %433 = vmatprep.mubr.bf16.mxu0 0
      %434 = vmatmul.mubr.bf16.gmra.mxu0 %v363
      %v435 = vpop.f32.mrf.mxu0
      %v436 = vadd.f32 %v286, %v435
      %v437 = vpop.f32.mrf.mxu0
      %v438 = vpop.f32.mrf.mxu0
      %v439 = vadd.f32 %v286, %v438
      %v440 = vpop.f32.mrf.mxu0
      %441 = vmatprep.mubr.bf16.mxu0 0
      %442 = vmatmul.mubr.bf16.gmra.mxu0 %v366
      %v443 = vpop.f32.mrf.mxu0
      %v444 = vadd.f32 %v286, %v443
      %v445 = vpop.f32.mrf.mxu0
      %v446 = vpop.f32.mrf.mxu0
      %v447 = vadd.f32 %v286, %v446
      %v448 = vpop.f32.mrf.mxu0
      %449 = vmatprep.mubr.bf16.mxu0 0
      %450 = vmatmul.mubr.bf16.gmra.mxu0 %v369
      %v451 = vpop.f32.mrf.mxu0
      %v452 = vadd.f32 %v286, %v451
      %v453 = vpop.f32.mrf.mxu0
      %v454 = vpop.f32.mrf.mxu0
      %v455 = vadd.f32 %v286, %v454
      %v456 = vpop.f32.mrf.mxu0
      %457 = vmatprep.mubr.bf16.mxu0 0
      %458 = vmatmul.mubr.bf16.gmra.mxu0 %v372
      %v459 = vpop.f32.mrf.mxu0
      %v460 = vadd.f32 %v286, %v459
      %v461 = vpop.f32.mrf.mxu0
      %v462 = vpop.f32.mrf.mxu0
      %v463 = vadd.f32 %v286, %v462
      %v464 = vpop.f32.mrf.mxu0
      %465 = vmatprep.mubr.bf16.mxu0 0
      %466 = vmatmul.mubr.bf16.gmra.mxu0 %v375
      %v467 = vpop.f32.mrf.mxu0
      %v468 = vadd.f32 %v286, %v467
      %v469 = vpop.f32.mrf.mxu0
      %v470 = vpop.f32.mrf.mxu0
      %v471 = vadd.f32 %v286, %v470
      %v472 = vpop.f32.mrf.mxu0
      %473 = vdwg.mxu0
      %v474 = vpack.c.bf16 %v415, %v412
      %v475 = vpack.c.bf16 %v423, %v420
      %v476 = vpack.c.bf16 %v431, %v428
      %v477 = vpack.c.bf16 %v439, %v436
      %v478 = vpack.c.bf16 %v447, %v444
      %v479 = vpack.c.bf16 %v455, %v452
      %v480 = vpack.c.bf16 %v463, %v460
      %v481 = vpack.c.bf16 %v471, %v468
      %v490 = vunpack.c.l.b16 %v474
      %v491 = vunpack.c.h.b16 %v474
      %v492 = vunpack.c.l.b16 %v475
      %v493 = vunpack.c.h.b16 %v475
      %v494 = vunpack.c.l.b16 %v476
      %v495 = vunpack.c.h.b16 %v476
      %v496 = vunpack.c.l.b16 %v477
      %v497 = vunpack.c.h.b16 %v477
      %v498 = vunpack.c.l.b16 %v478
      %v499 = vunpack.c.h.b16 %v478
      %v500 = vunpack.c.l.b16 %v479
      %v501 = vunpack.c.h.b16 %v479
      %v502 = vunpack.c.l.b16 %v480
      %v503 = vunpack.c.h.b16 %v480
      %v504 = vunpack.c.l.b16 %v481
      %v505 = vunpack.c.h.b16 %v481
      %v506 = vpack.c.b16 %v490, %v490
      %v507 = vpack.c.b16 %v491, %v491
      %v508 = vpack.c.b16 %v492, %v492
      %v509 = vpack.c.b16 %v493, %v493
      %v510 = vpack.c.b16 %v494, %v494
      %v511 = vpack.c.b16 %v495, %v495
      %v512 = vpack.c.b16 %v496, %v496
      %v513 = vpack.c.b16 %v497, %v497
      %v514 = vpack.c.b16 %v498, %v498
      %v515 = vpack.c.b16 %v499, %v499
      %v516 = vpack.c.b16 %v500, %v500
      %v517 = vpack.c.b16 %v501, %v501
      %v518 = vpack.c.b16 %v502, %v502
      %v519 = vpack.c.b16 %v503, %v503
      %v520 = vpack.c.b16 %v504, %v504
      %v521 = vpack.c.b16 %v505, %v505
      %vm538 = vcmask 257024
      %539 = vst.msk [vmem:[%s247] sm:$0xf] %vm538, %v506
      %540 = vst.msk [vmem:[%s247 + $0x4] sm:$0xf] %vm538, %v507
      %541 = vst.msk [vmem:[%s247 + $0x8] sm:$0xf] %vm538, %v508
      %542 = vst.msk [vmem:[%s247 + $0xc] sm:$0xf] %vm538, %v509
      %543 = vst.msk [vmem:[%s247 + $0x10] sm:$0xf] %vm538, %v510
      %544 = vst.msk [vmem:[%s247 + $0x14] sm:$0xf] %vm538, %v511
      %545 = vst.msk [vmem:[%s247 + $0x18] sm:$0xf] %vm538, %v512
      %546 = vst.msk [vmem:[%s247 + $0x1c] sm:$0xf] %vm538, %v513
      %547 = vst.msk [vmem:[%s247 + $0x20] sm:$0xf] %vm538, %v514
      %548 = vst.msk [vmem:[%s247 + $0x24] sm:$0xf] %vm538, %v515
      %549 = vst.msk [vmem:[%s247 + $0x28] sm:$0xf] %vm538, %v516
      %550 = vst.msk [vmem:[%s247 + $0x2c] sm:$0xf] %vm538, %v517
      %551 = vst.msk [vmem:[%s247 + $0x30] sm:$0xf] %vm538, %v518
      %552 = vst.msk [vmem:[%s247 + $0x34] sm:$0xf] %vm538, %v519
      %553 = vst.msk [vmem:[%s247 + $0x38] sm:$0xf] %vm538, %v520
      %554 = vst.msk [vmem:[%s247 + $0x3c] sm:$0xf] %vm538, %v521
      %vm555 = vcmask 261120
      %v556 = vsel %vm555, %v412, 0.0
      %v557 = vsel %vm555, %v415, 0.0
      %v558 = vadd.f32 %v556, %v557
      %v559 = vsel %vm555, %v420, 0.0
      %v560 = vadd.f32 %v558, %v559
      %v561 = vsel %vm555, %v423, 0.0
      %v562 = vadd.f32 %v560, %v561
      %v563 = vsel %vm555, %v428, 0.0
      %v564 = vadd.f32 %v562, %v563
      %v565 = vsel %vm555, %v431, 0.0
      %v566 = vadd.f32 %v564, %v565
      %v567 = vsel %vm555, %v436, 0.0
      %v568 = vadd.f32 %v566, %v567
      %v569 = vsel %vm555, %v439, 0.0
      %v570 = vadd.f32 %v568, %v569
      %v571 = vsel %vm555, %v444, 0.0
      %v572 = vadd.f32 %v570, %v571
      %v573 = vsel %vm555, %v447, 0.0
      %v574 = vadd.f32 %v572, %v573
      %v575 = vsel %vm555, %v452, 0.0
      %v576 = vadd.f32 %v574, %v575
      %v577 = vsel %vm555, %v455, 0.0
      %v578 = vadd.f32 %v576, %v577
      %v579 = vsel %vm555, %v460, 0.0
      %v580 = vadd.f32 %v578, %v579
      %v581 = vsel %vm555, %v463, 0.0
      %v582 = vadd.f32 %v580, %v581
      %v583 = vsel %vm555, %v468, 0.0
      %v584 = vadd.f32 %v582, %v583
      %v585 = vsel %vm555, %v471, 0.0
      %v586 = vadd.f32 %v584, %v585
      %v587 = vrot.slane %v586, 4
      %v588 = vadd.f32 %v586, %v587
      %v589 = vrot.slane %v588, 2
      %v590 = vadd.f32 %v588, %v589
      %v591 = vrot.slane %v590, 1
      %v592 = vadd.f32 %v590, %v591
      %vm593 = vcmask 253952
      %594 = vst.msk [vmem:[%s255] sm:$0x1] %vm593, %v592
      %v595 = vmul.f32 %v412, %v412
      %v596 = vmul.f32 %v415, %v415
      %v597 = vmul.f32 %v420, %v420
      %v598 = vmul.f32 %v423, %v423
      %v599 = vmul.f32 %v428, %v428
      %v600 = vmul.f32 %v431, %v431
      %v601 = vmul.f32 %v436, %v436
      %v602 = vmul.f32 %v439, %v439
      %v603 = vmul.f32 %v444, %v444
      %v604 = vmul.f32 %v447, %v447
      %v605 = vmul.f32 %v452, %v452
      %v606 = vmul.f32 %v455, %v455
      %v607 = vmul.f32 %v460, %v460
      %v608 = vmul.f32 %v463, %v463
      %v609 = vmul.f32 %v468, %v468
      %v610 = vmul.f32 %v471, %v471
      %v611 = vsel %vm555, %v595, 0.0
      %v612 = vsel %vm555, %v596, 0.0
      %v613 = vadd.f32 %v611, %v612
      %v614 = vsel %vm555, %v597, 0.0
      %v615 = vadd.f32 %v613, %v614
      %v616 = vsel %vm555, %v598, 0.0
      %v617 = vadd.f32 %v615, %v616
      %v618 = vsel %vm555, %v599, 0.0
      %v619 = vadd.f32 %v617, %v618
      %v620 = vsel %vm555, %v600, 0.0
      %v621 = vadd.f32 %v619, %v620
      %v622 = vsel %vm555, %v601, 0.0
      %v623 = vadd.f32 %v621, %v622
      %v624 = vsel %vm555, %v602, 0.0
      %v625 = vadd.f32 %v623, %v624
      %v626 = vsel %vm555, %v603, 0.0
      %v627 = vadd.f32 %v625, %v626
      %v628 = vsel %vm555, %v604, 0.0
      %v629 = vadd.f32 %v627, %v628
      %v630 = vsel %vm555, %v605, 0.0
      %v631 = vadd.f32 %v629, %v630
      %v632 = vsel %vm555, %v606, 0.0
      %v633 = vadd.f32 %v631, %v632
      %v634 = vsel %vm555, %v607, 0.0
      %v635 = vadd.f32 %v633, %v634
      %v636 = vsel %vm555, %v608, 0.0
      %v637 = vadd.f32 %v635, %v636
      %v638 = vsel %vm555, %v609, 0.0
      %v639 = vadd.f32 %v637, %v638
      %v640 = vsel %vm555, %v610, 0.0
      %v641 = vadd.f32 %v639, %v640
      %v642 = vrot.slane %v641, 4
      %v643 = vadd.f32 %v641, %v642
      %v644 = vrot.slane %v643, 2
      %v645 = vadd.f32 %v643, %v644
      %v646 = vrot.slane %v645, 1
      %v647 = vadd.f32 %v645, %v646
      %648 = vst.msk [vmem:[%s255 + $0x1] sm:$0x1] %vm593, %v647
      %s649 = smul.u32 16, %s21
      %p650 = scmp.lt.s32.totalorder %s20, 1
      %s651 = scalar_select %p650, %s20, 1
      %p652 = scmp.lt.s32.totalorder %s649, 15
      %s653 = scalar_select %p652, %s649, 15
      %s654 = smul.addr %s651, 16
      %s655 = sadd.s32 %s653, %s654
      %s656 = smul.addr %s655, 4
      %s657 = scalar_lea.vmem %s3, %s656
      %p658 = scmp.lt.s32.totalorder %s20, 1
      %s659 = scalar_select %p658, %s20, 1
      %p660 = scmp.lt.s32.totalorder %s21, 0
      %s661 = scalar_select %p660, %s21, 0
      %s662 = sadd.s32 %s661, %s659
      %s663 = smul.addr %s662, 2
      %s664 = scalar_lea.vmem %s4, %s663
      // Predicated region
      $region33: #{nested_residual_unet_forward.10} parent=31 // pred_check
        %p665 = pneg %p118
      $region34: #{nested_residual_unet_forward.10} parent=31 // pred_check_branch
        %667 = sbr.rel (%p665) target = $region36
      $region35: #{nested_residual_unet_forward.10} parent=31 // pred_region
        %s668 = smul.u32 16, %s21
      $region36: #{nested_residual_unet_forward.10} parent=31 // pred_fallthru
        _
      // Predicated region
      $region37: #{nested_residual_unet_forward.10} parent=31 // pred_check
        %p669 = pneg %p146
      $region38: #{nested_residual_unet_forward.10} parent=31 // pred_check_branch
        %671 = sbr.rel (%p669) target = $region40
      $region39: #{nested_residual_unet_forward.10} parent=31 // pred_region
        _
      $region40: #{nested_residual_unet_forward.10} parent=31 // pred_fallthru
        _
    $region32: #{nested_residual_unet_forward.10} parent=5 // pred_fallthru
      _
    %p672 = scmp.le.s32.totalorder 2, %s11
    // Predicated region
    $region41: #{nested_residual_unet_forward.10} parent=5 // pred_check
      %p673 = pneg %p672
    $region42: #{nested_residual_unet_forward.10} parent=5 // pred_check_branch
      %675 = sbr.rel (%p673) target = $region44
    $region43: #{nested_residual_unet_forward.10} parent=5 // pred_region
      %s676 = ssub.s32 %s11, 2
      // Predicated region
      $region45: #{nested_residual_unet_forward.10} parent=43 // pred_check
        %p677 = pneg %p124
      $region46: #{nested_residual_unet_forward.10} parent=43 // pred_check_branch
        %679 = sbr.rel (%p677) target = $region48
      $region47: #{nested_residual_unet_forward.10} parent=43 // pred_region
        %s680 = smul.u32 16, %s23
        %p681 = scmp.lt.s32.totalorder %s22, 1
        %s682 = scalar_select %p681, %s22, 1
        %p683 = scmp.lt.s32.totalorder %s680, 15
        %s684 = scalar_select %p683, %s680, 15
        %s685 = smul.addr %s682, 16
        %s686 = sadd.s32 %s684, %s685
        %s687 = smul.addr %s686, 4
        %s688 = scalar_lea.vmem %s3, %s687
      $region48: #{nested_residual_unet_forward.10} parent=43 // pred_fallthru
        _
      // Predicated region
      $region49: #{nested_residual_unet_forward.10} parent=43 // pred_check
        %p689 = pneg %p152
      $region50: #{nested_residual_unet_forward.10} parent=43 // pred_check_branch
        %691 = sbr.rel (%p689) target = $region52
      $region51: #{nested_residual_unet_forward.10} parent=43 // pred_region
        %p692 = scmp.lt.s32.totalorder %s22, 1
        %s693 = scalar_select %p692, %s22, 1
        %p694 = scmp.lt.s32.totalorder %s23, 0
        %s695 = scalar_select %p694, %s23, 0
        %s696 = sadd.s32 %s695, %s693
        %s697 = smul.addr %s696, 2
        %s698 = scalar_lea.vmem %s4, %s697
      $region52: #{nested_residual_unet_forward.10} parent=43 // pred_fallthru
        _
    $region44: #{nested_residual_unet_forward.10} parent=5 // pred_fallthru
      _
  $region6: #{nested_residual_unet_forward.10} parent=0 // loop_footer
    %s15 = sadd.s32 1, %s11
  $region7: #{nested_residual_unet_forward.10} parent=0 // loop_footer_branch
    %10 = sbr.rel target = $region3
  $region8: #{nested_residual_unet_forward.10} parent=0 // loop_exit
    _

// kernel: nested_residual_unet_forward.13
$region0: #{nested_residual_unet_forward.13}
  #allocation0 [shape = 'u32[]', space=smem, size = 0x4, offset = 0x4, fixed_abs, tag = 'smem constant byte address 0x4 - core index']
  #allocation1 [shape = 'u32[144,128]{1,0:T(1,128)}', space=vmem, size = 0x12000, scoped, tag = 'internal scratch']
  %s0 = inlined_call_operand.vmem [shape: bf16[2,1,1024], index: 0, kind: input, shape index: {}]
  %s1 = inlined_call_operand.vmem [shape: f32[2,1,1024], index: 1, kind: input, shape index: {}]
  %s2 = inlined_call_operand.vmem [shape: f32[2,1,1024], index: 2, kind: input, shape index: {}]
  %s3 = inlined_call_operand.vmem [shape: bf16[2,1,1024], index: 3, kind: output, shape index: {}]
  %s4 = sld [smem:[#allocation0]]
  $region45: #{nested_residual_unet_forward.13} parent=0
    _
  %s6 = ssub.s32 1, %s4
  %s7 = scalar_select 0, %s6, %s4
  loop: start=0, step=1, limit=4
  $region2: #{nested_residual_unet_forward.13} parent=0 // loop_pre_header
    _
  $region3: #{nested_residual_unet_forward.13} parent=0 // loop_header
    %s9 = sphi 0, %s13
    %p10 = scmp.ge.s32.totalorder %s9, 4
    %s16 = sphi 0, %s28
    %s17 = sphi 0, %s24
    %s18 = sphi 0, %s16
    %s19 = sphi 0, %s17
    %s20 = sphi 0, %s18
    %s21 = sphi 0, %s19
    %s33 = sphi 0, %s35
    %s36 = sphi 0, %s33
    %s37 = sphi 0, %s36
    %s53 = sphi 0, %s37
    %s59 = sphi 0, %s61
    %s62 = sphi 0, %s59
    %s63 = sphi 0, %s62
    %s79 = sphi 0, %s63
    %s85 = sphi 0, %s87
    %s88 = sphi 0, %s85
    %s89 = sphi 0, %s88
    %s105 = sphi 0, %s89
    %s113 = sphi 0, %s115
    %s116 = sphi 0, %s113
    %s117 = sphi 0, %s116
    %s133 = sphi 0, %s117
  $region4: #{nested_residual_unet_forward.13} parent=0 // loop_header_branch
    %12 = sbr.rel (%p10) target = $region8
  $region5: #{nested_residual_unet_forward.13} parent=0 // loop_body
    %s14 = ssub.s32 %s9, 1
    %s15 = ssub.s32 %s9, 2
    %s22 = sadd.s32 1, %s17
    %p23 = scmp.ge.s32.totalorder %s22, 1
    %s24 = scalar_select %p23, 0, %s22
    %s25 = sadd.s32 1, %s16
    %s26 = scalar_select %p23, %s25, %s16
    %p27 = scmp.ge.s32.totalorder %s26, 2
    %s28 = scalar_select %p27, 0, %s26
    %s29 = ssub.s32 %s16, %s28
    %s30 = ssub.s32 %s17, %s24
    %s31 = sor.u32 %s29, %s30
    %p32 = scmp.eq.s32.totalorder %s31, 0
    %s34 = sadd.s32 %s33, 1
    %s35 = scalar_select %p32, %s33, %s34
    %p38 = pneg %p32
    %p39 = scmp.eq.s32.totalorder %s9, 1
    %p40 = por %p38, %p39
    %p41 = scmp.ne.s32.totalorder %s33, %s36
    %p42 = scmp.eq.s32.totalorder %s9, 0
    %p43 = por %p41, %p42
    %p44 = scmp.ne.s32.totalorder %s33, %s36
    %p45 = scmp.eq.s32.totalorder %s14, 1
    %p46 = por %p44, %p45
    %p47 = scmp.ne.s32.totalorder %s36, %s37
    %p48 = scmp.eq.s32.totalorder %s14, 0
    %p49 = por %p47, %p48
    %p50 = scmp.ne.s32.totalorder %s36, %s37
    %p51 = scmp.eq.s32.totalorder %s15, 1
    %p52 = por %p50, %p51
    %p54 = scmp.ne.s32.totalorder %s37, %s53
    %p55 = scmp.eq.s32.totalorder %s15, 0
    %p56 = por %p54, %p55
    %s57 = ssub.s32 %s16, %s28
    %p58 = scmp.eq.s32.totalorder %s57, 0
    %s60 = sadd.s32 %s59, 1
    %s61 = scalar_select %p58, %s59, %s60
    %p64 = pneg %p58
    %p65 = scmp.eq.s32.totalorder %s9, 1
    %p66 = por %p64, %p65
    %p67 = scmp.ne.s32.totalorder %s59, %s62
    %p68 = scmp.eq.s32.totalorder %s9, 0
    %p69 = por %p67, %p68
    %p70 = scmp.ne.s32.totalorder %s59, %s62
    %p71 = scmp.eq.s32.totalorder %s14, 1
    %p72 = por %p70, %p71
    %p73 = scmp.ne.s32.totalorder %s62, %s63
    %p74 = scmp.eq.s32.totalorder %s14, 0
    %p75 = por %p73, %p74
    %p76 = scmp.ne.s32.totalorder %s62, %s63
    %p77 = scmp.eq.s32.totalorder %s15, 1
    %p78 = por %p76, %p77
    %p80 = scmp.ne.s32.totalorder %s63, %s79
    %p81 = scmp.eq.s32.totalorder %s15, 0
    %p82 = por %p80, %p81
    %s83 = ssub.s32 %s16, %s28
    %p84 = scmp.eq.s32.totalorder %s83, 0
    %s86 = sadd.s32 %s85, 1
    %s87 = scalar_select %p84, %s85, %s86
    %p90 = pneg %p84
    %p91 = scmp.eq.s32.totalorder %s9, 1
    %p92 = por %p90, %p91
    %p93 = scmp.ne.s32.totalorder %s85, %s88
    %p94 = scmp.eq.s32.totalorder %s9, 0
    %p95 = por %p93, %p94
    %p96 = scmp.ne.s32.totalorder %s85, %s88
    %p97 = scmp.eq.s32.totalorder %s14, 1
    %p98 = por %p96, %p97
    %p99 = scmp.ne.s32.totalorder %s88, %s89
    %p100 = scmp.eq.s32.totalorder %s14, 0
    %p101 = por %p99, %p100
    %p102 = scmp.ne.s32.totalorder %s88, %s89
    %p103 = scmp.eq.s32.totalorder %s15, 1
    %p104 = por %p102, %p103
    %p106 = scmp.ne.s32.totalorder %s89, %s105
    %p107 = scmp.eq.s32.totalorder %s15, 0
    %p108 = por %p106, %p107
    %s109 = ssub.s32 %s16, %s28
    %s110 = ssub.s32 %s17, %s24
    %s111 = sor.u32 %s109, %s110
    %p112 = scmp.eq.s32.totalorder %s111, 0
    %s114 = sadd.s32 %s113, 1
    %s115 = scalar_select %p112, %s113, %s114
    %p118 = pneg %p112
    %p119 = scmp.eq.s32.totalorder %s9, 1
    %p120 = por %p118, %p119
    %p121 = scmp.ne.s32.totalorder %s113, %s116
    %p122 = scmp.eq.s32.totalorder %s9, 0
    %p123 = por %p121, %p122
    %p124 = scmp.ne.s32.totalorder %s113, %s116
    %p125 = scmp.eq.s32.totalorder %s14, 1
    %p126 = por %p124, %p125
    %p127 = scmp.ne.s32.totalorder %s116, %s117
    %p128 = scmp.eq.s32.totalorder %s14, 0
    %p129 = por %p127, %p128
    %p130 = scmp.ne.s32.totalorder %s116, %s117
    %p131 = scmp.eq.s32.totalorder %s15, 1
    %p132 = por %p130, %p131
    %p134 = scmp.ne.s32.totalorder %s117, %s133
    %p135 = scmp.eq.s32.totalorder %s15, 0
    %p136 = por %p134, %p135
    %p137 = scmp.le.s32.totalorder 1, %s9
    %p138 = scmp.lt.s32.totalorder %s9, 3
    %p139 = pnand %p137, %p138
    %p140 = pneg %p139
    // Predicated region
    $region9: #{nested_residual_unet_forward.13} parent=5 // pred_check
      _
    $region10: #{nested_residual_unet_forward.13} parent=5 // pred_check_branch
      %142 = sbr.rel (%p139) target = $region12
    $region11: #{nested_residual_unet_forward.13} parent=5 // pred_region
      %s143 = ssub.s32 %s9, 1
    $region12: #{nested_residual_unet_forward.13} parent=5 // pred_fallthru
      _
    %p144 = scmp.lt.s32.totalorder %s9, 2
    // Predicated region
    $region13: #{nested_residual_unet_forward.13} parent=5 // pred_check
      %p145 = pneg %p144
    $region14: #{nested_residual_unet_forward.13} parent=5 // pred_check_branch
      %147 = sbr.rel (%p145) target = $region16
    $region15: #{nested_residual_unet_forward.13} parent=5 // pred_region
      // Predicated region
      $region17: #{nested_residual_unet_forward.13} parent=15 // pred_check
        %p148 = pneg %p43
      $region18: #{nested_residual_unet_forward.13} parent=15 // pred_check_branch
        %150 = sbr.rel (%p148) target = $region20
      $region19: #{nested_residual_unet_forward.13} parent=15 // pred_region
        %p151 = scmp.lt.s32.totalorder %s16, 1
        %s152 = scalar_select %p151, %s16, 1
        %p153 = scmp.lt.s32.totalorder %s17, 0
        %s154 = scalar_select %p153, %s17, 0
        %s155 = smul.addr %s154, 8
        %s156 = smul.addr %s152, 8
        %s157 = sadd.s32 %s155, %s156
        %s158 = scalar_lea.vmem %s0, %s157
      $region20: #{nested_residual_unet_forward.13} parent=15 // pred_fallthru
        _
      // Predicated region
      $region21: #{nested_residual_unet_forward.13} parent=15 // pred_check
        %p159 = pneg %p69
      $region22: #{nested_residual_unet_forward.13} parent=15 // pred_check_branch
        %161 = sbr.rel (%p159) target = $region24
      $region23: #{nested_residual_unet_forward.13} parent=15 // pred_region
        %p162 = scmp.lt.s32.totalorder %s16, 1
        %s163 = scalar_select %p162, %s16, 1
        %s164 = smul.addr %s163, 8
        %s165 = scalar_lea.vmem %s1, %s164
      $region24: #{nested_residual_unet_forward.13} parent=15 // pred_fallthru
        _
      // Predicated region
      $region25: #{nested_residual_unet_forward.13} parent=15 // pred_check
        %p166 = pneg %p95
      $region26: #{nested_residual_unet_forward.13} parent=15 // pred_check_branch
        %168 = sbr.rel (%p166) target = $region28
      $region27: #{nested_residual_unet_forward.13} parent=15 // pred_region
        %p169 = scmp.lt.s32.totalorder %s16, 1
        %s170 = scalar_select %p169, %s16, 1
        %s171 = smul.addr %s170, 8
        %s172 = scalar_lea.vmem %s2, %s171
      $region28: #{nested_residual_unet_forward.13} parent=15 // pred_fallthru
        _
    $region16: #{nested_residual_unet_forward.13} parent=5 // pred_fallthru
      _
    %p173 = scmp.le.s32.totalorder 1, %s9
    %p174 = scmp.lt.s32.totalorder %s9, 3
    %p175 = pnand %p173, %p174
    %p176 = pneg %p175
    // Predicated region
    $region29: #{nested_residual_unet_forward.13} parent=5 // pred_check
      _
    $region30: #{nested_residual_unet_forward.13} parent=5 // pred_check_branch
      %178 = sbr.rel (%p175) target = $region32
    $region31: #{nested_residual_unet_forward.13} parent=5 // pred_region
      %s179 = ssub.s32 %s9, 1
      %p180 = scmp.lt.s32.totalorder %s18, 1
      %s181 = scalar_select %p180, %s18, 1
      %p182 = scmp.lt.s32.totalorder %s19, 0
      %s183 = scalar_select %p182, %s19, 0
      %s184 = smul.addr %s183, 8
      %s185 = smul.addr %s181, 8
      %s186 = sadd.s32 %s184, %s185
      %s187 = scalar_lea.vmem %s0, %s186
      %p188 = pneg %p49
      %p189 = pneg %p46
      %p190 = scmp.lt.s32.totalorder %s18, 1
      %s191 = scalar_select %p190, %s18, 1
      %s192 = smul.addr %s191, 8
      %s193 = scalar_lea.vmem %s1, %s192
      %p194 = pneg %p75
      %p195 = pneg %p72
      %p196 = scmp.lt.s32.totalorder %s18, 1
      %s197 = scalar_select %p196, %s18, 1
      %s198 = smul.addr %s197, 8
      %s199 = scalar_lea.vmem %s2, %s198
      %p200 = pneg %p101
      %p201 = pneg %p98
      %p202 = pneg %p129
      %p203 = pneg %p126
      %p204 = scmp.lt.s32.totalorder %s18, 1
      %s205 = scalar_select %p204, %s18, 1
      %p206 = scmp.lt.s32.totalorder %s19, 0
      %s207 = scalar_select %p206, %s19, 0
      %s208 = smul.addr %s207, 8
      %s209 = smul.addr %s205, 8
      %s210 = sadd.s32 %s208, %s209
      %s211 = scalar_lea.vmem %s3, %s210
      %p212 = scmp.lt.s32.totalorder %s18, 1
      %s213 = scalar_select %p212, %s18, 1
      %p214 = scmp.lt.s32.totalorder %s19, 0
      %s215 = scalar_select %p214, %s19, 0
      %s216 = smul.addr %s215, 8
      %s217 = smul.addr %s213, 8
      %s218 = sadd.s32 %s216, %s217
      %s219 = scalar_lea.vmem %s0, %s218
      %p220 = scmp.lt.s32.totalorder %s18, 1
      %s221 = scalar_select %p220, %s18, 1
      %s222 = smul.addr %s221, 8
      %s223 = scalar_lea.vmem %s1, %s222
      %p224 = scmp.lt.s32.totalorder %s18, 1
      %s225 = scalar_select %p224, %s18, 1
      %s226 = smul.addr %s225, 8
      %s227 = scalar_lea.vmem %s2, %s226
      %p228 = scmp.lt.s32.totalorder %s18, 1
      %s229 = scalar_select %p228, %s18, 1
      %p230 = scmp.lt.s32.totalorder %s19, 0
      %s231 = scalar_select %p230, %s19, 0
      %s232 = smul.addr %s231, 8
      %s233 = smul.addr %s229, 8
      %s234 = sadd.s32 %s232, %s233
      %s235 = scalar_lea.vmem %s3, %s234
      %v236 = vld [vmem:[%s219] sm:$0xff]
      %v237 = vunpack.c.l.bf16 %v236
      %v238 = vunpack.c.h.bf16 %v236
      %v239 = vld [vmem:[%s223] sm:$0xff]
      %v242 = vunpack.c.l.s4 857870592
      %v243 = vunpack.c.0.s8 %v242
      %v244 = vlaneseq
      %v245 = vshrl.u32 %v244, 7
      %v246 = vsub.s32 %v243, %v245
      %v247 = vrot.slane %v239, %v246
      %v249 = vunpack.c.l.s4 2003195204
      %v250 = vunpack.c.0.s8 %v249
      %v251 = vlaneseq
      %v252 = vshrl.u32 %v251, 7
      %v253 = vsub.s32 %v250, %v252
      %v254 = vrot.slane %v239, %v253
      %v257 = vmul.f32 %v237, %v247
      %v258 = vmul.f32 %v238, %v254
      %v259 = vld [vmem:[%s227] sm:$0xff]
      %v262 = vunpack.c.l.s4 857870592
      %v263 = vunpack.c.0.s8 %v262
      %v264 = vlaneseq
      %v265 = vshrl.u32 %v264, 7
      %v266 = vsub.s32 %v263, %v265
      %v267 = vrot.slane %v259, %v266
      %v269 = vunpack.c.l.s4 2003195204
      %v270 = vunpack.c.0.s8 %v269
      %v271 = vlaneseq
      %v272 = vshrl.u32 %v271, 7
      %v273 = vsub.s32 %v270, %v272
      %v274 = vrot.slane %v259, %v273
      %v277 = vadd.f32 %v257, %v267
      %v278 = vadd.f32 %v258, %v274
      %v279 = vxor.u32 %v277, 2147483648
      %v280 = vxor.u32 %v278, 2147483648
      %v281 = vmul.f32 %v279, 1.442695
      %v282 = vpow.pop %v281
      %v283 = vmul.f32 %v280, 1.442695
      %v284 = vpow.pop %v283
      %v285 = vadd.f32 %v282, 1.0
      %v286 = vadd.f32 %v284, 1.0
      %v287 = vrcp.pop %v285
      %v288 = vmul.f32 1.0, %v287
      %v289 = vrcp.pop %v286
      %v290 = vmul.f32 1.0, %v289
      %v291 = vmul.f32 %v277, %v288
      %v292 = vmul.f32 %v278, %v290
      %v295 = vlaneseq
      %v296 = vshrl.u32 %v295, 7
      %v297 = vsub.s32 0, %v296
      %v298 = vrot.slane %v291, %v297
      %v299 = vlaneseq
      %v300 = vshrl.u32 %v299, 7
      %v301 = vsub.s32 2, %v300
      %v302 = vrot.slane %v291, %v301
      %v303 = vlaneseq
      %v304 = vshrl.u32 %v303, 7
      %v305 = vsub.s32 4, %v304
      %v306 = vrot.slane %v291, %v305
      %v307 = vlaneseq
      %v308 = vshrl.u32 %v307, 7
      %v309 = vsub.s32 6, %v308
      %v310 = vrot.slane %v291, %v309
      %v311 = vlaneseq
      %v312 = vshrl.u32 %v311, 7
      %v313 = vsub.s32 0, %v312
      %v314 = vrot.slane %v292, %v313
      %v315 = vlaneseq
      %v316 = vshrl.u32 %v315, 7
      %v317 = vsub.s32 2, %v316
      %v318 = vrot.slane %v292, %v317
      %v319 = vlaneseq
      %v320 = vshrl.u32 %v319, 7
      %v321 = vsub.s32 4, %v320
      %v322 = vrot.slane %v292, %v321
      %v323 = vlaneseq
      %v324 = vshrl.u32 %v323, 7
      %v325 = vsub.s32 6, %v324
      %v326 = vrot.slane %v292, %v325
      %v335 = vpack.c.bf16 %v298, %v298
      %v336 = vpack.c.bf16 %v302, %v302
      %v337 = vpack.c.bf16 %v306, %v306
      %v338 = vpack.c.bf16 %v310, %v310
      %v339 = vpack.c.bf16 %v314, %v314
      %v340 = vpack.c.bf16 %v318, %v318
      %v341 = vpack.c.bf16 %v322, %v322
      %v342 = vpack.c.bf16 %v326, %v326
      %v351 = vcombine.low %v335, %v336
      %v352 = vcombine.low %v337, %v338
      %v353 = vcombine.low %v339, %v340
      %v354 = vcombine.low %v341, %v342
      %v356 = vunpack.c.l.s4 1966171168
      %v357 = vunpack.c.0.s8 %v356
      %v358 = vlaneseq
      %v359 = vshrl.u32 %v358, 7
      %v360 = vsub.s32 %v357, %v359
      %v361 = vrot.slane %v351, %v360
      %v363 = vunpack.c.l.s4 1966171168
      %v364 = vunpack.c.0.s8 %v363
      %v365 = vlaneseq
      %v366 = vshrl.u32 %v365, 7
      %v367 = vsub.s32 %v364, %v366
      %v368 = vrot.slane %v352, %v367
      %v370 = vunpack.c.l.s4 1966171168
      %v371 = vunpack.c.0.s8 %v370
      %v372 = vlaneseq
      %v373 = vshrl.u32 %v372, 7
      %v374 = vsub.s32 %v371, %v373
      %v375 = vrot.slane %v353, %v374
      %v377 = vunpack.c.l.s4 1966171168
      %v378 = vunpack.c.0.s8 %v377
      %v379 = vlaneseq
      %v380 = vshrl.u32 %v379, 7
      %v381 = vsub.s32 %v378, %v380
      %v382 = vrot.slane %v354, %v381
      %v383 = vcombine.low %v361, %v368
      %v384 = vcombine.low %v375, %v382
      %v386 = vunpack.c.l.s4 1966171168
      %v387 = vunpack.c.0.s8 %v386
      %v388 = vlaneseq
      %v389 = vshrl.u32 %v388, 7
      %v390 = vsub.s32 %v387, %v389
      %v391 = vrot.slane %v383, %v390
      %v393 = vunpack.c.l.s4 1966171168
      %v394 = vunpack.c.0.s8 %v393
      %v395 = vlaneseq
      %v396 = vshrl.u32 %v395, 7
      %v397 = vsub.s32 %v394, %v396
      %v398 = vrot.slane %v384, %v397
      %v399 = vcombine.low %v391, %v398
      %vm401 = vcmask 1040384
      %vm402 = vsmask.f32 256
      %vm403 = vmand %vm401, %vm402
      %vm404 = vcmask 1041409
      %vm405 = vsmask.f32 1280
      %vm406 = vmand %vm404, %vm405
      %vm407 = vmor %vm406, %vm403
      %vm408 = vcmask 1042434
      %vm409 = vsmask.f32 2304
      %vm410 = vmand %vm408, %vm409
      %vm411 = vmor %vm410, %vm407
      %vm412 = vcmask 1043459
      %vm413 = vsmask.f32 3328
      %vm414 = vmand %vm412, %vm413
      %vm415 = vmor %vm414, %vm411
      %vm416 = vcmask 1044484
      %vm417 = vsmask.f32 4352
      %vm418 = vmand %vm416, %vm417
      %vm419 = vmor %vm418, %vm415
      %vm420 = vcmask 1045509
      %vm421 = vsmask.f32 5376
      %vm422 = vmand %vm420, %vm421
      %vm423 = vmor %vm422, %vm419
      %vm424 = vcmask 1046534
      %vm425 = vsmask.f32 6400
      %vm426 = vmand %vm424, %vm425
      %vm427 = vmor %vm426, %vm423
      %vm428 = vcmask 1047559
      %vm429 = vsmask.f32 7424
      %vm430 = vmand %vm428, %vm429
      %vm431 = vmor %vm430, %vm427
      %v432 = vld [vmem:[%s235] sm:$0xff]
      %v433 = vsel %vm431, %v399, %v432
      %434 = vst [vmem:[%s235] sm:$0xff] %v433
      %p435 = scmp.lt.s32.totalorder %s18, 1
      %s436 = scalar_select %p435, %s18, 1
      %p437 = scmp.lt.s32.totalorder %s19, 0
      %s438 = scalar_select %p437, %s19, 0
      %s439 = smul.addr %s438, 8
      %s440 = smul.addr %s436, 8
      %s441 = sadd.s32 %s439, %s440
      %s442 = scalar_lea.vmem %s3, %s441
      // Predicated region
      $region33: #{nested_residual_unet_forward.13} parent=31 // pred_check
        %p443 = pneg %p126
      $region34: #{nested_residual_unet_forward.13} parent=31 // pred_check_branch
        %445 = sbr.rel (%p443) target = $region36
      $region35: #{nested_residual_unet_forward.13} parent=31 // pred_region
        _
      $region36: #{nested_residual_unet_forward.13} parent=31 // pred_fallthru
        _
    $region32: #{nested_residual_unet_forward.13} parent=5 // pred_fallthru
      _
    %p446 = scmp.le.s32.totalorder 2, %s9
    // Predicated region
    $region37: #{nested_residual_unet_forward.13} parent=5 // pred_check
      %p447 = pneg %p446
    $region38: #{nested_residual_unet_forward.13} parent=5 // pred_check_branch
      %449 = sbr.rel (%p447) target = $region40
    $region39: #{nested_residual_unet_forward.13} parent=5 // pred_region
      %s450 = ssub.s32 %s9, 2
      // Predicated region
      $region41: #{nested_residual_unet_forward.13} parent=39 // pred_check
        %p451 = pneg %p132
      $region42: #{nested_residual_unet_forward.13} parent=39 // pred_check_branch
        %453 = sbr.rel (%p451) target = $region44
      $region43: #{nested_residual_unet_forward.13} parent=39 // pred_region
        %p454 = scmp.lt.s32.totalorder %s20, 1
        %s455 = scalar_select %p454, %s20, 1
        %p456 = scmp.lt.s32.totalorder %s21, 0
        %s457 = scalar_select %p456, %s21, 0
        %s458 = smul.addr %s457, 8
        %s459 = smul.addr %s455, 8
        %s460 = sadd.s32 %s458, %s459
        %s461 = scalar_lea.vmem %s3, %s460
      $region44: #{nested_residual_unet_forward.13} parent=39 // pred_fallthru
        _
    $region40: #{nested_residual_unet_forward.13} parent=5 // pred_fallthru
      _
  $region6: #{nested_residual_unet_forward.13} parent=0 // loop_footer
    %s13 = sadd.s32 1, %s9
  $region7: #{nested_residual_unet_forward.13} parent=0 // loop_footer_branch
    %8 = sbr.rel target = $region3
  $region8: #{nested_residual_unet_forward.13} parent=0 // loop_exit
    _

// kernel: nested_residual_unet_forward.12
$region0: #{nested_residual_unet_forward.12}
  #allocation0 [shape = 'u32[]', space=smem, size = 0x4, offset = 0x4, fixed_abs, tag = 'smem constant byte address 0x4 - core index']
  #allocation1 [shape = 'u32[144,128]{1,0:T(1,128)}', space=vmem, size = 0x12000, scoped, tag = 'internal scratch']
  %s0 = inlined_call_operand.vmem [shape: bf16[2,32,512], index: 0, kind: input, shape index: {}]
  %s1 = inlined_call_operand.vmem [shape: bf16[512,32], index: 1, kind: input, shape index: {}]
  %s2 = inlined_call_operand.vmem [shape: f32[1,32], index: 2, kind: input, shape index: {}]
  %s3 = inlined_call_operand.vmem [shape: bf16[2,32,32], index: 3, kind: output, shape index: {0}]
  %s4 = inlined_call_operand.vmem [shape: f32[2,1,2,32], index: 4, kind: output, shape index: {1}]
  %5 = xla_tuple %s3, %s4
  %s6 = sld [smem:[#allocation0]]
  $region53: #{nested_residual_unet_forward.12} parent=0
    _
  %s8 = ssub.s32 1, %s6
  %s9 = scalar_select 0, %s8, %s6
  loop: start=0, step=1, limit=4
  $region2: #{nested_residual_unet_forward.12} parent=0 // loop_pre_header
    _
  $region3: #{nested_residual_unet_forward.12} parent=0 // loop_header
    %s11 = sphi 0, %s15
    %p12 = scmp.ge.s32.totalorder %s11, 4
    %s18 = sphi 0, %s30
    %s19 = sphi 0, %s26
    %s20 = sphi 0, %s18
    %s21 = sphi 0, %s19
    %s22 = sphi 0, %s20
    %s23 = sphi 0, %s21
    %s35 = sphi 0, %s37
    %s38 = sphi 0, %s35
    %s39 = sphi 0, %s38
    %s55 = sphi 0, %s39
    %s59 = sphi 0, %s59
    %s61 = sphi 0, %s59
    %s62 = sphi 0, %s61
    %s76 = sphi 0, %s62
    %s80 = sphi 0, %s80
    %s82 = sphi 0, %s80
    %s83 = sphi 0, %s82
    %s97 = sphi 0, %s83
    %s105 = sphi 0, %s107
    %s108 = sphi 0, %s105
    %s109 = sphi 0, %s108
    %s125 = sphi 0, %s109
    %s133 = sphi 0, %s135
    %s136 = sphi 0, %s133
    %s137 = sphi 0, %s136
    %s153 = sphi 0, %s137
  $region4: #{nested_residual_unet_forward.12} parent=0 // loop_header_branch
    %14 = sbr.rel (%p12) target = $region8
  $region5: #{nested_residual_unet_forward.12} parent=0 // loop_body
    %s16 = ssub.s32 %s11, 1
    %s17 = ssub.s32 %s11, 2
    %s24 = sadd.s32 1, %s19
    %p25 = scmp.ge.s32.totalorder %s24, 1
    %s26 = scalar_select %p25, 0, %s24
    %s27 = sadd.s32 1, %s18
    %s28 = scalar_select %p25, %s27, %s18
    %p29 = scmp.ge.s32.totalorder %s28, 2
    %s30 = scalar_select %p29, 0, %s28
    %s31 = ssub.s32 %s18, %s30
    %s32 = ssub.s32 %s19, %s26
    %s33 = sor.u32 %s31, %s32
    %p34 = scmp.eq.s32.totalorder %s33, 0
    %s36 = sadd.s32 %s35, 1
    %s37 = scalar_select %p34, %s35, %s36
    %p40 = pneg %p34
    %p41 = scmp.eq.s32.totalorder %s11, 1
    %p42 = por %p40, %p41
    %p43 = scmp.ne.s32.totalorder %s35, %s38
    %p44 = scmp.eq.s32.totalorder %s11, 0
    %p45 = por %p43, %p44
    %p46 = scmp.ne.s32.totalorder %s35, %s38
    %p47 = scmp.eq.s32.totalorder %s16, 1
    %p48 = por %p46, %p47
    %p49 = scmp.ne.s32.totalorder %s38, %s39
    %p50 = scmp.eq.s32.totalorder %s16, 0
    %p51 = por %p49, %p50
    %p52 = scmp.ne.s32.totalorder %s38, %s39
    %p53 = scmp.eq.s32.totalorder %s17, 1
    %p54 = por %p52, %p53
    %p56 = scmp.ne.s32.totalorder %s39, %s55
    %p57 = scmp.eq.s32.totalorder %s17, 0
    %p58 = por %p56, %p57
    %s60 = sadd.s32 %s59, 1
    %p63 = scmp.eq.s32.totalorder %s11, 1
    %p64 = scmp.ne.s32.totalorder %s59, %s61
    %p65 = scmp.eq.s32.totalorder %s11, 0
    %p66 = por %p64, %p65
    %p67 = scmp.ne.s32.totalorder %s59, %s61
    %p68 = scmp.eq.s32.totalorder %s16, 1
    %p69 = por %p67, %p68
    %p70 = scmp.ne.s32.totalorder %s61, %s62
    %p71 = scmp.eq.s32.totalorder %s16, 0
    %p72 = por %p70, %p71
    %p73 = scmp.ne.s32.totalorder %s61, %s62
    %p74 = scmp.eq.s32.totalorder %s17, 1
    %p75 = por %p73, %p74
    %p77 = scmp.ne.s32.totalorder %s62, %s76
    %p78 = scmp.eq.s32.totalorder %s17, 0
    %p79 = por %p77, %p78
    %s81 = sadd.s32 %s80, 1
    %p84 = scmp.eq.s32.totalorder %s11, 1
    %p85 = scmp.ne.s32.totalorder %s80, %s82
    %p86 = scmp.eq.s32.totalorder %s11, 0
    %p87 = por %p85, %p86
    %p88 = scmp.ne.s32.totalorder %s80, %s82
    %p89 = scmp.eq.s32.totalorder %s16, 1
    %p90 = por %p88, %p89
    %p91 = scmp.ne.s32.totalorder %s82, %s83
    %p92 = scmp.eq.s32.totalorder %s16, 0
    %p93 = por %p91, %p92
    %p94 = scmp.ne.s32.totalorder %s82, %s83
    %p95 = scmp.eq.s32.totalorder %s17, 1
    %p96 = por %p94, %p95
    %p98 = scmp.ne.s32.totalorder %s83, %s97
    %p99 = scmp.eq.s32.totalorder %s17, 0
    %p100 = por %p98, %p99
    %s101 = ssub.s32 %s18, %s30
    %s102 = ssub.s32 %s19, %s26
    %s103 = sor.u32 %s101, %s102
    %p104 = scmp.eq.s32.totalorder %s103, 0
    %s106 = sadd.s32 %s105, 1
    %s107 = scalar_select %p104, %s105, %s106
    %p110 = pneg %p104
    %p111 = scmp.eq.s32.totalorder %s11, 1
    %p112 = por %p110, %p111
    %p113 = scmp.ne.s32.totalorder %s105, %s108
    %p114 = scmp.eq.s32.totalorder %s11, 0
    %p115 = por %p113, %p114
    %p116 = scmp.ne.s32.totalorder %s105, %s108
    %p117 = scmp.eq.s32.totalorder %s16, 1
    %p118 = por %p116, %p117
    %p119 = scmp.ne.s32.totalorder %s108, %s109
    %p120 = scmp.eq.s32.totalorder %s16, 0
    %p121 = por %p119, %p120
    %p122 = scmp.ne.s32.totalorder %s108, %s109
    %p123 = scmp.eq.s32.totalorder %s17, 1
    %p124 = por %p122, %p123
    %p126 = scmp.ne.s32.totalorder %s109, %s125
    %p127 = scmp.eq.s32.totalorder %s17, 0
    %p128 = por %p126, %p127
    %s129 = ssub.s32 %s18, %s30
    %s130 = ssub.s32 %s19, %s26
    %s131 = sor.u32 %s129, %s130
    %p132 = scmp.eq.s32.totalorder %s131, 0
    %s134 = sadd.s32 %s133, 1
    %s135 = scalar_select %p132, %s133, %s134
    %p138 = pneg %p132
    %p139 = scmp.eq.s32.totalorder %s11, 1
    %p140 = por %p138, %p139
    %p141 = scmp.ne.s32.totalorder %s133, %s136
    %p142 = scmp.eq.s32.totalorder %s11, 0
    %p143 = por %p141, %p142
    %p144 = scmp.ne.s32.totalorder %s133, %s136
    %p145 = scmp.eq.s32.totalorder %s16, 1
    %p146 = por %p144, %p145
    %p147 = scmp.ne.s32.totalorder %s136, %s137
    %p148 = scmp.eq.s32.totalorder %s16, 0
    %p149 = por %p147, %p148
    %p150 = scmp.ne.s32.totalorder %s136, %s137
    %p151 = scmp.eq.s32.totalorder %s17, 1
    %p152 = por %p150, %p151
    %p154 = scmp.ne.s32.totalorder %s137, %s153
    %p155 = scmp.eq.s32.totalorder %s17, 0
    %p156 = por %p154, %p155
    %p157 = scmp.le.s32.totalorder 1, %s11
    %p158 = scmp.lt.s32.totalorder %s11, 3
    %p159 = pnand %p157, %p158
    %p160 = pneg %p159
    // Predicated region
    $region9: #{nested_residual_unet_forward.12} parent=5 // pred_check
      _
    $region10: #{nested_residual_unet_forward.12} parent=5 // pred_check_branch
      %162 = sbr.rel (%p159) target = $region12
    $region11: #{nested_residual_unet_forward.12} parent=5 // pred_region
      %s163 = ssub.s32 %s11, 1
      // Predicated region
      $region13: #{nested_residual_unet_forward.12} parent=11 // pred_check
        %p164 = pneg %p72
      $region14: #{nested_residual_unet_forward.12} parent=11 // pred_check_branch
        %166 = sbr.rel (%p164) target = $region16
      $region15: #{nested_residual_unet_forward.12} parent=11 // pred_region
        _
      $region16: #{nested_residual_unet_forward.12} parent=11 // pred_fallthru
        _
      // Predicated region
      $region17: #{nested_residual_unet_forward.12} parent=11 // pred_check
        %p167 = pneg %p93
      $region18: #{nested_residual_unet_forward.12} parent=11 // pred_check_branch
        %169 = sbr.rel (%p167) target = $region20
      $region19: #{nested_residual_unet_forward.12} parent=11 // pred_region
        _
      $region20: #{nested_residual_unet_forward.12} parent=11 // pred_fallthru
        _
    $region12: #{nested_residual_unet_forward.12} parent=5 // pred_fallthru
      _
    %p170 = scmp.lt.s32.totalorder %s11, 2
    // Predicated region
    $region21: #{nested_residual_unet_forward.12} parent=5 // pred_check
      %p171 = pneg %p170
    $region22: #{nested_residual_unet_forward.12} parent=5 // pred_check_branch
      %173 = sbr.rel (%p171) target = $region24
    $region23: #{nested_residual_unet_forward.12} parent=5 // pred_region
      // Predicated region
      $region25: #{nested_residual_unet_forward.12} parent=23 // pred_check
        %p174 = pneg %p45
      $region26: #{nested_residual_unet_forward.12} parent=23 // pred_check_branch
        %176 = sbr.rel (%p174) target = $region28
      $region27: #{nested_residual_unet_forward.12} parent=23 // pred_region
        %s177 = smul.u32 4, %s19
        %p178 = scmp.lt.s32.totalorder %s18, 1
        %s179 = scalar_select %p178, %s18, 1
        %p180 = scmp.lt.s32.totalorder %s177, 3
        %s181 = scalar_select %p180, %s177, 3
        %s182 = smul.addr %s181, 4
        %s183 = smul.addr %s179, 16
        %s184 = sadd.s32 %s182, %s183
        %s185 = smul.addr %s184, 4
        %s186 = scalar_lea.vmem %s0, %s185
        %s187 = smul.u32 4, %s19
      $region28: #{nested_residual_unet_forward.12} parent=23 // pred_fallthru
        _
    $region24: #{nested_residual_unet_forward.12} parent=5 // pred_fallthru
      _
    %p188 = scmp.le.s32.totalorder 1, %s11
    %p189 = scmp.lt.s32.totalorder %s11, 3
    %p190 = pnand %p188, %p189
    %p191 = pneg %p190
    // Predicated region
    $region29: #{nested_residual_unet_forward.12} parent=5 // pred_check
      _
    $region30: #{nested_residual_unet_forward.12} parent=5 // pred_check_branch
      %193 = sbr.rel (%p190) target = $region32
    $region31: #{nested_residual_unet_forward.12} parent=5 // pred_region
      %s194 = ssub.s32 %s11, 1
      %s195 = smul.u32 4, %s21
      %p196 = scmp.lt.s32.totalorder %s20, 1
      %s197 = scalar_select %p196, %s20, 1
      %p198 = scmp.lt.s32.totalorder %s195, 3
      %s199 = scalar_select %p198, %s195, 3
      %s200 = smul.addr %s199, 4
      %s201 = smul.addr %s197, 16
      %s202 = sadd.s32 %s200, %s201
      %s203 = smul.addr %s202, 4
      %s204 = scalar_lea.vmem %s0, %s203
      %p205 = pneg %p51
      %p206 = pneg %p48
      %p207 = pneg %p72
      %p208 = pneg %p69
      %p209 = pneg %p93
      %p210 = pneg %p90
      %p211 = pneg %p121
      %p212 = pneg %p118
      %s213 = smul.u32 4, %s21
      %p214 = scmp.lt.s32.totalorder %s20, 1
      %s215 = scalar_select %p214, %s20, 1
      %p216 = scmp.lt.s32.totalorder %s213, 3
      %s217 = scalar_select %p216, %s213, 3
      %s218 = smul.addr %s215, 4
      %s219 = sadd.s32 %s217, %s218
      %s220 = smul.addr %s219, 4
      %s221 = scalar_lea.vmem %s3, %s220
      %p222 = pneg %p149
      %p223 = pneg %p146
      %p224 = scmp.lt.s32.totalorder %s20, 1
      %s225 = scalar_select %p224, %s20, 1
      %p226 = scmp.lt.s32.totalorder %s21, 0
      %s227 = scalar_select %p226, %s21, 0
      %s228 = sadd.s32 %s227, %s225
      %s229 = smul.addr %s228, 2
      %s230 = scalar_lea.vmem %s4, %s229
      %s231 = smul.u32 4, %s21
      %p232 = scmp.lt.s32.totalorder %s20, 1
      %s233 = scalar_select %p232, %s20, 1
      %p234 = scmp.lt.s32.totalorder %s231, 3
      %s235 = scalar_select %p234, %s231, 3
      %s236 = smul.addr %s235, 4
      %s237 = smul.addr %s233, 16
      %s238 = sadd.s32 %s236, %s237
      %s239 = smul.addr %s238, 4
      %s240 = scalar_lea.vmem %s0, %s239
      %s241 = smul.u32 4, %s21
      %s242 = smul.u32 4, %s21
      %p243 = scmp.lt.s32.totalorder %s20, 1
      %s244 = scalar_select %p243, %s20, 1
      %p245 = scmp.lt.s32.totalorder %s242, 3
      %s246 = scalar_select %p245, %s242, 3
      %s247 = smul.addr %s244, 4
      %s248 = sadd.s32 %s246, %s247
      %s249 = smul.addr %s248, 4
      %s250 = scalar_lea.vmem %s3, %s249
      %s251 = smul.u32 4, %s21
      %p252 = scmp.lt.s32.totalorder %s20, 1
      %s253 = scalar_select %p252, %s20, 1
      %p254 = scmp.lt.s32.totalorder %s21, 0
      %s255 = scalar_select %p254, %s21, 0
      %s256 = sadd.s32 %s255, %s253
      %s257 = smul.addr %s256, 2
      %s258 = scalar_lea.vmem %s4, %s257
      %v260 = vld [vmem:[%s240] sm:$0xff]
      %v261 = vld [vmem:[%s240 + $0x8] sm:$0xff]
      %v262 = vld [vmem:[%s240 + $0x10] sm:$0xff]
      %v263 = vld [vmem:[%s240 + $0x18] sm:$0xff]
      %v264 = vld [vmem:[%s240 + $0x20] sm:$0xff]
      %v265 = vld [vmem:[%s240 + $0x28] sm:$0xff]
      %v266 = vld [vmem:[%s240 + $0x30] sm:$0xff]
      %v267 = vld [vmem:[%s240 + $0x38] sm:$0xff]
      %v268 = vld [vmem:[%s1] sm:$0xf]
      %v269 = vld [vmem:[%s1 + $0x4] sm:$0xf]
      %v270 = vld [vmem:[%s1 + $0x8] sm:$0xf]
      %v271 = vld [vmem:[%s1 + $0xc] sm:$0xf]
      %v272 = vld [vmem:[%s1 + $0x10] sm:$0xf]
      %v273 = vld [vmem:[%s1 + $0x14] sm:$0xf]
      %v274 = vld [vmem:[%s1 + $0x18] sm:$0xf]
      %v275 = vld [vmem:[%s1 + $0x1c] sm:$0xf]
      %v276 = vld [vmem:[%s1 + $0x20] sm:$0xf]
      %v277 = vld [vmem:[%s1 + $0x24] sm:$0xf]
      %v278 = vld [vmem:[%s1 + $0x28] sm:$0xf]
      %v279 = vld [vmem:[%s1 + $0x2c] sm:$0xf]
      %v280 = vld [vmem:[%s1 + $0x30] sm:$0xf]
      %v281 = vld [vmem:[%s1 + $0x34] sm:$0xf]
      %v282 = vld [vmem:[%s1 + $0x38] sm:$0xf]
      %v283 = vld [vmem:[%s1 + $0x3c] sm:$0xf]
      %v284 = vld [vmem:[%s1 + $0x40] sm:$0xf]
      %v285 = vld [vmem:[%s1 + $0x44] sm:$0xf]
      %v286 = vld [vmem:[%s1 + $0x48] sm:$0xf]
      %v287 = vld [vmem:[%s1 + $0x4c] sm:$0xf]
      %v288 = vld [vmem:[%s1 + $0x50] sm:$0xf]
      %v289 = vld [vmem:[%s1 + $0x54] sm:$0xf]
      %v290 = vld [vmem:[%s1 + $0x58] sm:$0xf]
      %v291 = vld [vmem:[%s1 + $0x5c] sm:$0xf]
      %v292 = vld [vmem:[%s1 + $0x60] sm:$0xf]
      %v293 = vld [vmem:[%s1 + $0x64] sm:$0xf]
      %v294 = vld [vmem:[%s1 + $0x68] sm:$0xf]
      %v295 = vld [vmem:[%s1 + $0x6c] sm:$0xf]
      %v296 = vld [vmem:[%s1 + $0x70] sm:$0xf]
      %v297 = vld [vmem:[%s1 + $0x74] sm:$0xf]
      %v298 = vld [vmem:[%s1 + $0x78] sm:$0xf]
      %v299 = vld [vmem:[%s1 + $0x7c] sm:$0xf]
      %v300 = vld [vmem:[%s1 + $0x80] sm:$0xf]
      %v301 = vld [vmem:[%s1 + $0x84] sm:$0xf]
      %v302 = vld [vmem:[%s1 + $0x88] sm:$0xf]
      %v303 = vld [vmem:[%s1 + $0x8c] sm:$0xf]
      %v304 = vld [vmem:[%s1 + $0x90] sm:$0xf]
      %v305 = vld [vmem:[%s1 + $0x94] sm:$0xf]
      %v306 = vld [vmem:[%s1 + $0x98] sm:$0xf]
      %v307 = vld [vmem:[%s1 + $0x9c] sm:$0xf]
      %v308 = vld [vmem:[%s1 + $0xa0] sm:$0xf]
      %v309 = vld [vmem:[%s1 + $0xa4] sm:$0xf]
      %v310 = vld [vmem:[%s1 + $0xa8] sm:$0xf]
      %v311 = vld [vmem:[%s1 + $0xac] sm:$0xf]
      %v312 = vld [vmem:[%s1 + $0xb0] sm:$0xf]
      %v313 = vld [vmem:[%s1 + $0xb4] sm:$0xf]
      %v314 = vld [vmem:[%s1 + $0xb8] sm:$0xf]
      %v315 = vld [vmem:[%s1 + $0xbc] sm:$0xf]
      %v316 = vld [vmem:[%s1 + $0xc0] sm:$0xf]
      %v317 = vld [vmem:[%s1 + $0xc4] sm:$0xf]
      %v318 = vld [vmem:[%s1 + $0xc8] sm:$0xf]
      %v319 = vld [vmem:[%s1 + $0xcc] sm:$0xf]
      %v320 = vld [vmem:[%s1 + $0xd0] sm:$0xf]
      %v321 = vld [vmem:[%s1 + $0xd4] sm:$0xf]
      %v322 = vld [vmem:[%s1 + $0xd8] sm:$0xf]
      %v323 = vld [vmem:[%s1 + $0xdc] sm:$0xf]
      %v324 = vld [vmem:[%s1 + $0xe0] sm:$0xf]
      %v325 = vld [vmem:[%s1 + $0xe4] sm:$0xf]
      %v326 = vld [vmem:[%s1 + $0xe8] sm:$0xf]
      %v327 = vld [vmem:[%s1 + $0xec] sm:$0xf]
      %v328 = vld [vmem:[%s1 + $0xf0] sm:$0xf]
      %v329 = vld [vmem:[%s1 + $0xf4] sm:$0xf]
      %v330 = vld [vmem:[%s1 + $0xf8] sm:$0xf]
      %v331 = vld [vmem:[%s1 + $0xfc] sm:$0xf]
      %v332 = vld [vmem:[%s2] sm:$0x1]
      %v334 = vlaneseq
      %v335 = vshrl.u32 %v334, 7
      %v336 = vsub.s32 0, %v335
      %v337 = vrot.slane %v332, %v336
      %v347 = vunpack.c.l.b16 %v260
      %v348 = vunpack.c.h.b16 %v260
      %v349 = vunpack.c.l.b16 %v261
      %v350 = vunpack.c.h.b16 %v261
      %v351 = vunpack.c.l.b16 %v262
      %v352 = vunpack.c.h.b16 %v262
      %v353 = vunpack.c.l.b16 %v263
      %v354 = vunpack.c.h.b16 %v263
      %v355 = vunpack.c.l.b16 %v264
      %v356 = vunpack.c.h.b16 %v264
      %v357 = vunpack.c.l.b16 %v265
      %v358 = vunpack.c.h.b16 %v265
      %v359 = vunpack.c.l.b16 %v266
      %v360 = vunpack.c.h.b16 %v266
      %v361 = vunpack.c.l.b16 %v267
      %v362 = vunpack.c.h.b16 %v267
      %v363 = vpack.c.b16 %v351, %v347
      %v364 = vpack.c.b16 %v352, %v348
      %v365 = vpack.c.b16 %v353, %v349
      %v366 = vpack.c.b16 %v354, %v350
      %v367 = vpack.c.b16 %v359, %v355
      %v368 = vpack.c.b16 %v360, %v356
      %v369 = vpack.c.b16 %v361, %v357
      %v370 = vpack.c.b16 %v362, %v358
      %v443 = vunpack.c.l.b16 %v268
      %v444 = vunpack.c.l.b16 %v269
      %v445 = vunpack.c.l.b16 %v270
      %v446 = vunpack.c.l.b16 %v271
      %v447 = vunpack.c.l.b16 %v272
      %v448 = vunpack.c.l.b16 %v273
      %v449 = vunpack.c.l.b16 %v274
      %v450 = vunpack.c.l.b16 %v275
      %v451 = vunpack.c.l.b16 %v276
      %v452 = vunpack.c.l.b16 %v277
      %v453 = vunpack.c.l.b16 %v278
      %v454 = vunpack.c.l.b16 %v279
      %v455 = vunpack.c.l.b16 %v280
      %v456 = vunpack.c.l.b16 %v281
      %v457 = vunpack.c.l.b16 %v282
      %v458 = vunpack.c.l.b16 %v283
      %v459 = vunpack.c.l.b16 %v284
      %v460 = vunpack.c.l.b16 %v285
      %v461 = vunpack.c.l.b16 %v286
      %v462 = vunpack.c.l.b16 %v287
      %v463 = vunpack.c.l.b16 %v288
      %v464 = vunpack.c.l.b16 %v289
      %v465 = vunpack.c.l.b16 %v290
      %v466 = vunpack.c.l.b16 %v291
      %v467 = vunpack.c.l.b16 %v292
      %v468 = vunpack.c.l.b16 %v293
      %v469 = vunpack.c.l.b16 %v294
      %v470 = vunpack.c.l.b16 %v295
      %v471 = vunpack.c.l.b16 %v296
      %v472 = vunpack.c.l.b16 %v297
      %v473 = vunpack.c.l.b16 %v298
      %v474 = vunpack.c.l.b16 %v299
      %v475 = vunpack.c.l.b16 %v300
      %v476 = vunpack.c.l.b16 %v301
      %v477 = vunpack.c.l.b16 %v302
      %v478 = vunpack.c.l.b16 %v303
      %v479 = vunpack.c.l.b16 %v304
      %v480 = vunpack.c.l.b16 %v305
      %v481 = vunpack.c.l.b16 %v306
      %v482 = vunpack.c.l.b16 %v307
      %v483 = vunpack.c.l.b16 %v308
      %v484 = vunpack.c.l.b16 %v309
      %v485 = vunpack.c.l.b16 %v310
      %v486 = vunpack.c.l.b16 %v311
      %v487 = vunpack.c.l.b16 %v312
      %v488 = vunpack.c.l.b16 %v313
      %v489 = vunpack.c.l.b16 %v314
      %v490 = vunpack.c.l.b16 %v315
      %v491 = vunpack.c.l.b16 %v316
      %v492 = vunpack.c.l.b16 %v317
      %v493 = vunpack.c.l.b16 %v318
      %v494 = vunpack.c.l.b16 %v319
      %v495 = vunpack.c.l.b16 %v320
      %v496 = vunpack.c.l.b16 %v321
      %v497 = vunpack.c.l.b16 %v322
      %v498 = vunpack.c.l.b16 %v323
      %v499 = vunpack.c.l.b16 %v324
      %v500 = vunpack.c.l.b16 %v325
      %v501 = vunpack.c.l.b16 %v326
      %v502 = vunpack.c.l.b16 %v327
      %v503 = vunpack.c.l.b16 %v328
      %v504 = vunpack.c.l.b16 %v329
      %v505 = vunpack.c.l.b16 %v330
      %v506 = vunpack.c.l.b16 %v331
      %v507 = vpack.c.b16 %v444, %v443
      %v508 = vpack.c.b16 %v446, %v445
      %v509 = vpack.c.b16 %v448, %v447
      %v510 = vpack.c.b16 %v450, %v449
      %v511 = vpack.c.b16 %v452, %v451
      %v512 = vpack.c.b16 %v454, %v453
      %v513 = vpack.c.b16 %v456, %v455
      %v514 = vpack.c.b16 %v458, %v457
      %v515 = vpack.c.b16 %v460, %v459
      %v516 = vpack.c.b16 %v462, %v461
      %v517 = vpack.c.b16 %v464, %v463
      %v518 = vpack.c.b16 %v466, %v465
      %v519 = vpack.c.b16 %v468, %v467
      %v520 = vpack.c.b16 %v470, %v469
      %v521 = vpack.c.b16 %v472, %v471
      %v522 = vpack.c.b16 %v474, %v473
      %v523 = vpack.c.b16 %v476, %v475
      %v524 = vpack.c.b16 %v478, %v477
      %v525 = vpack.c.b16 %v480, %v479
      %v526 = vpack.c.b16 %v482, %v481
      %v527 = vpack.c.b16 %v484, %v483
      %v528 = vpack.c.b16 %v486, %v485
      %v529 = vpack.c.b16 %v488, %v487
      %v530 = vpack.c.b16 %v490, %v489
      %v531 = vpack.c.b16 %v492, %v491
      %v532 = vpack.c.b16 %v494, %v493
      %v533 = vpack.c.b16 %v496, %v495
      %v534 = vpack.c.b16 %v498, %v497
      %v535 = vpack.c.b16 %v500, %v499
      %v536 = vpack.c.b16 %v502, %v501
      %v537 = vpack.c.b16 %v504, %v503
      %v538 = vpack.c.b16 %v506, %v505
      %571 = vmatprep.subr.bf16.mxu0 0
      %572 = vmatpush1.bf16.msra.mxu0 %v514
      %573 = vmatprep.subr.bf16.mxu0 0
      %574 = vmatpush1.bf16.msra.mxu0 %v513
      %575 = vmatprep.subr.bf16.mxu0 0
      %576 = vmatpush1.bf16.msra.mxu0 %v512
      %577 = vmatprep.subr.bf16.mxu0 0
      %578 = vmatpush1.bf16.msra.mxu0 %v511
      %579 = vmatprep.subr.bf16.mxu0 0
      %580 = vmatpush1.bf16.msra.mxu0 %v510
      %581 = vmatprep.subr.bf16.mxu0 0
      %582 = vmatpush1.bf16.msra.mxu0 %v509
      %583 = vmatprep.subr.bf16.mxu0 0
      %584 = vmatpush1.bf16.msra.mxu0 %v508
      %585 = vmatprep.subr.bf16.mxu0 0
      %586 = vmatpush1.bf16.msra.mxu0 %v507
      %587 = vmatprep.subr.bf16.mxu0 0
      %588 = vmatpush2.bf16.msra.mxu0 %v522
      %589 = vmatprep.subr.bf16.mxu0 0
      %590 = vmatpush2.bf16.msra.mxu0 %v521
      %591 = vmatprep.subr.bf16.mxu0 0
      %592 = vmatpush2.bf16.msra.mxu0 %v520
      %593 = vmatprep.subr.bf16.mxu0 0
      %594 = vmatpush2.bf16.msra.mxu0 %v519
      %595 = vmatprep.subr.bf16.mxu0 0
      %596 = vmatpush2.bf16.msra.mxu0 %v518
      %597 = vmatprep.subr.bf16.mxu0 0
      %598 = vmatpush2.bf16.msra.mxu0 %v517
      %599 = vmatprep.subr.bf16.mxu0 0
      %600 = vmatpush2.bf16.msra.mxu0 %v516
      %601 = vmatprep.subr.bf16.mxu0 0
      %602 = vmatpush2.bf16.msra.mxu0 %v515
      %603 = vmatprep.mubr.bf16.mxu0 %v364
      %604 = vmatmul.mubr.bf16.gmra.mxu0 %v363
      %v605 = vpop.f32.mrf.mxu0
      %v606 = vadd.f32 %v337, %v605
      %v607 = vpop.f32.mrf.mxu0
      %v608 = vpop.f32.mrf.mxu0
      %v609 = vadd.f32 %v337, %v608
      %v610 = vpop.f32.mrf.mxu0
      %611 = vmatprep.mubr.bf16.mxu0 %v368
      %612 = vmatmul.mubr.bf16.gmra.mxu0 %v367
      %v613 = vpop.f32.mrf.mxu0
      %v614 = vadd.f32 %v337, %v613
      %v615 = vpop.f32.mrf.mxu0
      %v616 = vpop.f32.mrf.mxu0
      %v617 = vadd.f32 %v337, %v616
      %v618 = vpop.f32.mrf.mxu0
      %619 = vdwg.mxu0
      %620 = vmatprep.subr.bf16.mxu0 0
      %621 = vmatpush1.bf16.msra.mxu0 %v530
      %622 = vmatprep.subr.bf16.mxu0 0
      %623 = vmatpush1.bf16.msra.mxu0 %v529
      %624 = vmatprep.subr.bf16.mxu0 0
      %625 = vmatpush1.bf16.msra.mxu0 %v528
      %626 = vmatprep.subr.bf16.mxu0 0
      %627 = vmatpush1.bf16.msra.mxu0 %v527
      %628 = vmatprep.subr.bf16.mxu0 0
      %629 = vmatpush1.bf16.msra.mxu0 %v526
      %630 = vmatprep.subr.bf16.mxu0 0
      %631 = vmatpush1.bf16.msra.mxu0 %v525
      %632 = vmatprep.subr.bf16.mxu0 0
      %633 = vmatpush1.bf16.msra.mxu0 %v524
      %634 = vmatprep.subr.bf16.mxu0 0
      %635 = vmatpush1.bf16.msra.mxu0 %v523
      %636 = vmatprep.subr.bf16.mxu0 0
      %637 = vmatpush2.bf16.msra.mxu0 %v538
      %638 = vmatprep.subr.bf16.mxu0 0
      %639 = vmatpush2.bf16.msra.mxu0 %v537
      %640 = vmatprep.subr.bf16.mxu0 0
      %641 = vmatpush2.bf16.msra.mxu0 %v536
      %642 = vmatprep.subr.bf16.mxu0 0
      %643 = vmatpush2.bf16.msra.mxu0 %v535
      %644 = vmatprep.subr.bf16.mxu0 0
      %645 = vmatpush2.bf16.msra.mxu0 %v534
      %646 = vmatprep.subr.bf16.mxu0 0
      %647 = vmatpush2.bf16.msra.mxu0 %v533
      %648 = vmatprep.subr.bf16.mxu0 0
      %649 = vmatpush2.bf16.msra.mxu0 %v532
      %650 = vmatprep.subr.bf16.mxu0 0
      %651 = vmatpush2.bf16.msra.mxu0 %v531
      %652 = vmatprep.mubr.bf16.mxu0 %v366
      %653 = vmatmul.mubr.bf16.gmra.mxu0 %v365
      %v654 = vpop.f32.mrf.mxu0
      %v655 = vadd.f32 %v606, %v654
      %v656 = vpop.f32.mrf.mxu0
      %v657 = vpop.f32.mrf.mxu0
      %v658 = vadd.f32 %v609, %v657
      %v659 = vpop.f32.mrf.mxu0
      %660 = vmatprep.mubr.bf16.mxu0 %v370
      %661 = vmatmul.mubr.bf16.gmra.mxu0 %v369
      %v662 = vpop.f32.mrf.mxu0
      %v663 = vadd.f32 %v614, %v662
      %v664 = vpop.f32.mrf.mxu0
      %v665 = vpop.f32.mrf.mxu0
      %v666 = vadd.f32 %v617, %v665
      %v667 = vpop.f32.mrf.mxu0
      %668 = vdwg.mxu0
      %v669 = vpack.c.bf16 %v658, %v655
      %v670 = vpack.c.bf16 %v666, %v663
      %v673 = vunpack.c.l.b16 %v669
      %v674 = vunpack.c.h.b16 %v669
      %v675 = vunpack.c.l.b16 %v670
      %v676 = vunpack.c.h.b16 %v670
      %v677 = vpack.c.b16 %v673, %v673
      %v678 = vpack.c.b16 %v674, %v674
      %v679 = vpack.c.b16 %v675, %v675
      %v680 = vpack.c.b16 %v676, %v676
      %vm685 = vcmask 257024
      %686 = vst.msk [vmem:[%s250] sm:$0xf] %vm685, %v677
      %687 = vst.msk [vmem:[%s250 + $0x4] sm:$0xf] %vm685, %v678
      %688 = vst.msk [vmem:[%s250 + $0x8] sm:$0xf] %vm685, %v679
      %689 = vst.msk [vmem:[%s250 + $0xc] sm:$0xf] %vm685, %v680
      %vm690 = vcmask 261120
      %v691 = vsel %vm690, %v655, 0.0
      %v692 = vsel %vm690, %v658, 0.0
      %v693 = vadd.f32 %v691, %v692
      %v694 = vsel %vm690, %v663, 0.0
      %v695 = vadd.f32 %v693, %v694
      %v696 = vsel %vm690, %v666, 0.0
      %v697 = vadd.f32 %v695, %v696
      %v698 = vrot.slane %v697, 4
      %v699 = vadd.f32 %v697, %v698
      %v700 = vrot.slane %v699, 2
      %v701 = vadd.f32 %v699, %v700
      %v702 = vrot.slane %v701, 1
      %v703 = vadd.f32 %v701, %v702
      %vm704 = vcmask 253952
      %705 = vst.msk [vmem:[%s258] sm:$0x1] %vm704, %v703
      %v706 = vmul.f32 %v655, %v655
      %v707 = vmul.f32 %v658, %v658
      %v708 = vmul.f32 %v663, %v663
      %v709 = vmul.f32 %v666, %v666
      %v710 = vsel %vm690, %v706, 0.0
      %v711 = vsel %vm690, %v707, 0.0
      %v712 = vadd.f32 %v710, %v711
      %v713 = vsel %vm690, %v708, 0.0
      %v714 = vadd.f32 %v712, %v713
      %v715 = vsel %vm690, %v709, 0.0
      %v716 = vadd.f32 %v714, %v715
      %v717 = vrot.slane %v716, 4
      %v718 = vadd.f32 %v716, %v717
      %v719 = vrot.slane %v718, 2
      %v720 = vadd.f32 %v718, %v719
      %v721 = vrot.slane %v720, 1
      %v722 = vadd.f32 %v720, %v721
      %723 = vst.msk [vmem:[%s258 + $0x1] sm:$0x1] %vm704, %v722
      %s724 = smul.u32 4, %s21
      %p725 = scmp.lt.s32.totalorder %s20, 1
      %s726 = scalar_select %p725, %s20, 1
      %p727 = scmp.lt.s32.totalorder %s724, 3
      %s728 = scalar_select %p727, %s724, 3
      %s729 = smul.addr %s726, 4
      %s730 = sadd.s32 %s728, %s729
      %s731 = smul.addr %s730, 4
      %s732 = scalar_lea.vmem %s3, %s731
      %p733 = scmp.lt.s32.totalorder %s20, 1
      %s734 = scalar_select %p733, %s20, 1
      %p735 = scmp.lt.s32.totalorder %s21, 0
      %s736 = scalar_select %p735, %s21, 0
      %s737 = sadd.s32 %s736, %s734
      %s738 = smul.addr %s737, 2
      %s739 = scalar_lea.vmem %s4, %s738
      // Predicated region
      $region33: #{nested_residual_unet_forward.12} parent=31 // pred_check
        %p740 = pneg %p118
      $region34: #{nested_residual_unet_forward.12} parent=31 // pred_check_branch
        %742 = sbr.rel (%p740) target = $region36
      $region35: #{nested_residual_unet_forward.12} parent=31 // pred_region
        %s743 = smul.u32 4, %s21
      $region36: #{nested_residual_unet_forward.12} parent=31 // pred_fallthru
        _
      // Predicated region
      $region37: #{nested_residual_unet_forward.12} parent=31 // pred_check
        %p744 = pneg %p146
      $region38: #{nested_residual_unet_forward.12} parent=31 // pred_check_branch
        %746 = sbr.rel (%p744) target = $region40
      $region39: #{nested_residual_unet_forward.12} parent=31 // pred_region
        _
      $region40: #{nested_residual_unet_forward.12} parent=31 // pred_fallthru
        _
    $region32: #{nested_residual_unet_forward.12} parent=5 // pred_fallthru
      _
    %p747 = scmp.le.s32.totalorder 2, %s11
    // Predicated region
    $region41: #{nested_residual_unet_forward.12} parent=5 // pred_check
      %p748 = pneg %p747
    $region42: #{nested_residual_unet_forward.12} parent=5 // pred_check_branch
      %750 = sbr.rel (%p748) target = $region44
    $region43: #{nested_residual_unet_forward.12} parent=5 // pred_region
      %s751 = ssub.s32 %s11, 2
      // Predicated region
      $region45: #{nested_residual_unet_forward.12} parent=43 // pred_check
        %p752 = pneg %p124
      $region46: #{nested_residual_unet_forward.12} parent=43 // pred_check_branch
        %754 = sbr.rel (%p752) target = $region48
      $region47: #{nested_residual_unet_forward.12} parent=43 // pred_region
        %s755 = smul.u32 4, %s23
        %p756 = scmp.lt.s32.totalorder %s22, 1
        %s757 = scalar_select %p756, %s22, 1
        %p758 = scmp.lt.s32.totalorder %s755, 3
        %s759 = scalar_select %p758, %s755, 3
        %s760 = smul.addr %s757, 4
        %s761 = sadd.s32 %s759, %s760
        %s762 = smul.addr %s761, 4
        %s763 = scalar_lea.vmem %s3, %s762
      $region48: #{nested_residual_unet_forward.12} parent=43 // pred_fallthru
        _
      // Predicated region
      $region49: #{nested_residual_unet_forward.12} parent=43 // pred_check
        %p764 = pneg %p152
      $region50: #{nested_residual_unet_forward.12} parent=43 // pred_check_branch
        %766 = sbr.rel (%p764) target = $region52
      $region51: #{nested_residual_unet_forward.12} parent=43 // pred_region
        %p767 = scmp.lt.s32.totalorder %s22, 1
        %s768 = scalar_select %p767, %s22, 1
        %p769 = scmp.lt.s32.totalorder %s23, 0
        %s770 = scalar_select %p769, %s23, 0
        %s771 = sadd.s32 %s770, %s768
        %s772 = smul.addr %s771, 2
        %s773 = scalar_lea.vmem %s4, %s772
      $region52: #{nested_residual_unet_forward.12} parent=43 // pred_fallthru
        _
    $region44: #{nested_residual_unet_forward.12} parent=5 // pred_fallthru
      _
  $region6: #{nested_residual_unet_forward.12} parent=0 // loop_footer
    %s15 = sadd.s32 1, %s11
  $region7: #{nested_residual_unet_forward.12} parent=0 // loop_footer_branch
    %10 = sbr.rel target = $region3
  $region8: #{nested_residual_unet_forward.12} parent=0 // loop_exit
    _

// kernel: nested_residual_unet_forward.14
$region0: #{nested_residual_unet_forward.14}
  #allocation0 [shape = 'u32[]', space=smem, size = 0x4, offset = 0x4, fixed_abs, tag = 'smem constant byte address 0x4 - core index']
  #allocation1 [shape = 'u32[144,128]{1,0:T(1,128)}', space=vmem, size = 0x12000, scoped, tag = 'internal scratch']
  %s0 = inlined_call_operand.vmem [shape: bf16[2,32,288], index: 0, kind: input, shape index: {}]
  %s1 = inlined_call_operand.vmem [shape: bf16[288,32], index: 1, kind: input, shape index: {}]
  %s2 = inlined_call_operand.vmem [shape: f32[1,32], index: 2, kind: input, shape index: {}]
  %s3 = inlined_call_operand.vmem [shape: bf16[2,32,32], index: 3, kind: output, shape index: {0}]
  %s4 = inlined_call_operand.vmem [shape: f32[2,1,2,32], index: 4, kind: output, shape index: {1}]
  %5 = xla_tuple %s3, %s4
  %s6 = sld [smem:[#allocation0]]
  $region53: #{nested_residual_unet_forward.14} parent=0
    _
  %s8 = ssub.s32 1, %s6
  %s9 = scalar_select 0, %s8, %s6
  loop: start=0, step=1, limit=4
  $region2: #{nested_residual_unet_forward.14} parent=0 // loop_pre_header
    _
  $region3: #{nested_residual_unet_forward.14} parent=0 // loop_header
    %s11 = sphi 0, %s15
    %p12 = scmp.ge.s32.totalorder %s11, 4
    %s18 = sphi 0, %s30
    %s19 = sphi 0, %s26
    %s20 = sphi 0, %s18
    %s21 = sphi 0, %s19
    %s22 = sphi 0, %s20
    %s23 = sphi 0, %s21
    %s35 = sphi 0, %s37
    %s38 = sphi 0, %s35
    %s39 = sphi 0, %s38
    %s55 = sphi 0, %s39
    %s59 = sphi 0, %s59
    %s61 = sphi 0, %s59
    %s62 = sphi 0, %s61
    %s76 = sphi 0, %s62
    %s80 = sphi 0, %s80
    %s82 = sphi 0, %s80
    %s83 = sphi 0, %s82
    %s97 = sphi 0, %s83
    %s105 = sphi 0, %s107
    %s108 = sphi 0, %s105
    %s109 = sphi 0, %s108
    %s125 = sphi 0, %s109
    %s133 = sphi 0, %s135
    %s136 = sphi 0, %s133
    %s137 = sphi 0, %s136
    %s153 = sphi 0, %s137
  $region4: #{nested_residual_unet_forward.14} parent=0 // loop_header_branch
    %14 = sbr.rel (%p12) target = $region8
  $region5: #{nested_residual_unet_forward.14} parent=0 // loop_body
    %s16 = ssub.s32 %s11, 1
    %s17 = ssub.s32 %s11, 2
    %s24 = sadd.s32 1, %s19
    %p25 = scmp.ge.s32.totalorder %s24, 1
    %s26 = scalar_select %p25, 0, %s24
    %s27 = sadd.s32 1, %s18
    %s28 = scalar_select %p25, %s27, %s18
    %p29 = scmp.ge.s32.totalorder %s28, 2
    %s30 = scalar_select %p29, 0, %s28
    %s31 = ssub.s32 %s18, %s30
    %s32 = ssub.s32 %s19, %s26
    %s33 = sor.u32 %s31, %s32
    %p34 = scmp.eq.s32.totalorder %s33, 0
    %s36 = sadd.s32 %s35, 1
    %s37 = scalar_select %p34, %s35, %s36
    %p40 = pneg %p34
    %p41 = scmp.eq.s32.totalorder %s11, 1
    %p42 = por %p40, %p41
    %p43 = scmp.ne.s32.totalorder %s35, %s38
    %p44 = scmp.eq.s32.totalorder %s11, 0
    %p45 = por %p43, %p44
    %p46 = scmp.ne.s32.totalorder %s35, %s38
    %p47 = scmp.eq.s32.totalorder %s16, 1
    %p48 = por %p46, %p47
    %p49 = scmp.ne.s32.totalorder %s38, %s39
    %p50 = scmp.eq.s32.totalorder %s16, 0
    %p51 = por %p49, %p50
    %p52 = scmp.ne.s32.totalorder %s38, %s39
    %p53 = scmp.eq.s32.totalorder %s17, 1
    %p54 = por %p52, %p53
    %p56 = scmp.ne.s32.totalorder %s39, %s55
    %p57 = scmp.eq.s32.totalorder %s17, 0
    %p58 = por %p56, %p57
    %s60 = sadd.s32 %s59, 1
    %p63 = scmp.eq.s32.totalorder %s11, 1
    %p64 = scmp.ne.s32.totalorder %s59, %s61
    %p65 = scmp.eq.s32.totalorder %s11, 0
    %p66 = por %p64, %p65
    %p67 = scmp.ne.s32.totalorder %s59, %s61
    %p68 = scmp.eq.s32.totalorder %s16, 1
    %p69 = por %p67, %p68
    %p70 = scmp.ne.s32.totalorder %s61, %s62
    %p71 = scmp.eq.s32.totalorder %s16, 0
    %p72 = por %p70, %p71
    %p73 = scmp.ne.s32.totalorder %s61, %s62
    %p74 = scmp.eq.s32.totalorder %s17, 1
    %p75 = por %p73, %p74
    %p77 = scmp.ne.s32.totalorder %s62, %s76
    %p78 = scmp.eq.s32.totalorder %s17, 0
    %p79 = por %p77, %p78
    %s81 = sadd.s32 %s80, 1
    %p84 = scmp.eq.s32.totalorder %s11, 1
    %p85 = scmp.ne.s32.totalorder %s80, %s82
    %p86 = scmp.eq.s32.totalorder %s11, 0
    %p87 = por %p85, %p86
    %p88 = scmp.ne.s32.totalorder %s80, %s82
    %p89 = scmp.eq.s32.totalorder %s16, 1
    %p90 = por %p88, %p89
    %p91 = scmp.ne.s32.totalorder %s82, %s83
    %p92 = scmp.eq.s32.totalorder %s16, 0
    %p93 = por %p91, %p92
    %p94 = scmp.ne.s32.totalorder %s82, %s83
    %p95 = scmp.eq.s32.totalorder %s17, 1
    %p96 = por %p94, %p95
    %p98 = scmp.ne.s32.totalorder %s83, %s97
    %p99 = scmp.eq.s32.totalorder %s17, 0
    %p100 = por %p98, %p99
    %s101 = ssub.s32 %s18, %s30
    %s102 = ssub.s32 %s19, %s26
    %s103 = sor.u32 %s101, %s102
    %p104 = scmp.eq.s32.totalorder %s103, 0
    %s106 = sadd.s32 %s105, 1
    %s107 = scalar_select %p104, %s105, %s106
    %p110 = pneg %p104
    %p111 = scmp.eq.s32.totalorder %s11, 1
    %p112 = por %p110, %p111
    %p113 = scmp.ne.s32.totalorder %s105, %s108
    %p114 = scmp.eq.s32.totalorder %s11, 0
    %p115 = por %p113, %p114
    %p116 = scmp.ne.s32.totalorder %s105, %s108
    %p117 = scmp.eq.s32.totalorder %s16, 1
    %p118 = por %p116, %p117
    %p119 = scmp.ne.s32.totalorder %s108, %s109
    %p120 = scmp.eq.s32.totalorder %s16, 0
    %p121 = por %p119, %p120
    %p122 = scmp.ne.s32.totalorder %s108, %s109
    %p123 = scmp.eq.s32.totalorder %s17, 1
    %p124 = por %p122, %p123
    %p126 = scmp.ne.s32.totalorder %s109, %s125
    %p127 = scmp.eq.s32.totalorder %s17, 0
    %p128 = por %p126, %p127
    %s129 = ssub.s32 %s18, %s30
    %s130 = ssub.s32 %s19, %s26
    %s131 = sor.u32 %s129, %s130
    %p132 = scmp.eq.s32.totalorder %s131, 0
    %s134 = sadd.s32 %s133, 1
    %s135 = scalar_select %p132, %s133, %s134
    %p138 = pneg %p132
    %p139 = scmp.eq.s32.totalorder %s11, 1
    %p140 = por %p138, %p139
    %p141 = scmp.ne.s32.totalorder %s133, %s136
    %p142 = scmp.eq.s32.totalorder %s11, 0
    %p143 = por %p141, %p142
    %p144 = scmp.ne.s32.totalorder %s133, %s136
    %p145 = scmp.eq.s32.totalorder %s16, 1
    %p146 = por %p144, %p145
    %p147 = scmp.ne.s32.totalorder %s136, %s137
    %p148 = scmp.eq.s32.totalorder %s16, 0
    %p149 = por %p147, %p148
    %p150 = scmp.ne.s32.totalorder %s136, %s137
    %p151 = scmp.eq.s32.totalorder %s17, 1
    %p152 = por %p150, %p151
    %p154 = scmp.ne.s32.totalorder %s137, %s153
    %p155 = scmp.eq.s32.totalorder %s17, 0
    %p156 = por %p154, %p155
    %p157 = scmp.le.s32.totalorder 1, %s11
    %p158 = scmp.lt.s32.totalorder %s11, 3
    %p159 = pnand %p157, %p158
    %p160 = pneg %p159
    // Predicated region
    $region9: #{nested_residual_unet_forward.14} parent=5 // pred_check
      _
    $region10: #{nested_residual_unet_forward.14} parent=5 // pred_check_branch
      %162 = sbr.rel (%p159) target = $region12
    $region11: #{nested_residual_unet_forward.14} parent=5 // pred_region
      %s163 = ssub.s32 %s11, 1
      // Predicated region
      $region13: #{nested_residual_unet_forward.14} parent=11 // pred_check
        %p164 = pneg %p72
      $region14: #{nested_residual_unet_forward.14} parent=11 // pred_check_branch
        %166 = sbr.rel (%p164) target = $region16
      $region15: #{nested_residual_unet_forward.14} parent=11 // pred_region
        _
      $region16: #{nested_residual_unet_forward.14} parent=11 // pred_fallthru
        _
      // Predicated region
      $region17: #{nested_residual_unet_forward.14} parent=11 // pred_check
        %p167 = pneg %p93
      $region18: #{nested_residual_unet_forward.14} parent=11 // pred_check_branch
        %169 = sbr.rel (%p167) target = $region20
      $region19: #{nested_residual_unet_forward.14} parent=11 // pred_region
        _
      $region20: #{nested_residual_unet_forward.14} parent=11 // pred_fallthru
        _
    $region12: #{nested_residual_unet_forward.14} parent=5 // pred_fallthru
      _
    %p170 = scmp.lt.s32.totalorder %s11, 2
    // Predicated region
    $region21: #{nested_residual_unet_forward.14} parent=5 // pred_check
      %p171 = pneg %p170
    $region22: #{nested_residual_unet_forward.14} parent=5 // pred_check_branch
      %173 = sbr.rel (%p171) target = $region24
    $region23: #{nested_residual_unet_forward.14} parent=5 // pred_region
      // Predicated region
      $region25: #{nested_residual_unet_forward.14} parent=23 // pred_check
        %p174 = pneg %p45
      $region26: #{nested_residual_unet_forward.14} parent=23 // pred_check_branch
        %176 = sbr.rel (%p174) target = $region28
      $region27: #{nested_residual_unet_forward.14} parent=23 // pred_region
        %s177 = smul.u32 4, %s19
        %p178 = scmp.lt.s32.totalorder %s18, 1
        %s179 = scalar_select %p178, %s18, 1
        %p180 = scmp.lt.s32.totalorder %s177, 3
        %s181 = scalar_select %p180, %s177, 3
        %s182 = smul.addr %s181, 3
        %s183 = smul.addr %s179, 12
        %s184 = sadd.s32 %s182, %s183
        %s185 = smul.addr %s184, 4
        %s186 = scalar_lea.vmem %s0, %s185
        %s187 = smul.u32 4, %s19
      $region28: #{nested_residual_unet_forward.14} parent=23 // pred_fallthru
        _
    $region24: #{nested_residual_unet_forward.14} parent=5 // pred_fallthru
      _
    %p188 = scmp.le.s32.totalorder 1, %s11
    %p189 = scmp.lt.s32.totalorder %s11, 3
    %p190 = pnand %p188, %p189
    %p191 = pneg %p190
    // Predicated region
    $region29: #{nested_residual_unet_forward.14} parent=5 // pred_check
      _
    $region30: #{nested_residual_unet_forward.14} parent=5 // pred_check_branch
      %193 = sbr.rel (%p190) target = $region32
    $region31: #{nested_residual_unet_forward.14} parent=5 // pred_region
      %s194 = ssub.s32 %s11, 1
      %s195 = smul.u32 4, %s21
      %p196 = scmp.lt.s32.totalorder %s20, 1
      %s197 = scalar_select %p196, %s20, 1
      %p198 = scmp.lt.s32.totalorder %s195, 3
      %s199 = scalar_select %p198, %s195, 3
      %s200 = smul.addr %s199, 3
      %s201 = smul.addr %s197, 12
      %s202 = sadd.s32 %s200, %s201
      %s203 = smul.addr %s202, 4
      %s204 = scalar_lea.vmem %s0, %s203
      %p205 = pneg %p51
      %p206 = pneg %p48
      %p207 = pneg %p72
      %p208 = pneg %p69
      %p209 = pneg %p93
      %p210 = pneg %p90
      %p211 = pneg %p121
      %p212 = pneg %p118
      %s213 = smul.u32 4, %s21
      %p214 = scmp.lt.s32.totalorder %s20, 1
      %s215 = scalar_select %p214, %s20, 1
      %p216 = scmp.lt.s32.totalorder %s213, 3
      %s217 = scalar_select %p216, %s213, 3
      %s218 = smul.addr %s215, 4
      %s219 = sadd.s32 %s217, %s218
      %s220 = smul.addr %s219, 4
      %s221 = scalar_lea.vmem %s3, %s220
      %p222 = pneg %p149
      %p223 = pneg %p146
      %p224 = scmp.lt.s32.totalorder %s20, 1
      %s225 = scalar_select %p224, %s20, 1
      %p226 = scmp.lt.s32.totalorder %s21, 0
      %s227 = scalar_select %p226, %s21, 0
      %s228 = sadd.s32 %s227, %s225
      %s229 = smul.addr %s228, 2
      %s230 = scalar_lea.vmem %s4, %s229
      %s231 = smul.u32 4, %s21
      %p232 = scmp.lt.s32.totalorder %s20, 1
      %s233 = scalar_select %p232, %s20, 1
      %p234 = scmp.lt.s32.totalorder %s231, 3
      %s235 = scalar_select %p234, %s231, 3
      %s236 = smul.addr %s235, 3
      %s237 = smul.addr %s233, 12
      %s238 = sadd.s32 %s236, %s237
      %s239 = smul.addr %s238, 4
      %s240 = scalar_lea.vmem %s0, %s239
      %s241 = smul.u32 4, %s21
      %s242 = smul.u32 4, %s21
      %p243 = scmp.lt.s32.totalorder %s20, 1
      %s244 = scalar_select %p243, %s20, 1
      %p245 = scmp.lt.s32.totalorder %s242, 3
      %s246 = scalar_select %p245, %s242, 3
      %s247 = smul.addr %s244, 4
      %s248 = sadd.s32 %s246, %s247
      %s249 = smul.addr %s248, 4
      %s250 = scalar_lea.vmem %s3, %s249
      %s251 = smul.u32 4, %s21
      %p252 = scmp.lt.s32.totalorder %s20, 1
      %s253 = scalar_select %p252, %s20, 1
      %p254 = scmp.lt.s32.totalorder %s21, 0
      %s255 = scalar_select %p254, %s21, 0
      %s256 = sadd.s32 %s255, %s253
      %s257 = smul.addr %s256, 2
      %s258 = scalar_lea.vmem %s4, %s257
      %v260 = vld [vmem:[%s240] sm:$0xff]
      %v261 = vld [vmem:[%s240 + $0x8] sm:$0xf]
      %v262 = vld [vmem:[%s240 + $0xc] sm:$0xff]
      %v263 = vld [vmem:[%s240 + $0x14] sm:$0xf]
      %v264 = vld [vmem:[%s240 + $0x18] sm:$0xff]
      %v265 = vld [vmem:[%s240 + $0x20] sm:$0xf]
      %v266 = vld [vmem:[%s240 + $0x24] sm:$0xff]
      %v267 = vld [vmem:[%s240 + $0x2c] sm:$0xf]
      %v268 = vld [vmem:[%s1] sm:$0xf]
      %v269 = vld [vmem:[%s1 + $0x4] sm:$0xf]
      %v270 = vld [vmem:[%s1 + $0x8] sm:$0xf]
      %v271 = vld [vmem:[%s1 + $0xc] sm:$0xf]
      %v272 = vld [vmem:[%s1 + $0x10] sm:$0xf]
      %v273 = vld [vmem:[%s1 + $0x14] sm:$0xf]
      %v274 = vld [vmem:[%s1 + $0x18] sm:$0xf]
      %v275 = vld [vmem:[%s1 + $0x1c] sm:$0xf]
      %v276 = vld [vmem:[%s1 + $0x20] sm:$0xf]
      %v277 = vld [vmem:[%s1 + $0x24] sm:$0xf]
      %v278 = vld [vmem:[%s1 + $0x28] sm:$0xf]
      %v279 = vld [vmem:[%s1 + $0x2c] sm:$0xf]
      %v280 = vld [vmem:[%s1 + $0x30] sm:$0xf]
      %v281 = vld [vmem:[%s1 + $0x34] sm:$0xf]
      %v282 = vld [vmem:[%s1 + $0x38] sm:$0xf]
      %v283 = vld [vmem:[%s1 + $0x3c] sm:$0xf]
      %v284 = vld [vmem:[%s1 + $0x40] sm:$0xf]
      %v285 = vld [vmem:[%s1 + $0x44] sm:$0xf]
      %v286 = vld [vmem:[%s1 + $0x48] sm:$0xf]
      %v287 = vld [vmem:[%s1 + $0x4c] sm:$0xf]
      %v288 = vld [vmem:[%s1 + $0x50] sm:$0xf]
      %v289 = vld [vmem:[%s1 + $0x54] sm:$0xf]
      %v290 = vld [vmem:[%s1 + $0x58] sm:$0xf]
      %v291 = vld [vmem:[%s1 + $0x5c] sm:$0xf]
      %v292 = vld [vmem:[%s1 + $0x60] sm:$0xf]
      %v293 = vld [vmem:[%s1 + $0x64] sm:$0xf]
      %v294 = vld [vmem:[%s1 + $0x68] sm:$0xf]
      %v295 = vld [vmem:[%s1 + $0x6c] sm:$0xf]
      %v296 = vld [vmem:[%s1 + $0x70] sm:$0xf]
      %v297 = vld [vmem:[%s1 + $0x74] sm:$0xf]
      %v298 = vld [vmem:[%s1 + $0x78] sm:$0xf]
      %v299 = vld [vmem:[%s1 + $0x7c] sm:$0xf]
      %v300 = vld [vmem:[%s1 + $0x80] sm:$0xf]
      %v301 = vld [vmem:[%s1 + $0x84] sm:$0xf]
      %v302 = vld [vmem:[%s1 + $0x88] sm:$0xf]
      %v303 = vld [vmem:[%s1 + $0x8c] sm:$0xf]
      %v304 = vld [vmem:[%s2] sm:$0x1]
      %v306 = vlaneseq
      %v307 = vshrl.u32 %v306, 7
      %v308 = vsub.s32 0, %v307
      %v309 = vrot.slane %v304, %v308
      %v319 = vunpack.c.l.b16 %v260
      %v320 = vunpack.c.h.b16 %v260
      %v321 = vunpack.c.l.b16 %v261
      %v322 = vunpack.c.l.b16 %v262
      %v323 = vunpack.c.h.b16 %v262
      %v324 = vunpack.c.l.b16 %v263
      %v325 = vunpack.c.l.b16 %v264
      %v326 = vunpack.c.h.b16 %v264
      %v327 = vunpack.c.l.b16 %v265
      %v328 = vunpack.c.l.b16 %v266
      %v329 = vunpack.c.h.b16 %v266
      %v330 = vunpack.c.l.b16 %v267
      %v331 = vpack.c.b16 %v322, %v319
      %v332 = vpack.c.b16 %v323, %v320
      %v333 = vpack.c.b16 %v324, %v321
      %v334 = vpack.c.b16 %v328, %v325
      %v335 = vpack.c.b16 %v329, %v326
      %v336 = vpack.c.b16 %v330, %v327
      %v377 = vunpack.c.l.b16 %v268
      %v378 = vunpack.c.l.b16 %v269
      %v379 = vunpack.c.l.b16 %v270
      %v380 = vunpack.c.l.b16 %v271
      %v381 = vunpack.c.l.b16 %v272
      %v382 = vunpack.c.l.b16 %v273
      %v383 = vunpack.c.l.b16 %v274
      %v384 = vunpack.c.l.b16 %v275
      %v385 = vunpack.c.l.b16 %v276
      %v386 = vunpack.c.l.b16 %v277
      %v387 = vunpack.c.l.b16 %v278
      %v388 = vunpack.c.l.b16 %v279
      %v389 = vunpack.c.l.b16 %v280
      %v390 = vunpack.c.l.b16 %v281
      %v391 = vunpack.c.l.b16 %v282
      %v392 = vunpack.c.l.b16 %v283
      %v393 = vunpack.c.l.b16 %v284
      %v394 = vunpack.c.l.b16 %v285
      %v395 = vunpack.c.l.b16 %v286
      %v396 = vunpack.c.l.b16 %v287
      %v397 = vunpack.c.l.b16 %v288
      %v398 = vunpack.c.l.b16 %v289
      %v399 = vunpack.c.l.b16 %v290
      %v400 = vunpack.c.l.b16 %v291
      %v401 = vunpack.c.l.b16 %v292
      %v402 = vunpack.c.l.b16 %v293
      %v403 = vunpack.c.l.b16 %v294
      %v404 = vunpack.c.l.b16 %v295
      %v405 = vunpack.c.l.b16 %v296
      %v406 = vunpack.c.l.b16 %v297
      %v407 = vunpack.c.l.b16 %v298
      %v408 = vunpack.c.l.b16 %v299
      %v409 = vunpack.c.l.b16 %v300
      %v410 = vunpack.c.l.b16 %v301
      %v411 = vunpack.c.l.b16 %v302
      %v412 = vunpack.c.l.b16 %v303
      %v413 = vpack.c.b16 %v378, %v377
      %v414 = vpack.c.b16 %v380, %v379
      %v415 = vpack.c.b16 %v382, %v381
      %v416 = vpack.c.b16 %v384, %v383
      %v417 = vpack.c.b16 %v386, %v385
      %v418 = vpack.c.b16 %v388, %v387
      %v419 = vpack.c.b16 %v390, %v389
      %v420 = vpack.c.b16 %v392, %v391
      %v421 = vpack.c.b16 %v394, %v393
      %v422 = vpack.c.b16 %v396, %v395
      %v423 = vpack.c.b16 %v398, %v397
      %v424 = vpack.c.b16 %v400, %v399
      %v425 = vpack.c.b16 %v402, %v401
      %v426 = vpack.c.b16 %v404, %v403
      %v427 = vpack.c.b16 %v406, %v405
      %v428 = vpack.c.b16 %v408, %v407
      %v429 = vpack.c.b16 %v410, %v409
      %v430 = vpack.c.b16 %v412, %v411
      %vm449 = vcmask 261120
      %v451 = vsel %vm449, %v333, 0
      %v454 = vsel %vm449, %v336, 0
      %456 = vmatprep.subr.bf16.mxu0 0
      %457 = vmatpush1.bf16.msra.mxu0 %v420
      %458 = vmatprep.subr.bf16.mxu0 0
      %459 = vmatpush1.bf16.msra.mxu0 %v419
      %460 = vmatprep.subr.bf16.mxu0 0
      %461 = vmatpush1.bf16.msra.mxu0 %v418
      %462 = vmatprep.subr.bf16.mxu0 0
      %463 = vmatpush1.bf16.msra.mxu0 %v417
      %464 = vmatprep.subr.bf16.mxu0 0
      %465 = vmatpush1.bf16.msra.mxu0 %v416
      %466 = vmatprep.subr.bf16.mxu0 0
      %467 = vmatpush1.bf16.msra.mxu0 %v415
      %468 = vmatprep.subr.bf16.mxu0 0
      %469 = vmatpush1.bf16.msra.mxu0 %v414
      %470 = vmatprep.subr.bf16.mxu0 0
      %471 = vmatpush1.bf16.msra.mxu0 %v413
      %472 = vmatprep.subr.bf16.mxu0 0
      %473 = vmatpush2.bf16.msra.mxu0 %v428
      %474 = vmatprep.subr.bf16.mxu0 0
      %475 = vmatpush2.bf16.msra.mxu0 %v427
      %476 = vmatprep.subr.bf16.mxu0 0
      %477 = vmatpush2.bf16.msra.mxu0 %v426
      %478 = vmatprep.subr.bf16.mxu0 0
      %479 = vmatpush2.bf16.msra.mxu0 %v425
      %480 = vmatprep.subr.bf16.mxu0 0
      %481 = vmatpush2.bf16.msra.mxu0 %v424
      %482 = vmatprep.subr.bf16.mxu0 0
      %483 = vmatpush2.bf16.msra.mxu0 %v423
      %484 = vmatprep.subr.bf16.mxu0 0
      %485 = vmatpush2.bf16.msra.mxu0 %v422
      %486 = vmatprep.subr.bf16.mxu0 0
      %487 = vmatpush2.bf16.msra.mxu0 %v421
      %488 = vmatprep.mubr.bf16.mxu0 %v332
      %489 = vmatmul.mubr.bf16.gmra.mxu0 %v331
      %v490 = vpop.f32.mrf.mxu0
      %v491 = vadd.f32 %v309, %v490
      %v492 = vpop.f32.mrf.mxu0
      %v493 = vpop.f32.mrf.mxu0
      %v494 = vadd.f32 %v309, %v493
      %v495 = vpop.f32.mrf.mxu0
      %496 = vmatprep.mubr.bf16.mxu0 %v335
      %497 = vmatmul.mubr.bf16.gmra.mxu0 %v334
      %v498 = vpop.f32.mrf.mxu0
      %v499 = vadd.f32 %v309, %v498
      %v500 = vpop.f32.mrf.mxu0
      %v501 = vpop.f32.mrf.mxu0
      %v502 = vadd.f32 %v309, %v501
      %v503 = vpop.f32.mrf.mxu0
      %504 = vdwg.mxu0
      %505 = vmatprep.subr.bf16.mxu0 0
      %506 = vmatpush1.bf16.msra.mxu0 0
      %507 = vmatprep.subr.bf16.mxu0 0
      %508 = vmatpush1.bf16.msra.mxu0 0
      %509 = vmatprep.subr.bf16.mxu0 0
      %510 = vmatpush1.bf16.msra.mxu0 0
      %511 = vmatprep.subr.bf16.mxu0 0
      %512 = vmatpush1.bf16.msra.mxu0 0
      %513 = vmatprep.subr.bf16.mxu0 0
      %514 = vmatpush1.bf16.msra.mxu0 0
      %515 = vmatprep.subr.bf16.mxu0 0
      %516 = vmatpush1.bf16.msra.mxu0 0
      %517 = vmatprep.subr.bf16.mxu0 0
      %518 = vmatpush1.bf16.msra.mxu0 %v430
      %519 = vmatprep.subr.bf16.mxu0 0
      %520 = vmatpush1.bf16.msra.mxu0 %v429
      %521 = vmatprep.subr.bf16.mxu0 0
      %522 = vmatpush2.bf16.msra.mxu0 0
      %523 = vmatprep.subr.bf16.mxu0 0
      %524 = vmatpush2.bf16.msra.mxu0 0
      %525 = vmatprep.subr.bf16.mxu0 0
      %526 = vmatpush2.bf16.msra.mxu0 0
      %527 = vmatprep.subr.bf16.mxu0 0
      %528 = vmatpush2.bf16.msra.mxu0 0
      %529 = vmatprep.subr.bf16.mxu0 0
      %530 = vmatpush2.bf16.msra.mxu0 0
      %531 = vmatprep.subr.bf16.mxu0 0
      %532 = vmatpush2.bf16.msra.mxu0 0
      %533 = vmatprep.subr.bf16.mxu0 0
      %534 = vmatpush2.bf16.msra.mxu0 0
      %535 = vmatprep.subr.bf16.mxu0 0
      %536 = vmatpush2.bf16.msra.mxu0 0
      %537 = vmatprep.mubr.bf16.mxu0 0
      %538 = vmatmul.mubr.bf16.gmra.mxu0 %v451
      %v539 = vpop.f32.mrf.mxu0
      %v540 = vadd.f32 %v491, %v539
      %v541 = vpop.f32.mrf.mxu0
      %v542 = vpop.f32.mrf.mxu0
      %v543 = vadd.f32 %v494, %v542
      %v544 = vpop.f32.mrf.mxu0
      %545 = vmatprep.mubr.bf16.mxu0 0
      %546 = vmatmul.mubr.bf16.gmra.mxu0 %v454
      %v547 = vpop.f32.mrf.mxu0
      %v548 = vadd.f32 %v499, %v547
      %v549 = vpop.f32.mrf.mxu0
      %v550 = vpop.f32.mrf.mxu0
      %v551 = vadd.f32 %v502, %v550
      %v552 = vpop.f32.mrf.mxu0
      %553 = vdwg.mxu0
      %v554 = vpack.c.bf16 %v543, %v540
      %v555 = vpack.c.bf16 %v551, %v548
      %v558 = vunpack.c.l.b16 %v554
      %v559 = vunpack.c.h.b16 %v554
      %v560 = vunpack.c.l.b16 %v555
      %v561 = vunpack.c.h.b16 %v555
      %v562 = vpack.c.b16 %v558, %v558
      %v563 = vpack.c.b16 %v559, %v559
      %v564 = vpack.c.b16 %v560, %v560
      %v565 = vpack.c.b16 %v561, %v561
      %vm570 = vcmask 257024
      %571 = vst.msk [vmem:[%s250] sm:$0xf] %vm570, %v562
      %572 = vst.msk [vmem:[%s250 + $0x4] sm:$0xf] %vm570, %v563
      %573 = vst.msk [vmem:[%s250 + $0x8] sm:$0xf] %vm570, %v564
      %574 = vst.msk [vmem:[%s250 + $0xc] sm:$0xf] %vm570, %v565
      %v575 = vsel %vm449, %v540, 0.0
      %v576 = vsel %vm449, %v543, 0.0
      %v577 = vadd.f32 %v575, %v576
      %v578 = vsel %vm449, %v548, 0.0
      %v579 = vadd.f32 %v577, %v578
      %v580 = vsel %vm449, %v551, 0.0
      %v581 = vadd.f32 %v579, %v580
      %v582 = vrot.slane %v581, 4
      %v583 = vadd.f32 %v581, %v582
      %v584 = vrot.slane %v583, 2
      %v585 = vadd.f32 %v583, %v584
      %v586 = vrot.slane %v585, 1
      %v587 = vadd.f32 %v585, %v586
      %vm588 = vcmask 253952
      %589 = vst.msk [vmem:[%s258] sm:$0x1] %vm588, %v587
      %v590 = vmul.f32 %v540, %v540
      %v591 = vmul.f32 %v543, %v543
      %v592 = vmul.f32 %v548, %v548
      %v593 = vmul.f32 %v551, %v551
      %v594 = vsel %vm449, %v590, 0.0
      %v595 = vsel %vm449, %v591, 0.0
      %v596 = vadd.f32 %v594, %v595
      %v597 = vsel %vm449, %v592, 0.0
      %v598 = vadd.f32 %v596, %v597
      %v599 = vsel %vm449, %v593, 0.0
      %v600 = vadd.f32 %v598, %v599
      %v601 = vrot.slane %v600, 4
      %v602 = vadd.f32 %v600, %v601
      %v603 = vrot.slane %v602, 2
      %v604 = vadd.f32 %v602, %v603
      %v605 = vrot.slane %v604, 1
      %v606 = vadd.f32 %v604, %v605
      %607 = vst.msk [vmem:[%s258 + $0x1] sm:$0x1] %vm588, %v606
      %s608 = smul.u32 4, %s21
      %p609 = scmp.lt.s32.totalorder %s20, 1
      %s610 = scalar_select %p609, %s20, 1
      %p611 = scmp.lt.s32.totalorder %s608, 3
      %s612 = scalar_select %p611, %s608, 3
      %s613 = smul.addr %s610, 4
      %s614 = sadd.s32 %s612, %s613
      %s615 = smul.addr %s614, 4
      %s616 = scalar_lea.vmem %s3, %s615
      %p617 = scmp.lt.s32.totalorder %s20, 1
      %s618 = scalar_select %p617, %s20, 1
      %p619 = scmp.lt.s32.totalorder %s21, 0
      %s620 = scalar_select %p619, %s21, 0
      %s621 = sadd.s32 %s620, %s618
      %s622 = smul.addr %s621, 2
      %s623 = scalar_lea.vmem %s4, %s622
      // Predicated region
      $region33: #{nested_residual_unet_forward.14} parent=31 // pred_check
        %p624 = pneg %p118
      $region34: #{nested_residual_unet_forward.14} parent=31 // pred_check_branch
        %626 = sbr.rel (%p624) target = $region36
      $region35: #{nested_residual_unet_forward.14} parent=31 // pred_region
        %s627 = smul.u32 4, %s21
      $region36: #{nested_residual_unet_forward.14} parent=31 // pred_fallthru
        _
      // Predicated region
      $region37: #{nested_residual_unet_forward.14} parent=31 // pred_check
        %p628 = pneg %p146
      $region38: #{nested_residual_unet_forward.14} parent=31 // pred_check_branch
        %630 = sbr.rel (%p628) target = $region40
      $region39: #{nested_residual_unet_forward.14} parent=31 // pred_region
        _
      $region40: #{nested_residual_unet_forward.14} parent=31 // pred_fallthru
        _
    $region32: #{nested_residual_unet_forward.14} parent=5 // pred_fallthru
      _
    %p631 = scmp.le.s32.totalorder 2, %s11
    // Predicated region
    $region41: #{nested_residual_unet_forward.14} parent=5 // pred_check
      %p632 = pneg %p631
    $region42: #{nested_residual_unet_forward.14} parent=5 // pred_check_branch
      %634 = sbr.rel (%p632) target = $region44
    $region43: #{nested_residual_unet_forward.14} parent=5 // pred_region
      %s635 = ssub.s32 %s11, 2
      // Predicated region
      $region45: #{nested_residual_unet_forward.14} parent=43 // pred_check
        %p636 = pneg %p124
      $region46: #{nested_residual_unet_forward.14} parent=43 // pred_check_branch
        %638 = sbr.rel (%p636) target = $region48
      $region47: #{nested_residual_unet_forward.14} parent=43 // pred_region
        %s639 = smul.u32 4, %s23
        %p640 = scmp.lt.s32.totalorder %s22, 1
        %s641 = scalar_select %p640, %s22, 1
        %p642 = scmp.lt.s32.totalorder %s639, 3
        %s643 = scalar_select %p642, %s639, 3
        %s644 = smul.addr %s641, 4
        %s645 = sadd.s32 %s643, %s644
        %s646 = smul.addr %s645, 4
        %s647 = scalar_lea.vmem %s3, %s646
      $region48: #{nested_residual_unet_forward.14} parent=43 // pred_fallthru
        _
      // Predicated region
      $region49: #{nested_residual_unet_forward.14} parent=43 // pred_check
        %p648 = pneg %p152
      $region50: #{nested_residual_unet_forward.14} parent=43 // pred_check_branch
        %650 = sbr.rel (%p648) target = $region52
      $region51: #{nested_residual_unet_forward.14} parent=43 // pred_region
        %p651 = scmp.lt.s32.totalorder %s22, 1
        %s652 = scalar_select %p651, %s22, 1
        %p653 = scmp.lt.s32.totalorder %s23, 0
        %s654 = scalar_select %p653, %s23, 0
        %s655 = sadd.s32 %s654, %s652
        %s656 = smul.addr %s655, 2
        %s657 = scalar_lea.vmem %s4, %s656
      $region52: #{nested_residual_unet_forward.14} parent=43 // pred_fallthru
        _
    $region44: #{nested_residual_unet_forward.14} parent=5 // pred_fallthru
      _
  $region6: #{nested_residual_unet_forward.14} parent=0 // loop_footer
    %s15 = sadd.s32 1, %s11
  $region7: #{nested_residual_unet_forward.14} parent=0 // loop_footer_branch
    %10 = sbr.rel target = $region3
  $region8: #{nested_residual_unet_forward.14} parent=0 // loop_exit
    _

// kernel: nested_residual_unet_forward.16
$region0: #{nested_residual_unet_forward.16}
  #allocation0 [shape = 'u32[]', space=smem, size = 0x4, offset = 0x4, fixed_abs, tag = 'smem constant byte address 0x4 - core index']
  #allocation1 [shape = 'u32[144,128]{1,0:T(1,128)}', space=vmem, size = 0x12000, scoped, tag = 'internal scratch']
  %s0 = inlined_call_operand.vmem [shape: bf16[2,32,32], index: 0, kind: input, shape index: {}]
  %s1 = inlined_call_operand.vmem [shape: bf16[2,32,32], index: 1, kind: input, shape index: {}]
  %s2 = inlined_call_operand.vmem [shape: bf16[32,128], index: 2, kind: input, shape index: {}]
  %s3 = inlined_call_operand.vmem [shape: bf16[32,128], index: 3, kind: input, shape index: {}]
  %s4 = inlined_call_operand.vmem [shape: f32[1,128], index: 4, kind: input, shape index: {}]
  %s5 = inlined_call_operand.vmem [shape: bf16[2,32,128], index: 5, kind: output, shape index: {0}]
  %s6 = inlined_call_operand.vmem [shape: f32[2,1,2,128], index: 6, kind: output, shape index: {1}]
  %7 = xla_tuple %s5, %s6
  %s8 = sld [smem:[#allocation0]]
  $region61: #{nested_residual_unet_forward.16} parent=0
    _
  %s10 = ssub.s32 1, %s8
  %s11 = scalar_select 0, %s10, %s8
  loop: start=0, step=1, limit=4
  $region2: #{nested_residual_unet_forward.16} parent=0 // loop_pre_header
    _
  $region3: #{nested_residual_unet_forward.16} parent=0 // loop_header
    %s13 = sphi 0, %s17
    %p14 = scmp.ge.s32.totalorder %s13, 4
    %s20 = sphi 0, %s32
    %s21 = sphi 0, %s28
    %s22 = sphi 0, %s20
    %s23 = sphi 0, %s21
    %s24 = sphi 0, %s22
    %s25 = sphi 0, %s23
    %s37 = sphi 0, %s39
    %s40 = sphi 0, %s37
    %s41 = sphi 0, %s40
    %s57 = sphi 0, %s41
    %s65 = sphi 0, %s67
    %s68 = sphi 0, %s65
    %s69 = sphi 0, %s68
    %s85 = sphi 0, %s69
    %s89 = sphi 0, %s89
    %s91 = sphi 0, %s89
    %s92 = sphi 0, %s91
    %s106 = sphi 0, %s92
    %s110 = sphi 0, %s110
    %s112 = sphi 0, %s110
    %s113 = sphi 0, %s112
    %s127 = sphi 0, %s113
    %s131 = sphi 0, %s131
    %s133 = sphi 0, %s131
    %s134 = sphi 0, %s133
    %s148 = sphi 0, %s134
    %s156 = sphi 0, %s158
    %s159 = sphi 0, %s156
    %s160 = sphi 0, %s159
    %s176 = sphi 0, %s160
    %s184 = sphi 0, %s186
    %s187 = sphi 0, %s184
    %s188 = sphi 0, %s187
    %s204 = sphi 0, %s188
  $region4: #{nested_residual_unet_forward.16} parent=0 // loop_header_branch
    %16 = sbr.rel (%p14) target = $region8
  $region5: #{nested_residual_unet_forward.16} parent=0 // loop_body
    %s18 = ssub.s32 %s13, 1
    %s19 = ssub.s32 %s13, 2
    %s26 = sadd.s32 1, %s21
    %p27 = scmp.ge.s32.totalorder %s26, 1
    %s28 = scalar_select %p27, 0, %s26
    %s29 = sadd.s32 1, %s20
    %s30 = scalar_select %p27, %s29, %s20
    %p31 = scmp.ge.s32.totalorder %s30, 2
    %s32 = scalar_select %p31, 0, %s30
    %s33 = ssub.s32 %s20, %s32
    %s34 = ssub.s32 %s21, %s28
    %s35 = sor.u32 %s33, %s34
    %p36 = scmp.eq.s32.totalorder %s35, 0
    %s38 = sadd.s32 %s37, 1
    %s39 = scalar_select %p36, %s37, %s38
    %p42 = pneg %p36
    %p43 = scmp.eq.s32.totalorder %s13, 1
    %p44 = por %p42, %p43
    %p45 = scmp.ne.s32.totalorder %s37, %s40
    %p46 = scmp.eq.s32.totalorder %s13, 0
    %p47 = por %p45, %p46
    %p48 = scmp.ne.s32.totalorder %s37, %s40
    %p49 = scmp.eq.s32.totalorder %s18, 1
    %p50 = por %p48, %p49
    %p51 = scmp.ne.s32.totalorder %s40, %s41
    %p52 = scmp.eq.s32.totalorder %s18, 0
    %p53 = por %p51, %p52
    %p54 = scmp.ne.s32.totalorder %s40, %s41
    %p55 = scmp.eq.s32.totalorder %s19, 1
    %p56 = por %p54, %p55
    %p58 = scmp.ne.s32.totalorder %s41, %s57
    %p59 = scmp.eq.s32.totalorder %s19, 0
    %p60 = por %p58, %p59
    %s61 = ssub.s32 %s20, %s32
    %s62 = ssub.s32 %s21, %s28
    %s63 = sor.u32 %s61, %s62
    %p64 = scmp.eq.s32.totalorder %s63, 0
    %s66 = sadd.s32 %s65, 1
    %s67 = scalar_select %p64, %s65, %s66
    %p70 = pneg %p64
    %p71 = scmp.eq.s32.totalorder %s13, 1
    %p72 = por %p70, %p71
    %p73 = scmp.ne.s32.totalorder %s65, %s68
    %p74 = scmp.eq.s32.totalorder %s13, 0
    %p75 = por %p73, %p74
    %p76 = scmp.ne.s32.totalorder %s65, %s68
    %p77 = scmp.eq.s32.totalorder %s18, 1
    %p78 = por %p76, %p77
    %p79 = scmp.ne.s32.totalorder %s68, %s69
    %p80 = scmp.eq.s32.totalorder %s18, 0
    %p81 = por %p79, %p80
    %p82 = scmp.ne.s32.totalorder %s68, %s69
    %p83 = scmp.eq.s32.totalorder %s19, 1
    %p84 = por %p82, %p83
    %p86 = scmp.ne.s32.totalorder %s69, %s85
    %p87 = scmp.eq.s32.totalorder %s19, 0
    %p88 = por %p86, %p87
    %s90 = sadd.s32 %s89, 1
    %p93 = scmp.eq.s32.totalorder %s13, 1
    %p94 = scmp.ne.s32.totalorder %s89, %s91
    %p95 = scmp.eq.s32.totalorder %s13, 0
    %p96 = por %p94, %p95
    %p97 = scmp.ne.s32.totalorder %s89, %s91
    %p98 = scmp.eq.s32.totalorder %s18, 1
    %p99 = por %p97, %p98
    %p100 = scmp.ne.s32.totalorder %s91, %s92
    %p101 = scmp.eq.s32.totalorder %s18, 0
    %p102 = por %p100, %p101
    %p103 = scmp.ne.s32.totalorder %s91, %s92
    %p104 = scmp.eq.s32.totalorder %s19, 1
    %p105 = por %p103, %p104
    %p107 = scmp.ne.s32.totalorder %s92, %s106
    %p108 = scmp.eq.s32.totalorder %s19, 0
    %p109 = por %p107, %p108
    %s111 = sadd.s32 %s110, 1
    %p114 = scmp.eq.s32.totalorder %s13, 1
    %p115 = scmp.ne.s32.totalorder %s110, %s112
    %p116 = scmp.eq.s32.totalorder %s13, 0
    %p117 = por %p115, %p116
    %p118 = scmp.ne.s32.totalorder %s110, %s112
    %p119 = scmp.eq.s32.totalorder %s18, 1
    %p120 = por %p118, %p119
    %p121 = scmp.ne.s32.totalorder %s112, %s113
    %p122 = scmp.eq.s32.totalorder %s18, 0
    %p123 = por %p121, %p122
    %p124 = scmp.ne.s32.totalorder %s112, %s113
    %p125 = scmp.eq.s32.totalorder %s19, 1
    %p126 = por %p124, %p125
    %p128 = scmp.ne.s32.totalorder %s113, %s127
    %p129 = scmp.eq.s32.totalorder %s19, 0
    %p130 = por %p128, %p129
    %s132 = sadd.s32 %s131, 1
    %p135 = scmp.eq.s32.totalorder %s13, 1
    %p136 = scmp.ne.s32.totalorder %s131, %s133
    %p137 = scmp.eq.s32.totalorder %s13, 0
    %p138 = por %p136, %p137
    %p139 = scmp.ne.s32.totalorder %s131, %s133
    %p140 = scmp.eq.s32.totalorder %s18, 1
    %p141 = por %p139, %p140
    %p142 = scmp.ne.s32.totalorder %s133, %s134
    %p143 = scmp.eq.s32.totalorder %s18, 0
    %p144 = por %p142, %p143
    %p145 = scmp.ne.s32.totalorder %s133, %s134
    %p146 = scmp.eq.s32.totalorder %s19, 1
    %p147 = por %p145, %p146
    %p149 = scmp.ne.s32.totalorder %s134, %s148
    %p150 = scmp.eq.s32.totalorder %s19, 0
    %p151 = por %p149, %p150
    %s152 = ssub.s32 %s20, %s32
    %s153 = ssub.s32 %s21, %s28
    %s154 = sor.u32 %s152, %s153
    %p155 = scmp.eq.s32.totalorder %s154, 0
    %s157 = sadd.s32 %s156, 1
    %s158 = scalar_select %p155, %s156, %s157
    %p161 = pneg %p155
    %p162 = scmp.eq.s32.totalorder %s13, 1
    %p163 = por %p161, %p162
    %p164 = scmp.ne.s32.totalorder %s156, %s159
    %p165 = scmp.eq.s32.totalorder %s13, 0
    %p166 = por %p164, %p165
    %p167 = scmp.ne.s32.totalorder %s156, %s159
    %p168 = scmp.eq.s32.totalorder %s18, 1
    %p169 = por %p167, %p168
    %p170 = scmp.ne.s32.totalorder %s159, %s160
    %p171 = scmp.eq.s32.totalorder %s18, 0
    %p172 = por %p170, %p171
    %p173 = scmp.ne.s32.totalorder %s159, %s160
    %p174 = scmp.eq.s32.totalorder %s19, 1
    %p175 = por %p173, %p174
    %p177 = scmp.ne.s32.totalorder %s160, %s176
    %p178 = scmp.eq.s32.totalorder %s19, 0
    %p179 = por %p177, %p178
    %s180 = ssub.s32 %s20, %s32
    %s181 = ssub.s32 %s21, %s28
    %s182 = sor.u32 %s180, %s181
    %p183 = scmp.eq.s32.totalorder %s182, 0
    %s185 = sadd.s32 %s184, 1
    %s186 = scalar_select %p183, %s184, %s185
    %p189 = pneg %p183
    %p190 = scmp.eq.s32.totalorder %s13, 1
    %p191 = por %p189, %p190
    %p192 = scmp.ne.s32.totalorder %s184, %s187
    %p193 = scmp.eq.s32.totalorder %s13, 0
    %p194 = por %p192, %p193
    %p195 = scmp.ne.s32.totalorder %s184, %s187
    %p196 = scmp.eq.s32.totalorder %s18, 1
    %p197 = por %p195, %p196
    %p198 = scmp.ne.s32.totalorder %s187, %s188
    %p199 = scmp.eq.s32.totalorder %s18, 0
    %p200 = por %p198, %p199
    %p201 = scmp.ne.s32.totalorder %s187, %s188
    %p202 = scmp.eq.s32.totalorder %s19, 1
    %p203 = por %p201, %p202
    %p205 = scmp.ne.s32.totalorder %s188, %s204
    %p206 = scmp.eq.s32.totalorder %s19, 0
    %p207 = por %p205, %p206
    %p208 = scmp.le.s32.totalorder 1, %s13
    %p209 = scmp.lt.s32.totalorder %s13, 3
    %p210 = pnand %p208, %p209
    %p211 = pneg %p210
    // Predicated region
    $region9: #{nested_residual_unet_forward.16} parent=5 // pred_check
      _
    $region10: #{nested_residual_unet_forward.16} parent=5 // pred_check_branch
      %213 = sbr.rel (%p210) target = $region12
    $region11: #{nested_residual_unet_forward.16} parent=5 // pred_region
      %s214 = ssub.s32 %s13, 1
      // Predicated region
      $region13: #{nested_residual_unet_forward.16} parent=11 // pred_check
        %p215 = pneg %p102
      $region14: #{nested_residual_unet_forward.16} parent=11 // pred_check_branch
        %217 = sbr.rel (%p215) target = $region16
      $region15: #{nested_residual_unet_forward.16} parent=11 // pred_region
        _
      $region16: #{nested_residual_unet_forward.16} parent=11 // pred_fallthru
        _
      // Predicated region
      $region17: #{nested_residual_unet_forward.16} parent=11 // pred_check
        %p218 = pneg %p123
      $region18: #{nested_residual_unet_forward.16} parent=11 // pred_check_branch
        %220 = sbr.rel (%p218) target = $region20
      $region19: #{nested_residual_unet_forward.16} parent=11 // pred_region
        _
      $region20: #{nested_residual_unet_forward.16} parent=11 // pred_fallthru
        _
      // Predicated region
      $region21: #{nested_residual_unet_forward.16} parent=11 // pred_check
        %p221 = pneg %p144
      $region22: #{nested_residual_unet_forward.16} parent=11 // pred_check_branch
        %223 = sbr.rel (%p221) target = $region24
      $region23: #{nested_residual_unet_forward.16} parent=11 // pred_region
        _
      $region24: #{nested_residual_unet_forward.16} parent=11 // pred_fallthru
        _
    $region12: #{nested_residual_unet_forward.16} parent=5 // pred_fallthru
      _
    %p224 = scmp.lt.s32.totalorder %s13, 2
    // Predicated region
    $region25: #{nested_residual_unet_forward.16} parent=5 // pred_check
      %p225 = pneg %p224
    $region26: #{nested_residual_unet_forward.16} parent=5 // pred_check_branch
      %227 = sbr.rel (%p225) target = $region28
    $region27: #{nested_residual_unet_forward.16} parent=5 // pred_region
      // Predicated region
      $region29: #{nested_residual_unet_forward.16} parent=27 // pred_check
        %p228 = pneg %p47
      $region30: #{nested_residual_unet_forward.16} parent=27 // pred_check_branch
        %230 = sbr.rel (%p228) target = $region32
      $region31: #{nested_residual_unet_forward.16} parent=27 // pred_region
        %s231 = smul.u32 4, %s21
        %p232 = scmp.lt.s32.totalorder %s20, 1
        %s233 = scalar_select %p232, %s20, 1
        %p234 = scmp.lt.s32.totalorder %s231, 3
        %s235 = scalar_select %p234, %s231, 3
        %s236 = smul.addr %s233, 4
        %s237 = sadd.s32 %s235, %s236
        %s238 = smul.addr %s237, 4
        %s239 = scalar_lea.vmem %s0, %s238
        %s240 = smul.u32 4, %s21
      $region32: #{nested_residual_unet_forward.16} parent=27 // pred_fallthru
        _
      // Predicated region
      $region33: #{nested_residual_unet_forward.16} parent=27 // pred_check
        %p241 = pneg %p75
      $region34: #{nested_residual_unet_forward.16} parent=27 // pred_check_branch
        %243 = sbr.rel (%p241) target = $region36
      $region35: #{nested_residual_unet_forward.16} parent=27 // pred_region
        %s244 = smul.u32 4, %s21
        %p245 = scmp.lt.s32.totalorder %s20, 1
        %s246 = scalar_select %p245, %s20, 1
        %p247 = scmp.lt.s32.totalorder %s244, 3
        %s248 = scalar_select %p247, %s244, 3
        %s249 = smul.addr %s246, 4
        %s250 = sadd.s32 %s248, %s249
        %s251 = smul.addr %s250, 4
        %s252 = scalar_lea.vmem %s1, %s251
        %s253 = smul.u32 4, %s21
      $region36: #{nested_residual_unet_forward.16} parent=27 // pred_fallthru
        _
    $region28: #{nested_residual_unet_forward.16} parent=5 // pred_fallthru
      _
    %p254 = scmp.le.s32.totalorder 1, %s13
    %p255 = scmp.lt.s32.totalorder %s13, 3
    %p256 = pnand %p254, %p255
    %p257 = pneg %p256
    // Predicated region
    $region37: #{nested_residual_unet_forward.16} parent=5 // pred_check
      _
    $region38: #{nested_residual_unet_forward.16} parent=5 // pred_check_branch
      %259 = sbr.rel (%p256) target = $region40
    $region39: #{nested_residual_unet_forward.16} parent=5 // pred_region
      %s260 = ssub.s32 %s13, 1
      %s261 = smul.u32 4, %s23
      %p262 = scmp.lt.s32.totalorder %s22, 1
      %s263 = scalar_select %p262, %s22, 1
      %p264 = scmp.lt.s32.totalorder %s261, 3
      %s265 = scalar_select %p264, %s261, 3
      %s266 = smul.addr %s263, 4
      %s267 = sadd.s32 %s265, %s266
      %s268 = smul.addr %s267, 4
      %s269 = scalar_lea.vmem %s0, %s268
      %p270 = pneg %p53
      %p271 = pneg %p50
      %s272 = smul.u32 4, %s23
      %p273 = scmp.lt.s32.totalorder %s22, 1
      %s274 = scalar_select %p273, %s22, 1
      %p275 = scmp.lt.s32.totalorder %s272, 3
      %s276 = scalar_select %p275, %s272, 3
      %s277 = smul.addr %s274, 4
      %s278 = sadd.s32 %s276, %s277
      %s279 = smul.addr %s278, 4
      %s280 = scalar_lea.vmem %s1, %s279
      %p281 = pneg %p81
      %p282 = pneg %p78
      %p283 = pneg %p102
      %p284 = pneg %p99
      %p285 = pneg %p123
      %p286 = pneg %p120
      %p287 = pneg %p144
      %p288 = pneg %p141
      %p289 = pneg %p172
      %p290 = pneg %p169
      %s291 = smul.u32 4, %s23
      %p292 = scmp.lt.s32.totalorder %s22, 1
      %s293 = scalar_select %p292, %s22, 1
      %p294 = scmp.lt.s32.totalorder %s291, 3
      %s295 = scalar_select %p294, %s291, 3
      %s296 = smul.addr %s293, 4
      %s297 = sadd.s32 %s295, %s296
      %s298 = smul.addr %s297, 4
      %s299 = scalar_lea.vmem %s5, %s298
      %p300 = pneg %p200
      %p301 = pneg %p197
      %p302 = scmp.lt.s32.totalorder %s22, 1
      %s303 = scalar_select %p302, %s22, 1
      %p304 = scmp.lt.s32.totalorder %s23, 0
      %s305 = scalar_select %p304, %s23, 0
      %s306 = sadd.s32 %s305, %s303
      %s307 = smul.addr %s306, 2
      %s308 = scalar_lea.vmem %s6, %s307
      %s309 = smul.u32 4, %s23
      %p310 = scmp.lt.s32.totalorder %s22, 1
      %s311 = scalar_select %p310, %s22, 1
      %p312 = scmp.lt.s32.totalorder %s309, 3
      %s313 = scalar_select %p312, %s309, 3
      %s314 = smul.addr %s311, 4
      %s315 = sadd.s32 %s313, %s314
      %s316 = smul.addr %s315, 4
      %s317 = scalar_lea.vmem %s0, %s316
      %s318 = smul.u32 4, %s23
      %s319 = smul.u32 4, %s23
      %p320 = scmp.lt.s32.totalorder %s22, 1
      %s321 = scalar_select %p320, %s22, 1
      %p322 = scmp.lt.s32.totalorder %s319, 3
      %s323 = scalar_select %p322, %s319, 3
      %s324 = smul.addr %s321, 4
      %s325 = sadd.s32 %s323, %s324
      %s326 = smul.addr %s325, 4
      %s327 = scalar_lea.vmem %s1, %s326
      %s328 = smul.u32 4, %s23
      %s329 = smul.u32 4, %s23
      %p330 = scmp.lt.s32.totalorder %s22, 1
      %s331 = scalar_select %p330, %s22, 1
      %p332 = scmp.lt.s32.totalorder %s329, 3
      %s333 = scalar_select %p332, %s329, 3
      %s334 = smul.addr %s331, 4
      %s335 = sadd.s32 %s333, %s334
      %s336 = smul.addr %s335, 4
      %s337 = scalar_lea.vmem %s5, %s336
      %s338 = smul.u32 4, %s23
      %p339 = scmp.lt.s32.totalorder %s22, 1
      %s340 = scalar_select %p339, %s22, 1
      %p341 = scmp.lt.s32.totalorder %s23, 0
      %s342 = scalar_select %p341, %s23, 0
      %s343 = sadd.s32 %s342, %s340
      %s344 = smul.addr %s343, 2
      %s345 = scalar_lea.vmem %s6, %s344
      %v347 = vld [vmem:[%s317] sm:$0xf]
      %v348 = vld [vmem:[%s317 + $0x4] sm:$0xf]
      %v349 = vld [vmem:[%s317 + $0x8] sm:$0xf]
      %v350 = vld [vmem:[%s317 + $0xc] sm:$0xf]
      %v351 = vld [vmem:[%s2] sm:$0xf]
      %v352 = vld [vmem:[%s2 + $0x4] sm:$0xf]
      %v353 = vld [vmem:[%s2 + $0x8] sm:$0xf]
      %v354 = vld [vmem:[%s2 + $0xc] sm:$0xf]
      %v355 = vld [vmem:[%s327] sm:$0xf]
      %v356 = vld [vmem:[%s327 + $0x4] sm:$0xf]
      %v357 = vld [vmem:[%s327 + $0x8] sm:$0xf]
      %v358 = vld [vmem:[%s327 + $0xc] sm:$0xf]
      %v359 = vld [vmem:[%s3] sm:$0xf]
      %v360 = vld [vmem:[%s3 + $0x4] sm:$0xf]
      %v361 = vld [vmem:[%s3 + $0x8] sm:$0xf]
      %v362 = vld [vmem:[%s3 + $0xc] sm:$0xf]
      %v367 = vunpack.c.l.b16 %v355
      %v368 = vunpack.c.l.b16 %v356
      %v369 = vunpack.c.l.b16 %v357
      %v370 = vunpack.c.l.b16 %v358
      %v371 = vpack.c.b16 %v368, %v367
      %v372 = vpack.c.b16 %v370, %v369
      %v377 = vunpack.c.l.b16 %v359
      %v378 = vunpack.c.l.b16 %v360
      %v379 = vunpack.c.l.b16 %v361
      %v380 = vunpack.c.l.b16 %v362
      %v381 = vpack.c.b16 %v378, %v377
      %v382 = vpack.c.b16 %v380, %v379
      %vm385 = vcmask 261120
      %v387 = vsel %vm385, %v371, 0
      %v390 = vsel %vm385, %v372, 0
      %392 = vmatprep.subr.bf16.mxu0 0
      %393 = vmatpush1.bf16.msra.mxu0 0
      %394 = vmatprep.subr.bf16.mxu0 0
      %395 = vmatpush1.bf16.msra.mxu0 0
      %396 = vmatprep.subr.bf16.mxu0 0
      %397 = vmatpush1.bf16.msra.mxu0 0
      %398 = vmatprep.subr.bf16.mxu0 0
      %399 = vmatpush1.bf16.msra.mxu0 0
      %400 = vmatprep.subr.bf16.mxu0 0
      %401 = vmatpush1.bf16.msra.mxu0 0
      %402 = vmatprep.subr.bf16.mxu0 0
      %403 = vmatpush1.bf16.msra.mxu0 0
      %404 = vmatprep.subr.bf16.mxu0 0
      %405 = vmatpush1.bf16.msra.mxu0 %v382
      %406 = vmatprep.subr.bf16.mxu0 0
      %407 = vmatpush1.bf16.msra.mxu0 %v381
      %408 = vmatprep.subr.bf16.mxu0 0
      %409 = vmatpush2.bf16.msra.mxu0 0
      %410 = vmatprep.subr.bf16.mxu0 0
      %411 = vmatpush2.bf16.msra.mxu0 0
      %412 = vmatprep.subr.bf16.mxu0 0
      %413 = vmatpush2.bf16.msra.mxu0 0
      %414 = vmatprep.subr.bf16.mxu0 0
      %415 = vmatpush2.bf16.msra.mxu0 0
      %416 = vmatprep.subr.bf16.mxu0 0
      %417 = vmatpush2.bf16.msra.mxu0 0
      %418 = vmatprep.subr.bf16.mxu0 0
      %419 = vmatpush2.bf16.msra.mxu0 0
      %420 = vmatprep.subr.bf16.mxu0 0
      %421 = vmatpush2.bf16.msra.mxu0 0
      %422 = vmatprep.subr.bf16.mxu0 0
      %423 = vmatpush2.bf16.msra.mxu0 0
      %424 = vmatprep.mubr.bf16.mxu0 0
      %425 = vmatmul.mubr.bf16.gmra.mxu0 %v387
      %v426 = vpop.f32.mrf.mxu0
      %v427 = vadd.f32 0.0, %v426
      %v428 = vpop.f32.mrf.mxu0
      %v429 = vpop.f32.mrf.mxu0
      %v430 = vadd.f32 0.0, %v429
      %v431 = vpop.f32.mrf.mxu0
      %432 = vmatprep.mubr.bf16.mxu0 0
      %433 = vmatmul.mubr.bf16.gmra.mxu0 %v390
      %v434 = vpop.f32.mrf.mxu0
      %v435 = vadd.f32 0.0, %v434
      %v436 = vpop.f32.mrf.mxu0
      %v437 = vpop.f32.mrf.mxu0
      %v438 = vadd.f32 0.0, %v437
      %v439 = vpop.f32.mrf.mxu0
      %440 = vdwg.mxu0
      %v445 = vunpack.c.l.b16 %v347
      %v446 = vunpack.c.l.b16 %v348
      %v447 = vunpack.c.l.b16 %v349
      %v448 = vunpack.c.l.b16 %v350
      %v449 = vpack.c.b16 %v446, %v445
      %v450 = vpack.c.b16 %v448, %v447
      %v455 = vunpack.c.l.b16 %v351
      %v456 = vunpack.c.l.b16 %v352
      %v457 = vunpack.c.l.b16 %v353
      %v458 = vunpack.c.l.b16 %v354
      %v459 = vpack.c.b16 %v456, %v455
      %v460 = vpack.c.b16 %v458, %v457
      %v464 = vsel %vm385, %v449, 0
      %v467 = vsel %vm385, %v450, 0
      %469 = vmatprep.subr.bf16.mxu0 0
      %470 = vmatpush1.bf16.msra.mxu0 0
      %471 = vmatprep.subr.bf16.mxu0 0
      %472 = vmatpush1.bf16.msra.mxu0 0
      %473 = vmatprep.subr.bf16.mxu0 0
      %474 = vmatpush1.bf16.msra.mxu0 0
      %475 = vmatprep.subr.bf16.mxu0 0
      %476 = vmatpush1.bf16.msra.mxu0 0
      %477 = vmatprep.subr.bf16.mxu0 0
      %478 = vmatpush1.bf16.msra.mxu0 0
      %479 = vmatprep.subr.bf16.mxu0 0
      %480 = vmatpush1.bf16.msra.mxu0 0
      %481 = vmatprep.subr.bf16.mxu0 0
      %482 = vmatpush1.bf16.msra.mxu0 %v460
      %483 = vmatprep.subr.bf16.mxu0 0
      %484 = vmatpush1.bf16.msra.mxu0 %v459
      %485 = vmatprep.subr.bf16.mxu0 0
      %486 = vmatpush2.bf16.msra.mxu0 0
      %487 = vmatprep.subr.bf16.mxu0 0
      %488 = vmatpush2.bf16.msra.mxu0 0
      %489 = vmatprep.subr.bf16.mxu0 0
      %490 = vmatpush2.bf16.msra.mxu0 0
      %491 = vmatprep.subr.bf16.mxu0 0
      %492 = vmatpush2.bf16.msra.mxu0 0
      %493 = vmatprep.subr.bf16.mxu0 0
      %494 = vmatpush2.bf16.msra.mxu0 0
      %495 = vmatprep.subr.bf16.mxu0 0
      %496 = vmatpush2.bf16.msra.mxu0 0
      %497 = vmatprep.subr.bf16.mxu0 0
      %498 = vmatpush2.bf16.msra.mxu0 0
      %499 = vmatprep.subr.bf16.mxu0 0
      %500 = vmatpush2.bf16.msra.mxu0 0
      %501 = vmatprep.mubr.bf16.mxu0 0
      %502 = vmatmul.mubr.bf16.gmra.mxu0 %v464
      %v503 = vpop.f32.mrf.mxu0
      %v504 = vadd.f32 %v427, %v503
      %v505 = vpop.f32.mrf.mxu0
      %v506 = vpop.f32.mrf.mxu0
      %v507 = vadd.f32 %v430, %v506
      %v508 = vpop.f32.mrf.mxu0
      %509 = vmatprep.mubr.bf16.mxu0 0
      %510 = vmatmul.mubr.bf16.gmra.mxu0 %v467
      %v511 = vpop.f32.mrf.mxu0
      %v512 = vadd.f32 %v435, %v511
      %v513 = vpop.f32.mrf.mxu0
      %v514 = vpop.f32.mrf.mxu0
      %v515 = vadd.f32 %v438, %v514
      %v516 = vpop.f32.mrf.mxu0
      %517 = vdwg.mxu0
      %v518 = vld [vmem:[%s4] sm:$0x1]
      %v520 = vlaneseq
      %v521 = vshrl.u32 %v520, 7
      %v522 = vsub.s32 0, %v521
      %v523 = vrot.slane %v518, %v522
      %v525 = vadd.f32 %v504, %v523
      %v526 = vadd.f32 %v507, %v523
      %v527 = vadd.f32 %v512, %v523
      %v528 = vadd.f32 %v515, %v523
      %v529 = vxor.u32 %v525, 2147483648
      %v530 = vxor.u32 %v526, 2147483648
      %v531 = vxor.u32 %v527, 2147483648
      %v532 = vxor.u32 %v528, 2147483648
      %v533 = vmul.f32 %v529, 1.442695
      %v534 = vpow.pop %v533
      %v535 = vmul.f32 %v530, 1.442695
      %v536 = vpow.pop %v535
      %v537 = vmul.f32 %v531, 1.442695
      %v538 = vpow.pop %v537
      %v539 = vmul.f32 %v532, 1.442695
      %v540 = vpow.pop %v539
      %v541 = vadd.f32 %v534, 1.0
      %v542 = vadd.f32 %v536, 1.0
      %v543 = vadd.f32 %v538, 1.0
      %v544 = vadd.f32 %v540, 1.0
      %v545 = vrcp.pop %v541
      %v546 = vmul.f32 1.0, %v545
      %v547 = vrcp.pop %v542
      %v548 = vmul.f32 1.0, %v547
      %v549 = vrcp.pop %v543
      %v550 = vmul.f32 1.0, %v549
      %v551 = vrcp.pop %v544
      %v552 = vmul.f32 1.0, %v551
      %v553 = vmul.f32 %v525, %v546
      %v554 = vmul.f32 %v526, %v548
      %v555 = vmul.f32 %v527, %v550
      %v556 = vmul.f32 %v528, %v552
      %v557 = vpack.c.bf16 %v554, %v553
      %v558 = vpack.c.bf16 %v556, %v555
      %v561 = vunpack.c.l.b16 %v557
      %v562 = vunpack.c.h.b16 %v557
      %v563 = vunpack.c.l.b16 %v558
      %v564 = vunpack.c.h.b16 %v558
      %v565 = vpack.c.b16 %v561, %v561
      %v566 = vpack.c.b16 %v562, %v562
      %v567 = vpack.c.b16 %v563, %v563
      %v568 = vpack.c.b16 %v564, %v564
      %573 = vst [vmem:[%s337] sm:$0xf] %v565
      %574 = vst [vmem:[%s337 + $0x4] sm:$0xf] %v566
      %575 = vst [vmem:[%s337 + $0x8] sm:$0xf] %v567
      %576 = vst [vmem:[%s337 + $0xc] sm:$0xf] %v568
      %v577 = vadd.f32 %v553, %v554
      %v578 = vadd.f32 %v577, %v555
      %v579 = vadd.f32 %v578, %v556
      %v580 = vrot.slane %v579, 4
      %v581 = vadd.f32 %v579, %v580
      %v582 = vrot.slane %v581, 2
      %v583 = vadd.f32 %v581, %v582
      %v584 = vrot.slane %v583, 1
      %v585 = vadd.f32 %v583, %v584
      %586 = vst [vmem:[%s345] sm:$0x1] %v585
      %v587 = vmul.f32 %v553, %v553
      %v588 = vmul.f32 %v554, %v554
      %v589 = vmul.f32 %v555, %v555
      %v590 = vmul.f32 %v556, %v556
      %v591 = vadd.f32 %v587, %v588
      %v592 = vadd.f32 %v591, %v589
      %v593 = vadd.f32 %v592, %v590
      %v594 = vrot.slane %v593, 4
      %v595 = vadd.f32 %v593, %v594
      %v596 = vrot.slane %v595, 2
      %v597 = vadd.f32 %v595, %v596
      %v598 = vrot.slane %v597, 1
      %v599 = vadd.f32 %v597, %v598
      %600 = vst [vmem:[%s345 + $0x1] sm:$0x1] %v599
      %s601 = smul.u32 4, %s23
      %p602 = scmp.lt.s32.totalorder %s22, 1
      %s603 = scalar_select %p602, %s22, 1
      %p604 = scmp.lt.s32.totalorder %s601, 3
      %s605 = scalar_select %p604, %s601, 3
      %s606 = smul.addr %s603, 4
      %s607 = sadd.s32 %s605, %s606
      %s608 = smul.addr %s607, 4
      %s609 = scalar_lea.vmem %s5, %s608
      %p610 = scmp.lt.s32.totalorder %s22, 1
      %s611 = scalar_select %p610, %s22, 1
      %p612 = scmp.lt.s32.totalorder %s23, 0
      %s613 = scalar_select %p612, %s23, 0
      %s614 = sadd.s32 %s613, %s611
      %s615 = smul.addr %s614, 2
      %s616 = scalar_lea.vmem %s6, %s615
      // Predicated region
      $region41: #{nested_residual_unet_forward.16} parent=39 // pred_check
        %p617 = pneg %p169
      $region42: #{nested_residual_unet_forward.16} parent=39 // pred_check_branch
        %619 = sbr.rel (%p617) target = $region44
      $region43: #{nested_residual_unet_forward.16} parent=39 // pred_region
        %s620 = smul.u32 4, %s23
      $region44: #{nested_residual_unet_forward.16} parent=39 // pred_fallthru
        _
      // Predicated region
      $region45: #{nested_residual_unet_forward.16} parent=39 // pred_check
        %p621 = pneg %p197
      $region46: #{nested_residual_unet_forward.16} parent=39 // pred_check_branch
        %623 = sbr.rel (%p621) target = $region48
      $region47: #{nested_residual_unet_forward.16} parent=39 // pred_region
        _
      $region48: #{nested_residual_unet_forward.16} parent=39 // pred_fallthru
        _
    $region40: #{nested_residual_unet_forward.16} parent=5 // pred_fallthru
      _
    %p624 = scmp.le.s32.totalorder 2, %s13
    // Predicated region
    $region49: #{nested_residual_unet_forward.16} parent=5 // pred_check
      %p625 = pneg %p624
    $region50: #{nested_residual_unet_forward.16} parent=5 // pred_check_branch
      %627 = sbr.rel (%p625) target = $region52
    $region51: #{nested_residual_unet_forward.16} parent=5 // pred_region
      %s628 = ssub.s32 %s13, 2
      // Predicated region
      $region53: #{nested_residual_unet_forward.16} parent=51 // pred_check
        %p629 = pneg %p175
      $region54: #{nested_residual_unet_forward.16} parent=51 // pred_check_branch
        %631 = sbr.rel (%p629) target = $region56
      $region55: #{nested_residual_unet_forward.16} parent=51 // pred_region
        %s632 = smul.u32 4, %s25
        %p633 = scmp.lt.s32.totalorder %s24, 1
        %s634 = scalar_select %p633, %s24, 1
        %p635 = scmp.lt.s32.totalorder %s632, 3
        %s636 = scalar_select %p635, %s632, 3
        %s637 = smul.addr %s634, 4
        %s638 = sadd.s32 %s636, %s637
        %s639 = smul.addr %s638, 4
        %s640 = scalar_lea.vmem %s5, %s639
      $region56: #{nested_residual_unet_forward.16} parent=51 // pred_fallthru
        _
      // Predicated region
      $region57: #{nested_residual_unet_forward.16} parent=51 // pred_check
        %p641 = pneg %p203
      $region58: #{nested_residual_unet_forward.16} parent=51 // pred_check_branch
        %643 = sbr.rel (%p641) target = $region60
      $region59: #{nested_residual_unet_forward.16} parent=51 // pred_region
        %p644 = scmp.lt.s32.totalorder %s24, 1
        %s645 = scalar_select %p644, %s24, 1
        %p646 = scmp.lt.s32.totalorder %s25, 0
        %s647 = scalar_select %p646, %s25, 0
        %s648 = sadd.s32 %s647, %s645
        %s649 = smul.addr %s648, 2
        %s650 = scalar_lea.vmem %s6, %s649
      $region60: #{nested_residual_unet_forward.16} parent=51 // pred_fallthru
        _
    $region52: #{nested_residual_unet_forward.16} parent=5 // pred_fallthru
      _
  $region6: #{nested_residual_unet_forward.16} parent=0 // loop_footer
    %s17 = sadd.s32 1, %s13
  $region7: #{nested_residual_unet_forward.16} parent=0 // loop_footer_branch
    %12 = sbr.rel target = $region3
  $region8: #{nested_residual_unet_forward.16} parent=0 // loop_exit
    _

// kernel: nested_residual_unet_forward.18
$region0: #{nested_residual_unet_forward.18}
  #allocation0 [shape = 'u32[]', space=smem, size = 0x4, offset = 0x4, fixed_abs, tag = 'smem constant byte address 0x4 - core index']
  #allocation1 [shape = 'u32[144,128]{1,0:T(1,128)}', space=vmem, size = 0x12000, scoped, tag = 'internal scratch']
  %s0 = inlined_call_operand.vmem [shape: bf16[2,128,32], index: 0, kind: input, shape index: {}]
  %s1 = inlined_call_operand.vmem [shape: bf16[2,128,32], index: 1, kind: input, shape index: {}]
  %s2 = inlined_call_operand.vmem [shape: bf16[32,16], index: 2, kind: input, shape index: {}]
  %s3 = inlined_call_operand.vmem [shape: bf16[32,16], index: 3, kind: input, shape index: {}]
  %s4 = inlined_call_operand.vmem [shape: f32[1,16], index: 4, kind: input, shape index: {}]
  %s5 = inlined_call_operand.vmem [shape: bf16[2,128,16], index: 5, kind: output, shape index: {0}]
  %s6 = inlined_call_operand.vmem [shape: f32[2,1,2,16], index: 6, kind: output, shape index: {1}]
  %7 = xla_tuple %s5, %s6
  %s8 = sld [smem:[#allocation0]]
  $region61: #{nested_residual_unet_forward.18} parent=0
    _
  %s10 = ssub.s32 1, %s8
  %s11 = scalar_select 0, %s10, %s8
  loop: start=0, step=1, limit=4
  $region2: #{nested_residual_unet_forward.18} parent=0 // loop_pre_header
    _
  $region3: #{nested_residual_unet_forward.18} parent=0 // loop_header
    %s13 = sphi 0, %s17
    %p14 = scmp.ge.s32.totalorder %s13, 4
    %s20 = sphi 0, %s32
    %s21 = sphi 0, %s28
    %s22 = sphi 0, %s20
    %s23 = sphi 0, %s21
    %s24 = sphi 0, %s22
    %s25 = sphi 0, %s23
    %s37 = sphi 0, %s39
    %s40 = sphi 0, %s37
    %s41 = sphi 0, %s40
    %s57 = sphi 0, %s41
    %s65 = sphi 0, %s67
    %s68 = sphi 0, %s65
    %s69 = sphi 0, %s68
    %s85 = sphi 0, %s69
    %s89 = sphi 0, %s89
    %s91 = sphi 0, %s89
    %s92 = sphi 0, %s91
    %s106 = sphi 0, %s92
    %s110 = sphi 0, %s110
    %s112 = sphi 0, %s110
    %s113 = sphi 0, %s112
    %s127 = sphi 0, %s113
    %s131 = sphi 0, %s131
    %s133 = sphi 0, %s131
    %s134 = sphi 0, %s133
    %s148 = sphi 0, %s134
    %s156 = sphi 0, %s158
    %s159 = sphi 0, %s156
    %s160 = sphi 0, %s159
    %s176 = sphi 0, %s160
    %s184 = sphi 0, %s186
    %s187 = sphi 0, %s184
    %s188 = sphi 0, %s187
    %s204 = sphi 0, %s188
  $region4: #{nested_residual_unet_forward.18} parent=0 // loop_header_branch
    %16 = sbr.rel (%p14) target = $region8
  $region5: #{nested_residual_unet_forward.18} parent=0 // loop_body
    %s18 = ssub.s32 %s13, 1
    %s19 = ssub.s32 %s13, 2
    %s26 = sadd.s32 1, %s21
    %p27 = scmp.ge.s32.totalorder %s26, 1
    %s28 = scalar_select %p27, 0, %s26
    %s29 = sadd.s32 1, %s20
    %s30 = scalar_select %p27, %s29, %s20
    %p31 = scmp.ge.s32.totalorder %s30, 2
    %s32 = scalar_select %p31, 0, %s30
    %s33 = ssub.s32 %s20, %s32
    %s34 = ssub.s32 %s21, %s28
    %s35 = sor.u32 %s33, %s34
    %p36 = scmp.eq.s32.totalorder %s35, 0
    %s38 = sadd.s32 %s37, 1
    %s39 = scalar_select %p36, %s37, %s38
    %p42 = pneg %p36
    %p43 = scmp.eq.s32.totalorder %s13, 1
    %p44 = por %p42, %p43
    %p45 = scmp.ne.s32.totalorder %s37, %s40
    %p46 = scmp.eq.s32.totalorder %s13, 0
    %p47 = por %p45, %p46
    %p48 = scmp.ne.s32.totalorder %s37, %s40
    %p49 = scmp.eq.s32.totalorder %s18, 1
    %p50 = por %p48, %p49
    %p51 = scmp.ne.s32.totalorder %s40, %s41
    %p52 = scmp.eq.s32.totalorder %s18, 0
    %p53 = por %p51, %p52
    %p54 = scmp.ne.s32.totalorder %s40, %s41
    %p55 = scmp.eq.s32.totalorder %s19, 1
    %p56 = por %p54, %p55
    %p58 = scmp.ne.s32.totalorder %s41, %s57
    %p59 = scmp.eq.s32.totalorder %s19, 0
    %p60 = por %p58, %p59
    %s61 = ssub.s32 %s20, %s32
    %s62 = ssub.s32 %s21, %s28
    %s63 = sor.u32 %s61, %s62
    %p64 = scmp.eq.s32.totalorder %s63, 0
    %s66 = sadd.s32 %s65, 1
    %s67 = scalar_select %p64, %s65, %s66
    %p70 = pneg %p64
    %p71 = scmp.eq.s32.totalorder %s13, 1
    %p72 = por %p70, %p71
    %p73 = scmp.ne.s32.totalorder %s65, %s68
    %p74 = scmp.eq.s32.totalorder %s13, 0
    %p75 = por %p73, %p74
    %p76 = scmp.ne.s32.totalorder %s65, %s68
    %p77 = scmp.eq.s32.totalorder %s18, 1
    %p78 = por %p76, %p77
    %p79 = scmp.ne.s32.totalorder %s68, %s69
    %p80 = scmp.eq.s32.totalorder %s18, 0
    %p81 = por %p79, %p80
    %p82 = scmp.ne.s32.totalorder %s68, %s69
    %p83 = scmp.eq.s32.totalorder %s19, 1
    %p84 = por %p82, %p83
    %p86 = scmp.ne.s32.totalorder %s69, %s85
    %p87 = scmp.eq.s32.totalorder %s19, 0
    %p88 = por %p86, %p87
    %s90 = sadd.s32 %s89, 1
    %p93 = scmp.eq.s32.totalorder %s13, 1
    %p94 = scmp.ne.s32.totalorder %s89, %s91
    %p95 = scmp.eq.s32.totalorder %s13, 0
    %p96 = por %p94, %p95
    %p97 = scmp.ne.s32.totalorder %s89, %s91
    %p98 = scmp.eq.s32.totalorder %s18, 1
    %p99 = por %p97, %p98
    %p100 = scmp.ne.s32.totalorder %s91, %s92
    %p101 = scmp.eq.s32.totalorder %s18, 0
    %p102 = por %p100, %p101
    %p103 = scmp.ne.s32.totalorder %s91, %s92
    %p104 = scmp.eq.s32.totalorder %s19, 1
    %p105 = por %p103, %p104
    %p107 = scmp.ne.s32.totalorder %s92, %s106
    %p108 = scmp.eq.s32.totalorder %s19, 0
    %p109 = por %p107, %p108
    %s111 = sadd.s32 %s110, 1
    %p114 = scmp.eq.s32.totalorder %s13, 1
    %p115 = scmp.ne.s32.totalorder %s110, %s112
    %p116 = scmp.eq.s32.totalorder %s13, 0
    %p117 = por %p115, %p116
    %p118 = scmp.ne.s32.totalorder %s110, %s112
    %p119 = scmp.eq.s32.totalorder %s18, 1
    %p120 = por %p118, %p119
    %p121 = scmp.ne.s32.totalorder %s112, %s113
    %p122 = scmp.eq.s32.totalorder %s18, 0
    %p123 = por %p121, %p122
    %p124 = scmp.ne.s32.totalorder %s112, %s113
    %p125 = scmp.eq.s32.totalorder %s19, 1
    %p126 = por %p124, %p125
    %p128 = scmp.ne.s32.totalorder %s113, %s127
    %p129 = scmp.eq.s32.totalorder %s19, 0
    %p130 = por %p128, %p129
    %s132 = sadd.s32 %s131, 1
    %p135 = scmp.eq.s32.totalorder %s13, 1
    %p136 = scmp.ne.s32.totalorder %s131, %s133
    %p137 = scmp.eq.s32.totalorder %s13, 0
    %p138 = por %p136, %p137
    %p139 = scmp.ne.s32.totalorder %s131, %s133
    %p140 = scmp.eq.s32.totalorder %s18, 1
    %p141 = por %p139, %p140
    %p142 = scmp.ne.s32.totalorder %s133, %s134
    %p143 = scmp.eq.s32.totalorder %s18, 0
    %p144 = por %p142, %p143
    %p145 = scmp.ne.s32.totalorder %s133, %s134
    %p146 = scmp.eq.s32.totalorder %s19, 1
    %p147 = por %p145, %p146
    %p149 = scmp.ne.s32.totalorder %s134, %s148
    %p150 = scmp.eq.s32.totalorder %s19, 0
    %p151 = por %p149, %p150
    %s152 = ssub.s32 %s20, %s32
    %s153 = ssub.s32 %s21, %s28
    %s154 = sor.u32 %s152, %s153
    %p155 = scmp.eq.s32.totalorder %s154, 0
    %s157 = sadd.s32 %s156, 1
    %s158 = scalar_select %p155, %s156, %s157
    %p161 = pneg %p155
    %p162 = scmp.eq.s32.totalorder %s13, 1
    %p163 = por %p161, %p162
    %p164 = scmp.ne.s32.totalorder %s156, %s159
    %p165 = scmp.eq.s32.totalorder %s13, 0
    %p166 = por %p164, %p165
    %p167 = scmp.ne.s32.totalorder %s156, %s159
    %p168 = scmp.eq.s32.totalorder %s18, 1
    %p169 = por %p167, %p168
    %p170 = scmp.ne.s32.totalorder %s159, %s160
    %p171 = scmp.eq.s32.totalorder %s18, 0
    %p172 = por %p170, %p171
    %p173 = scmp.ne.s32.totalorder %s159, %s160
    %p174 = scmp.eq.s32.totalorder %s19, 1
    %p175 = por %p173, %p174
    %p177 = scmp.ne.s32.totalorder %s160, %s176
    %p178 = scmp.eq.s32.totalorder %s19, 0
    %p179 = por %p177, %p178
    %s180 = ssub.s32 %s20, %s32
    %s181 = ssub.s32 %s21, %s28
    %s182 = sor.u32 %s180, %s181
    %p183 = scmp.eq.s32.totalorder %s182, 0
    %s185 = sadd.s32 %s184, 1
    %s186 = scalar_select %p183, %s184, %s185
    %p189 = pneg %p183
    %p190 = scmp.eq.s32.totalorder %s13, 1
    %p191 = por %p189, %p190
    %p192 = scmp.ne.s32.totalorder %s184, %s187
    %p193 = scmp.eq.s32.totalorder %s13, 0
    %p194 = por %p192, %p193
    %p195 = scmp.ne.s32.totalorder %s184, %s187
    %p196 = scmp.eq.s32.totalorder %s18, 1
    %p197 = por %p195, %p196
    %p198 = scmp.ne.s32.totalorder %s187, %s188
    %p199 = scmp.eq.s32.totalorder %s18, 0
    %p200 = por %p198, %p199
    %p201 = scmp.ne.s32.totalorder %s187, %s188
    %p202 = scmp.eq.s32.totalorder %s19, 1
    %p203 = por %p201, %p202
    %p205 = scmp.ne.s32.totalorder %s188, %s204
    %p206 = scmp.eq.s32.totalorder %s19, 0
    %p207 = por %p205, %p206
    %p208 = scmp.le.s32.totalorder 1, %s13
    %p209 = scmp.lt.s32.totalorder %s13, 3
    %p210 = pnand %p208, %p209
    %p211 = pneg %p210
    // Predicated region
    $region9: #{nested_residual_unet_forward.18} parent=5 // pred_check
      _
    $region10: #{nested_residual_unet_forward.18} parent=5 // pred_check_branch
      %213 = sbr.rel (%p210) target = $region12
    $region11: #{nested_residual_unet_forward.18} parent=5 // pred_region
      %s214 = ssub.s32 %s13, 1
      // Predicated region
      $region13: #{nested_residual_unet_forward.18} parent=11 // pred_check
        %p215 = pneg %p102
      $region14: #{nested_residual_unet_forward.18} parent=11 // pred_check_branch
        %217 = sbr.rel (%p215) target = $region16
      $region15: #{nested_residual_unet_forward.18} parent=11 // pred_region
        _
      $region16: #{nested_residual_unet_forward.18} parent=11 // pred_fallthru
        _
      // Predicated region
      $region17: #{nested_residual_unet_forward.18} parent=11 // pred_check
        %p218 = pneg %p123
      $region18: #{nested_residual_unet_forward.18} parent=11 // pred_check_branch
        %220 = sbr.rel (%p218) target = $region20
      $region19: #{nested_residual_unet_forward.18} parent=11 // pred_region
        _
      $region20: #{nested_residual_unet_forward.18} parent=11 // pred_fallthru
        _
      // Predicated region
      $region21: #{nested_residual_unet_forward.18} parent=11 // pred_check
        %p221 = pneg %p144
      $region22: #{nested_residual_unet_forward.18} parent=11 // pred_check_branch
        %223 = sbr.rel (%p221) target = $region24
      $region23: #{nested_residual_unet_forward.18} parent=11 // pred_region
        _
      $region24: #{nested_residual_unet_forward.18} parent=11 // pred_fallthru
        _
    $region12: #{nested_residual_unet_forward.18} parent=5 // pred_fallthru
      _
    %p224 = scmp.lt.s32.totalorder %s13, 2
    // Predicated region
    $region25: #{nested_residual_unet_forward.18} parent=5 // pred_check
      %p225 = pneg %p224
    $region26: #{nested_residual_unet_forward.18} parent=5 // pred_check_branch
      %227 = sbr.rel (%p225) target = $region28
    $region27: #{nested_residual_unet_forward.18} parent=5 // pred_region
      // Predicated region
      $region29: #{nested_residual_unet_forward.18} parent=27 // pred_check
        %p228 = pneg %p47
      $region30: #{nested_residual_unet_forward.18} parent=27 // pred_check_branch
        %230 = sbr.rel (%p228) target = $region32
      $region31: #{nested_residual_unet_forward.18} parent=27 // pred_region
        %s231 = smul.u32 16, %s21
        %p232 = scmp.lt.s32.totalorder %s20, 1
        %s233 = scalar_select %p232, %s20, 1
        %p234 = scmp.lt.s32.totalorder %s231, 15
        %s235 = scalar_select %p234, %s231, 15
        %s236 = smul.addr %s233, 16
        %s237 = sadd.s32 %s235, %s236
        %s238 = smul.addr %s237, 4
        %s239 = scalar_lea.vmem %s0, %s238
        %s240 = smul.u32 16, %s21
      $region32: #{nested_residual_unet_forward.18} parent=27 // pred_fallthru
        _
      // Predicated region
      $region33: #{nested_residual_unet_forward.18} parent=27 // pred_check
        %p241 = pneg %p75
      $region34: #{nested_residual_unet_forward.18} parent=27 // pred_check_branch
        %243 = sbr.rel (%p241) target = $region36
      $region35: #{nested_residual_unet_forward.18} parent=27 // pred_region
        %s244 = smul.u32 16, %s21
        %p245 = scmp.lt.s32.totalorder %s20, 1
        %s246 = scalar_select %p245, %s20, 1
        %p247 = scmp.lt.s32.totalorder %s244, 15
        %s248 = scalar_select %p247, %s244, 15
        %s249 = smul.addr %s246, 16
        %s250 = sadd.s32 %s248, %s249
        %s251 = smul.addr %s250, 4
        %s252 = scalar_lea.vmem %s1, %s251
        %s253 = smul.u32 16, %s21
      $region36: #{nested_residual_unet_forward.18} parent=27 // pred_fallthru
        _
    $region28: #{nested_residual_unet_forward.18} parent=5 // pred_fallthru
      _
    %p254 = scmp.le.s32.totalorder 1, %s13
    %p255 = scmp.lt.s32.totalorder %s13, 3
    %p256 = pnand %p254, %p255
    %p257 = pneg %p256
    // Predicated region
    $region37: #{nested_residual_unet_forward.18} parent=5 // pred_check
      _
    $region38: #{nested_residual_unet_forward.18} parent=5 // pred_check_branch
      %259 = sbr.rel (%p256) target = $region40
    $region39: #{nested_residual_unet_forward.18} parent=5 // pred_region
      %s260 = ssub.s32 %s13, 1
      %s261 = smul.u32 16, %s23
      %p262 = scmp.lt.s32.totalorder %s22, 1
      %s263 = scalar_select %p262, %s22, 1
      %p264 = scmp.lt.s32.totalorder %s261, 15
      %s265 = scalar_select %p264, %s261, 15
      %s266 = smul.addr %s263, 16
      %s267 = sadd.s32 %s265, %s266
      %s268 = smul.addr %s267, 4
      %s269 = scalar_lea.vmem %s0, %s268
      %p270 = pneg %p53
      %p271 = pneg %p50
      %s272 = smul.u32 16, %s23
      %p273 = scmp.lt.s32.totalorder %s22, 1
      %s274 = scalar_select %p273, %s22, 1
      %p275 = scmp.lt.s32.totalorder %s272, 15
      %s276 = scalar_select %p275, %s272, 15
      %s277 = smul.addr %s274, 16
      %s278 = sadd.s32 %s276, %s277
      %s279 = smul.addr %s278, 4
      %s280 = scalar_lea.vmem %s1, %s279
      %p281 = pneg %p81
      %p282 = pneg %p78
      %p283 = pneg %p102
      %p284 = pneg %p99
      %p285 = pneg %p123
      %p286 = pneg %p120
      %p287 = pneg %p144
      %p288 = pneg %p141
      %p289 = pneg %p172
      %p290 = pneg %p169
      %s291 = smul.u32 16, %s23
      %p292 = scmp.lt.s32.totalorder %s22, 1
      %s293 = scalar_select %p292, %s22, 1
      %p294 = scmp.lt.s32.totalorder %s291, 15
      %s295 = scalar_select %p294, %s291, 15
      %s296 = smul.addr %s293, 16
      %s297 = sadd.s32 %s295, %s296
      %s298 = smul.addr %s297, 4
      %s299 = scalar_lea.vmem %s5, %s298
      %p300 = pneg %p200
      %p301 = pneg %p197
      %p302 = scmp.lt.s32.totalorder %s22, 1
      %s303 = scalar_select %p302, %s22, 1
      %p304 = scmp.lt.s32.totalorder %s23, 0
      %s305 = scalar_select %p304, %s23, 0
      %s306 = sadd.s32 %s305, %s303
      %s307 = smul.addr %s306, 2
      %s308 = scalar_lea.vmem %s6, %s307
      %s309 = smul.u32 16, %s23
      %p310 = scmp.lt.s32.totalorder %s22, 1
      %s311 = scalar_select %p310, %s22, 1
      %p312 = scmp.lt.s32.totalorder %s309, 15
      %s313 = scalar_select %p312, %s309, 15
      %s314 = smul.addr %s311, 16
      %s315 = sadd.s32 %s313, %s314
      %s316 = smul.addr %s315, 4
      %s317 = scalar_lea.vmem %s0, %s316
      %s318 = smul.u32 16, %s23
      %s319 = smul.u32 16, %s23
      %p320 = scmp.lt.s32.totalorder %s22, 1
      %s321 = scalar_select %p320, %s22, 1
      %p322 = scmp.lt.s32.totalorder %s319, 15
      %s323 = scalar_select %p322, %s319, 15
      %s324 = smul.addr %s321, 16
      %s325 = sadd.s32 %s323, %s324
      %s326 = smul.addr %s325, 4
      %s327 = scalar_lea.vmem %s1, %s326
      %s328 = smul.u32 16, %s23
      %s329 = smul.u32 16, %s23
      %p330 = scmp.lt.s32.totalorder %s22, 1
      %s331 = scalar_select %p330, %s22, 1
      %p332 = scmp.lt.s32.totalorder %s329, 15
      %s333 = scalar_select %p332, %s329, 15
      %s334 = smul.addr %s331, 16
      %s335 = sadd.s32 %s333, %s334
      %s336 = smul.addr %s335, 4
      %s337 = scalar_lea.vmem %s5, %s336
      %s338 = smul.u32 16, %s23
      %p339 = scmp.lt.s32.totalorder %s22, 1
      %s340 = scalar_select %p339, %s22, 1
      %p341 = scmp.lt.s32.totalorder %s23, 0
      %s342 = scalar_select %p341, %s23, 0
      %s343 = sadd.s32 %s342, %s340
      %s344 = smul.addr %s343, 2
      %s345 = scalar_lea.vmem %s6, %s344
      %v347 = vld [vmem:[%s317] sm:$0xf]
      %v348 = vld [vmem:[%s317 + $0x4] sm:$0xf]
      %v349 = vld [vmem:[%s317 + $0x8] sm:$0xf]
      %v350 = vld [vmem:[%s317 + $0xc] sm:$0xf]
      %v351 = vld [vmem:[%s317 + $0x10] sm:$0xf]
      %v352 = vld [vmem:[%s317 + $0x14] sm:$0xf]
      %v353 = vld [vmem:[%s317 + $0x18] sm:$0xf]
      %v354 = vld [vmem:[%s317 + $0x1c] sm:$0xf]
      %v355 = vld [vmem:[%s317 + $0x20] sm:$0xf]
      %v356 = vld [vmem:[%s317 + $0x24] sm:$0xf]
      %v357 = vld [vmem:[%s317 + $0x28] sm:$0xf]
      %v358 = vld [vmem:[%s317 + $0x2c] sm:$0xf]
      %v359 = vld [vmem:[%s317 + $0x30] sm:$0xf]
      %v360 = vld [vmem:[%s317 + $0x34] sm:$0xf]
      %v361 = vld [vmem:[%s317 + $0x38] sm:$0xf]
      %v362 = vld [vmem:[%s317 + $0x3c] sm:$0xf]
      %v363 = vld [vmem:[%s2] sm:$0xf]
      %v364 = vld [vmem:[%s2 + $0x4] sm:$0xf]
      %v365 = vld [vmem:[%s2 + $0x8] sm:$0xf]
      %v366 = vld [vmem:[%s2 + $0xc] sm:$0xf]
      %v367 = vld [vmem:[%s327] sm:$0xf]
      %v368 = vld [vmem:[%s327 + $0x4] sm:$0xf]
      %v369 = vld [vmem:[%s327 + $0x8] sm:$0xf]
      %v370 = vld [vmem:[%s327 + $0xc] sm:$0xf]
      %v371 = vld [vmem:[%s327 + $0x10] sm:$0xf]
      %v372 = vld [vmem:[%s327 + $0x14] sm:$0xf]
      %v373 = vld [vmem:[%s327 + $0x18] sm:$0xf]
      %v374 = vld [vmem:[%s327 + $0x1c] sm:$0xf]
      %v375 = vld [vmem:[%s327 + $0x20] sm:$0xf]
      %v376 = vld [vmem:[%s327 + $0x24] sm:$0xf]
      %v377 = vld [vmem:[%s327 + $0x28] sm:$0xf]
      %v378 = vld [vmem:[%s327 + $0x2c] sm:$0xf]
      %v379 = vld [vmem:[%s327 + $0x30] sm:$0xf]
      %v380 = vld [vmem:[%s327 + $0x34] sm:$0xf]
      %v381 = vld [vmem:[%s327 + $0x38] sm:$0xf]
      %v382 = vld [vmem:[%s327 + $0x3c] sm:$0xf]
      %v383 = vld [vmem:[%s3] sm:$0xf]
      %v384 = vld [vmem:[%s3 + $0x4] sm:$0xf]
      %v385 = vld [vmem:[%s3 + $0x8] sm:$0xf]
      %v386 = vld [vmem:[%s3 + $0xc] sm:$0xf]
      %v403 = vunpack.c.l.b16 %v367
      %v404 = vunpack.c.l.b16 %v368
      %v405 = vunpack.c.l.b16 %v369
      %v406 = vunpack.c.l.b16 %v370
      %v407 = vunpack.c.l.b16 %v371
      %v408 = vunpack.c.l.b16 %v372
      %v409 = vunpack.c.l.b16 %v373
      %v410 = vunpack.c.l.b16 %v374
      %v411 = vunpack.c.l.b16 %v375
      %v412 = vunpack.c.l.b16 %v376
      %v413 = vunpack.c.l.b16 %v377
      %v414 = vunpack.c.l.b16 %v378
      %v415 = vunpack.c.l.b16 %v379
      %v416 = vunpack.c.l.b16 %v380
      %v417 = vunpack.c.l.b16 %v381
      %v418 = vunpack.c.l.b16 %v382
      %v419 = vpack.c.b16 %v404, %v403
      %v420 = vpack.c.b16 %v406, %v405
      %v421 = vpack.c.b16 %v408, %v407
      %v422 = vpack.c.b16 %v410, %v409
      %v423 = vpack.c.b16 %v412, %v411
      %v424 = vpack.c.b16 %v414, %v413
      %v425 = vpack.c.b16 %v416, %v415
      %v426 = vpack.c.b16 %v418, %v417
      %v431 = vunpack.c.l.b16 %v383
      %v432 = vunpack.c.l.b16 %v384
      %v433 = vunpack.c.l.b16 %v385
      %v434 = vunpack.c.l.b16 %v386
      %v435 = vpack.c.b16 %v432, %v431
      %v436 = vpack.c.b16 %v434, %v433
      %vm439 = vcmask 261120
      %v441 = vsel %vm439, %v419, 0
      %v444 = vsel %vm439, %v420, 0
      %v447 = vsel %vm439, %v421, 0
      %v450 = vsel %vm439, %v422, 0
      %v453 = vsel %vm439, %v423, 0
      %v456 = vsel %vm439, %v424, 0
      %v459 = vsel %vm439, %v425, 0
      %v462 = vsel %vm439, %v426, 0
      %464 = vmatprep.subr.bf16.mxu0 0
      %465 = vmatpush1.bf16.msra.mxu0 0
      %466 = vmatprep.subr.bf16.mxu0 0
      %467 = vmatpush1.bf16.msra.mxu0 0
      %468 = vmatprep.subr.bf16.mxu0 0
      %469 = vmatpush1.bf16.msra.mxu0 0
      %470 = vmatprep.subr.bf16.mxu0 0
      %471 = vmatpush1.bf16.msra.mxu0 0
      %472 = vmatprep.subr.bf16.mxu0 0
      %473 = vmatpush1.bf16.msra.mxu0 0
      %474 = vmatprep.subr.bf16.mxu0 0
      %475 = vmatpush1.bf16.msra.mxu0 0
      %476 = vmatprep.subr.bf16.mxu0 0
      %477 = vmatpush1.bf16.msra.mxu0 %v436
      %478 = vmatprep.subr.bf16.mxu0 0
      %479 = vmatpush1.bf16.msra.mxu0 %v435
      %480 = vmatprep.subr.bf16.mxu0 0
      %481 = vmatpush2.bf16.msra.mxu0 0
      %482 = vmatprep.subr.bf16.mxu0 0
      %483 = vmatpush2.bf16.msra.mxu0 0
      %484 = vmatprep.subr.bf16.mxu0 0
      %485 = vmatpush2.bf16.msra.mxu0 0
      %486 = vmatprep.subr.bf16.mxu0 0
      %487 = vmatpush2.bf16.msra.mxu0 0
      %488 = vmatprep.subr.bf16.mxu0 0
      %489 = vmatpush2.bf16.msra.mxu0 0
      %490 = vmatprep.subr.bf16.mxu0 0
      %491 = vmatpush2.bf16.msra.mxu0 0
      %492 = vmatprep.subr.bf16.mxu0 0
      %493 = vmatpush2.bf16.msra.mxu0 0
      %494 = vmatprep.subr.bf16.mxu0 0
      %495 = vmatpush2.bf16.msra.mxu0 0
      %496 = vmatprep.mubr.bf16.mxu0 0
      %497 = vmatmul.mubr.bf16.gmra.mxu0 %v441
      %v498 = vpop.f32.mrf.mxu0
      %v499 = vadd.f32 0.0, %v498
      %v500 = vpop.f32.mrf.mxu0
      %v501 = vpop.f32.mrf.mxu0
      %v502 = vadd.f32 0.0, %v501
      %v503 = vpop.f32.mrf.mxu0
      %504 = vmatprep.mubr.bf16.mxu0 0
      %505 = vmatmul.mubr.bf16.gmra.mxu0 %v444
      %v506 = vpop.f32.mrf.mxu0
      %v507 = vadd.f32 0.0, %v506
      %v508 = vpop.f32.mrf.mxu0
      %v509 = vpop.f32.mrf.mxu0
      %v510 = vadd.f32 0.0, %v509
      %v511 = vpop.f32.mrf.mxu0
      %512 = vmatprep.mubr.bf16.mxu0 0
      %513 = vmatmul.mubr.bf16.gmra.mxu0 %v447
      %v514 = vpop.f32.mrf.mxu0
      %v515 = vadd.f32 0.0, %v514
      %v516 = vpop.f32.mrf.mxu0
      %v517 = vpop.f32.mrf.mxu0
      %v518 = vadd.f32 0.0, %v517
      %v519 = vpop.f32.mrf.mxu0
      %520 = vmatprep.mubr.bf16.mxu0 0
      %521 = vmatmul.mubr.bf16.gmra.mxu0 %v450
      %v522 = vpop.f32.mrf.mxu0
      %v523 = vadd.f32 0.0, %v522
      %v524 = vpop.f32.mrf.mxu0
      %v525 = vpop.f32.mrf.mxu0
      %v526 = vadd.f32 0.0, %v525
      %v527 = vpop.f32.mrf.mxu0
      %528 = vmatprep.mubr.bf16.mxu0 0
      %529 = vmatmul.mubr.bf16.gmra.mxu0 %v453
      %v530 = vpop.f32.mrf.mxu0
      %v531 = vadd.f32 0.0, %v530
      %v532 = vpop.f32.mrf.mxu0
      %v533 = vpop.f32.mrf.mxu0
      %v534 = vadd.f32 0.0, %v533
      %v535 = vpop.f32.mrf.mxu0
      %536 = vmatprep.mubr.bf16.mxu0 0
      %537 = vmatmul.mubr.bf16.gmra.mxu0 %v456
      %v538 = vpop.f32.mrf.mxu0
      %v539 = vadd.f32 0.0, %v538
      %v540 = vpop.f32.mrf.mxu0
      %v541 = vpop.f32.mrf.mxu0
      %v542 = vadd.f32 0.0, %v541
      %v543 = vpop.f32.mrf.mxu0
      %544 = vmatprep.mubr.bf16.mxu0 0
      %545 = vmatmul.mubr.bf16.gmra.mxu0 %v459
      %v546 = vpop.f32.mrf.mxu0
      %v547 = vadd.f32 0.0, %v546
      %v548 = vpop.f32.mrf.mxu0
      %v549 = vpop.f32.mrf.mxu0
      %v550 = vadd.f32 0.0, %v549
      %v551 = vpop.f32.mrf.mxu0
      %552 = vmatprep.mubr.bf16.mxu0 0
      %553 = vmatmul.mubr.bf16.gmra.mxu0 %v462
      %v554 = vpop.f32.mrf.mxu0
      %v555 = vadd.f32 0.0, %v554
      %v556 = vpop.f32.mrf.mxu0
      %v557 = vpop.f32.mrf.mxu0
      %v558 = vadd.f32 0.0, %v557
      %v559 = vpop.f32.mrf.mxu0
      %560 = vdwg.mxu0
      %v577 = vunpack.c.l.b16 %v347
      %v578 = vunpack.c.l.b16 %v348
      %v579 = vunpack.c.l.b16 %v349
      %v580 = vunpack.c.l.b16 %v350
      %v581 = vunpack.c.l.b16 %v351
      %v582 = vunpack.c.l.b16 %v352
      %v583 = vunpack.c.l.b16 %v353
      %v584 = vunpack.c.l.b16 %v354
      %v585 = vunpack.c.l.b16 %v355
      %v586 = vunpack.c.l.b16 %v356
      %v587 = vunpack.c.l.b16 %v357
      %v588 = vunpack.c.l.b16 %v358
      %v589 = vunpack.c.l.b16 %v359
      %v590 = vunpack.c.l.b16 %v360
      %v591 = vunpack.c.l.b16 %v361
      %v592 = vunpack.c.l.b16 %v362
      %v593 = vpack.c.b16 %v578, %v577
      %v594 = vpack.c.b16 %v580, %v579
      %v595 = vpack.c.b16 %v582, %v581
      %v596 = vpack.c.b16 %v584, %v583
      %v597 = vpack.c.b16 %v586, %v585
      %v598 = vpack.c.b16 %v588, %v587
      %v599 = vpack.c.b16 %v590, %v589
      %v600 = vpack.c.b16 %v592, %v591
      %v605 = vunpack.c.l.b16 %v363
      %v606 = vunpack.c.l.b16 %v364
      %v607 = vunpack.c.l.b16 %v365
      %v608 = vunpack.c.l.b16 %v366
      %v609 = vpack.c.b16 %v606, %v605
      %v610 = vpack.c.b16 %v608, %v607
      %v614 = vsel %vm439, %v593, 0
      %v617 = vsel %vm439, %v594, 0
      %v620 = vsel %vm439, %v595, 0
      %v623 = vsel %vm439, %v596, 0
      %v626 = vsel %vm439, %v597, 0
      %v629 = vsel %vm439, %v598, 0
      %v632 = vsel %vm439, %v599, 0
      %v635 = vsel %vm439, %v600, 0
      %637 = vmatprep.subr.bf16.mxu0 0
      %638 = vmatpush1.bf16.msra.mxu0 0
      %639 = vmatprep.subr.bf16.mxu0 0
      %640 = vmatpush1.bf16.msra.mxu0 0
      %641 = vmatprep.subr.bf16.mxu0 0
      %642 = vmatpush1.bf16.msra.mxu0 0
      %643 = vmatprep.subr.bf16.mxu0 0
      %644 = vmatpush1.bf16.msra.mxu0 0
      %645 = vmatprep.subr.bf16.mxu0 0
      %646 = vmatpush1.bf16.msra.mxu0 0
      %647 = vmatprep.subr.bf16.mxu0 0
      %648 = vmatpush1.bf16.msra.mxu0 0
      %649 = vmatprep.subr.bf16.mxu0 0
      %650 = vmatpush1.bf16.msra.mxu0 %v610
      %651 = vmatprep.subr.bf16.mxu0 0
      %652 = vmatpush1.bf16.msra.mxu0 %v609
      %653 = vmatprep.subr.bf16.mxu0 0
      %654 = vmatpush2.bf16.msra.mxu0 0
      %655 = vmatprep.subr.bf16.mxu0 0
      %656 = vmatpush2.bf16.msra.mxu0 0
      %657 = vmatprep.subr.bf16.mxu0 0
      %658 = vmatpush2.bf16.msra.mxu0 0
      %659 = vmatprep.subr.bf16.mxu0 0
      %660 = vmatpush2.bf16.msra.mxu0 0
      %661 = vmatprep.subr.bf16.mxu0 0
      %662 = vmatpush2.bf16.msra.mxu0 0
      %663 = vmatprep.subr.bf16.mxu0 0
      %664 = vmatpush2.bf16.msra.mxu0 0
      %665 = vmatprep.subr.bf16.mxu0 0
      %666 = vmatpush2.bf16.msra.mxu0 0
      %667 = vmatprep.subr.bf16.mxu0 0
      %668 = vmatpush2.bf16.msra.mxu0 0
      %669 = vmatprep.mubr.bf16.mxu0 0
      %670 = vmatmul.mubr.bf16.gmra.mxu0 %v614
      %v671 = vpop.f32.mrf.mxu0
      %v672 = vadd.f32 %v499, %v671
      %v673 = vpop.f32.mrf.mxu0
      %v674 = vpop.f32.mrf.mxu0
      %v675 = vadd.f32 %v502, %v674
      %v676 = vpop.f32.mrf.mxu0
      %677 = vmatprep.mubr.bf16.mxu0 0
      %678 = vmatmul.mubr.bf16.gmra.mxu0 %v617
      %v679 = vpop.f32.mrf.mxu0
      %v680 = vadd.f32 %v507, %v679
      %v681 = vpop.f32.mrf.mxu0
      %v682 = vpop.f32.mrf.mxu0
      %v683 = vadd.f32 %v510, %v682
      %v684 = vpop.f32.mrf.mxu0
      %685 = vmatprep.mubr.bf16.mxu0 0
      %686 = vmatmul.mubr.bf16.gmra.mxu0 %v620
      %v687 = vpop.f32.mrf.mxu0
      %v688 = vadd.f32 %v515, %v687
      %v689 = vpop.f32.mrf.mxu0
      %v690 = vpop.f32.mrf.mxu0
      %v691 = vadd.f32 %v518, %v690
      %v692 = vpop.f32.mrf.mxu0
      %693 = vmatprep.mubr.bf16.mxu0 0
      %694 = vmatmul.mubr.bf16.gmra.mxu0 %v623
      %v695 = vpop.f32.mrf.mxu0
      %v696 = vadd.f32 %v523, %v695
      %v697 = vpop.f32.mrf.mxu0
      %v698 = vpop.f32.mrf.mxu0
      %v699 = vadd.f32 %v526, %v698
      %v700 = vpop.f32.mrf.mxu0
      %701 = vmatprep.mubr.bf16.mxu0 0
      %702 = vmatmul.mubr.bf16.gmra.mxu0 %v626
      %v703 = vpop.f32.mrf.mxu0
      %v704 = vadd.f32 %v531, %v703
      %v705 = vpop.f32.mrf.mxu0
      %v706 = vpop.f32.mrf.mxu0
      %v707 = vadd.f32 %v534, %v706
      %v708 = vpop.f32.mrf.mxu0
      %709 = vmatprep.mubr.bf16.mxu0 0
      %710 = vmatmul.mubr.bf16.gmra.mxu0 %v629
      %v711 = vpop.f32.mrf.mxu0
      %v712 = vadd.f32 %v539, %v711
      %v713 = vpop.f32.mrf.mxu0
      %v714 = vpop.f32.mrf.mxu0
      %v715 = vadd.f32 %v542, %v714
      %v716 = vpop.f32.mrf.mxu0
      %717 = vmatprep.mubr.bf16.mxu0 0
      %718 = vmatmul.mubr.bf16.gmra.mxu0 %v632
      %v719 = vpop.f32.mrf.mxu0
      %v720 = vadd.f32 %v547, %v719
      %v721 = vpop.f32.mrf.mxu0
      %v722 = vpop.f32.mrf.mxu0
      %v723 = vadd.f32 %v550, %v722
      %v724 = vpop.f32.mrf.mxu0
      %725 = vmatprep.mubr.bf16.mxu0 0
      %726 = vmatmul.mubr.bf16.gmra.mxu0 %v635
      %v727 = vpop.f32.mrf.mxu0
      %v728 = vadd.f32 %v555, %v727
      %v729 = vpop.f32.mrf.mxu0
      %v730 = vpop.f32.mrf.mxu0
      %v731 = vadd.f32 %v558, %v730
      %v732 = vpop.f32.mrf.mxu0
      %733 = vdwg.mxu0
      %v734 = vld [vmem:[%s4] sm:$0x1]
      %v736 = vlaneseq
      %v737 = vshrl.u32 %v736, 7
      %v738 = vsub.s32 0, %v737
      %v739 = vrot.slane %v734, %v738
      %v741 = vadd.f32 %v672, %v739
      %v742 = vadd.f32 %v675, %v739
      %v743 = vadd.f32 %v680, %v739
      %v744 = vadd.f32 %v683, %v739
      %v745 = vadd.f32 %v688, %v739
      %v746 = vadd.f32 %v691, %v739
      %v747 = vadd.f32 %v696, %v739
      %v748 = vadd.f32 %v699, %v739
      %v749 = vadd.f32 %v704, %v739
      %v750 = vadd.f32 %v707, %v739
      %v751 = vadd.f32 %v712, %v739
      %v752 = vadd.f32 %v715, %v739
      %v753 = vadd.f32 %v720, %v739
      %v754 = vadd.f32 %v723, %v739
      %v755 = vadd.f32 %v728, %v739
      %v756 = vadd.f32 %v731, %v739
      %v757 = vxor.u32 %v741, 2147483648
      %v758 = vxor.u32 %v742, 2147483648
      %v759 = vxor.u32 %v743, 2147483648
      %v760 = vxor.u32 %v744, 2147483648
      %v761 = vxor.u32 %v745, 2147483648
      %v762 = vxor.u32 %v746, 2147483648
      %v763 = vxor.u32 %v747, 2147483648
      %v764 = vxor.u32 %v748, 2147483648
      %v765 = vxor.u32 %v749, 2147483648
      %v766 = vxor.u32 %v750, 2147483648
      %v767 = vxor.u32 %v751, 2147483648
      %v768 = vxor.u32 %v752, 2147483648
      %v769 = vxor.u32 %v753, 2147483648
      %v770 = vxor.u32 %v754, 2147483648
      %v771 = vxor.u32 %v755, 2147483648
      %v772 = vxor.u32 %v756, 2147483648
      %v773 = vmul.f32 %v757, 1.442695
      %v774 = vpow.pop %v773
      %v775 = vmul.f32 %v758, 1.442695
      %v776 = vpow.pop %v775
      %v777 = vmul.f32 %v759, 1.442695
      %v778 = vpow.pop %v777
      %v779 = vmul.f32 %v760, 1.442695
      %v780 = vpow.pop %v779
      %v781 = vmul.f32 %v761, 1.442695
      %v782 = vpow.pop %v781
      %v783 = vmul.f32 %v762, 1.442695
      %v784 = vpow.pop %v783
      %v785 = vmul.f32 %v763, 1.442695
      %v786 = vpow.pop %v785
      %v787 = vmul.f32 %v764, 1.442695
      %v788 = vpow.pop %v787
      %v789 = vmul.f32 %v765, 1.442695
      %v790 = vpow.pop %v789
      %v791 = vmul.f32 %v766, 1.442695
      %v792 = vpow.pop %v791
      %v793 = vmul.f32 %v767, 1.442695
      %v794 = vpow.pop %v793
      %v795 = vmul.f32 %v768, 1.442695
      %v796 = vpow.pop %v795
      %v797 = vmul.f32 %v769, 1.442695
      %v798 = vpow.pop %v797
      %v799 = vmul.f32 %v770, 1.442695
      %v800 = vpow.pop %v799
      %v801 = vmul.f32 %v771, 1.442695
      %v802 = vpow.pop %v801
      %v803 = vmul.f32 %v772, 1.442695
      %v804 = vpow.pop %v803
      %v805 = vadd.f32 %v774, 1.0
      %v806 = vadd.f32 %v776, 1.0
      %v807 = vadd.f32 %v778, 1.0
      %v808 = vadd.f32 %v780, 1.0
      %v809 = vadd.f32 %v782, 1.0
      %v810 = vadd.f32 %v784, 1.0
      %v811 = vadd.f32 %v786, 1.0
      %v812 = vadd.f32 %v788, 1.0
      %v813 = vadd.f32 %v790, 1.0
      %v814 = vadd.f32 %v792, 1.0
      %v815 = vadd.f32 %v794, 1.0
      %v816 = vadd.f32 %v796, 1.0
      %v817 = vadd.f32 %v798, 1.0
      %v818 = vadd.f32 %v800, 1.0
      %v819 = vadd.f32 %v802, 1.0
      %v820 = vadd.f32 %v804, 1.0
      %v821 = vrcp.pop %v805
      %v822 = vmul.f32 1.0, %v821
      %v823 = vrcp.pop %v806
      %v824 = vmul.f32 1.0, %v823
      %v825 = vrcp.pop %v807
      %v826 = vmul.f32 1.0, %v825
      %v827 = vrcp.pop %v808
      %v828 = vmul.f32 1.0, %v827
      %v829 = vrcp.pop %v809
      %v830 = vmul.f32 1.0, %v829
      %v831 = vrcp.pop %v810
      %v832 = vmul.f32 1.0, %v831
      %v833 = vrcp.pop %v811
      %v834 = vmul.f32 1.0, %v833
      %v835 = vrcp.pop %v812
      %v836 = vmul.f32 1.0, %v835
      %v837 = vrcp.pop %v813
      %v838 = vmul.f32 1.0, %v837
      %v839 = vrcp.pop %v814
      %v840 = vmul.f32 1.0, %v839
      %v841 = vrcp.pop %v815
      %v842 = vmul.f32 1.0, %v841
      %v843 = vrcp.pop %v816
      %v844 = vmul.f32 1.0, %v843
      %v845 = vrcp.pop %v817
      %v846 = vmul.f32 1.0, %v845
      %v847 = vrcp.pop %v818
      %v848 = vmul.f32 1.0, %v847
      %v849 = vrcp.pop %v819
      %v850 = vmul.f32 1.0, %v849
      %v851 = vrcp.pop %v820
      %v852 = vmul.f32 1.0, %v851
      %v853 = vmul.f32 %v741, %v822
      %v854 = vmul.f32 %v742, %v824
      %v855 = vmul.f32 %v743, %v826
      %v856 = vmul.f32 %v744, %v828
      %v857 = vmul.f32 %v745, %v830
      %v858 = vmul.f32 %v746, %v832
      %v859 = vmul.f32 %v747, %v834
      %v860 = vmul.f32 %v748, %v836
      %v861 = vmul.f32 %v749, %v838
      %v862 = vmul.f32 %v750, %v840
      %v863 = vmul.f32 %v751, %v842
      %v864 = vmul.f32 %v752, %v844
      %v865 = vmul.f32 %v753, %v846
      %v866 = vmul.f32 %v754, %v848
      %v867 = vmul.f32 %v755, %v850
      %v868 = vmul.f32 %v756, %v852
      %v869 = vpack.c.bf16 %v854, %v853
      %v870 = vpack.c.bf16 %v856, %v855
      %v871 = vpack.c.bf16 %v858, %v857
      %v872 = vpack.c.bf16 %v860, %v859
      %v873 = vpack.c.bf16 %v862, %v861
      %v874 = vpack.c.bf16 %v864, %v863
      %v875 = vpack.c.bf16 %v866, %v865
      %v876 = vpack.c.bf16 %v868, %v867
      %v885 = vunpack.c.l.b16 %v869
      %v886 = vunpack.c.h.b16 %v869
      %v887 = vunpack.c.l.b16 %v870
      %v888 = vunpack.c.h.b16 %v870
      %v889 = vunpack.c.l.b16 %v871
      %v890 = vunpack.c.h.b16 %v871
      %v891 = vunpack.c.l.b16 %v872
      %v892 = vunpack.c.h.b16 %v872
      %v893 = vunpack.c.l.b16 %v873
      %v894 = vunpack.c.h.b16 %v873
      %v895 = vunpack.c.l.b16 %v874
      %v896 = vunpack.c.h.b16 %v874
      %v897 = vunpack.c.l.b16 %v875
      %v898 = vunpack.c.h.b16 %v875
      %v899 = vunpack.c.l.b16 %v876
      %v900 = vunpack.c.h.b16 %v876
      %v901 = vpack.c.b16 %v885, %v885
      %v902 = vpack.c.b16 %v886, %v886
      %v903 = vpack.c.b16 %v887, %v887
      %v904 = vpack.c.b16 %v888, %v888
      %v905 = vpack.c.b16 %v889, %v889
      %v906 = vpack.c.b16 %v890, %v890
      %v907 = vpack.c.b16 %v891, %v891
      %v908 = vpack.c.b16 %v892, %v892
      %v909 = vpack.c.b16 %v893, %v893
      %v910 = vpack.c.b16 %v894, %v894
      %v911 = vpack.c.b16 %v895, %v895
      %v912 = vpack.c.b16 %v896, %v896
      %v913 = vpack.c.b16 %v897, %v897
      %v914 = vpack.c.b16 %v898, %v898
      %v915 = vpack.c.b16 %v899, %v899
      %v916 = vpack.c.b16 %v900, %v900
      %vm933 = vcmask 125952
      %934 = vst.msk [vmem:[%s337] sm:$0xf] %vm933, %v901
      %935 = vst.msk [vmem:[%s337 + $0x4] sm:$0xf] %vm933, %v902
      %936 = vst.msk [vmem:[%s337 + $0x8] sm:$0xf] %vm933, %v903
      %937 = vst.msk [vmem:[%s337 + $0xc] sm:$0xf] %vm933, %v904
      %938 = vst.msk [vmem:[%s337 + $0x10] sm:$0xf] %vm933, %v905
      %939 = vst.msk [vmem:[%s337 + $0x14] sm:$0xf] %vm933, %v906
      %940 = vst.msk [vmem:[%s337 + $0x18] sm:$0xf] %vm933, %v907
      %941 = vst.msk [vmem:[%s337 + $0x1c] sm:$0xf] %vm933, %v908
      %942 = vst.msk [vmem:[%s337 + $0x20] sm:$0xf] %vm933, %v909
      %943 = vst.msk [vmem:[%s337 + $0x24] sm:$0xf] %vm933, %v910
      %944 = vst.msk [vmem:[%s337 + $0x28] sm:$0xf] %vm933, %v911
      %945 = vst.msk [vmem:[%s337 + $0x2c] sm:$0xf] %vm933, %v912
      %946 = vst.msk [vmem:[%s337 + $0x30] sm:$0xf] %vm933, %v913
      %947 = vst.msk [vmem:[%s337 + $0x34] sm:$0xf] %vm933, %v914
      %948 = vst.msk [vmem:[%s337 + $0x38] sm:$0xf] %vm933, %v915
      %949 = vst.msk [vmem:[%s337 + $0x3c] sm:$0xf] %vm933, %v916
      %vm950 = vcmask 130048
      %v951 = vsel %vm950, %v853, 0.0
      %v952 = vsel %vm950, %v854, 0.0
      %v953 = vadd.f32 %v951, %v952
      %v954 = vsel %vm950, %v855, 0.0
      %v955 = vadd.f32 %v953, %v954
      %v956 = vsel %vm950, %v856, 0.0
      %v957 = vadd.f32 %v955, %v956
      %v958 = vsel %vm950, %v857, 0.0
      %v959 = vadd.f32 %v957, %v958
      %v960 = vsel %vm950, %v858, 0.0
      %v961 = vadd.f32 %v959, %v960
      %v962 = vsel %vm950, %v859, 0.0
      %v963 = vadd.f32 %v961, %v962
      %v964 = vsel %vm950, %v860, 0.0
      %v965 = vadd.f32 %v963, %v964
      %v966 = vsel %vm950, %v861, 0.0
      %v967 = vadd.f32 %v965, %v966
      %v968 = vsel %vm950, %v862, 0.0
      %v969 = vadd.f32 %v967, %v968
      %v970 = vsel %vm950, %v863, 0.0
      %v971 = vadd.f32 %v969, %v970
      %v972 = vsel %vm950, %v864, 0.0
      %v973 = vadd.f32 %v971, %v972
      %v974 = vsel %vm950, %v865, 0.0
      %v975 = vadd.f32 %v973, %v974
      %v976 = vsel %vm950, %v866, 0.0
      %v977 = vadd.f32 %v975, %v976
      %v978 = vsel %vm950, %v867, 0.0
      %v979 = vadd.f32 %v977, %v978
      %v980 = vsel %vm950, %v868, 0.0
      %v981 = vadd.f32 %v979, %v980
      %v982 = vrot.slane %v981, 4
      %v983 = vadd.f32 %v981, %v982
      %v984 = vrot.slane %v983, 2
      %v985 = vadd.f32 %v983, %v984
      %v986 = vrot.slane %v985, 1
      %v987 = vadd.f32 %v985, %v986
      %vm988 = vcmask 122880
      %989 = vst.msk [vmem:[%s345] sm:$0x1] %vm988, %v987
      %v990 = vmul.f32 %v853, %v853
      %v991 = vmul.f32 %v854, %v854
      %v992 = vmul.f32 %v855, %v855
      %v993 = vmul.f32 %v856, %v856
      %v994 = vmul.f32 %v857, %v857
      %v995 = vmul.f32 %v858, %v858
      %v996 = vmul.f32 %v859, %v859
      %v997 = vmul.f32 %v860, %v860
      %v998 = vmul.f32 %v861, %v861
      %v999 = vmul.f32 %v862, %v862
      %v1000 = vmul.f32 %v863, %v863
      %v1001 = vmul.f32 %v864, %v864
      %v1002 = vmul.f32 %v865, %v865
      %v1003 = vmul.f32 %v866, %v866
      %v1004 = vmul.f32 %v867, %v867
      %v1005 = vmul.f32 %v868, %v868
      %v1006 = vsel %vm950, %v990, 0.0
      %v1007 = vsel %vm950, %v991, 0.0
      %v1008 = vadd.f32 %v1006, %v1007
      %v1009 = vsel %vm950, %v992, 0.0
      %v1010 = vadd.f32 %v1008, %v1009
      %v1011 = vsel %vm950, %v993, 0.0
      %v1012 = vadd.f32 %v1010, %v1011
      %v1013 = vsel %vm950, %v994, 0.0
      %v1014 = vadd.f32 %v1012, %v1013
      %v1015 = vsel %vm950, %v995, 0.0
      %v1016 = vadd.f32 %v1014, %v1015
      %v1017 = vsel %vm950, %v996, 0.0
      %v1018 = vadd.f32 %v1016, %v1017
      %v1019 = vsel %vm950, %v997, 0.0
      %v1020 = vadd.f32 %v1018, %v1019
      %v1021 = vsel %vm950, %v998, 0.0
      %v1022 = vadd.f32 %v1020, %v1021
      %v1023 = vsel %vm950, %v999, 0.0
      %v1024 = vadd.f32 %v1022, %v1023
      %v1025 = vsel %vm950, %v1000, 0.0
      %v1026 = vadd.f32 %v1024, %v1025
      %v1027 = vsel %vm950, %v1001, 0.0
      %v1028 = vadd.f32 %v1026, %v1027
      %v1029 = vsel %vm950, %v1002, 0.0
      %v1030 = vadd.f32 %v1028, %v1029
      %v1031 = vsel %vm950, %v1003, 0.0
      %v1032 = vadd.f32 %v1030, %v1031
      %v1033 = vsel %vm950, %v1004, 0.0
      %v1034 = vadd.f32 %v1032, %v1033
      %v1035 = vsel %vm950, %v1005, 0.0
      %v1036 = vadd.f32 %v1034, %v1035
      %v1037 = vrot.slane %v1036, 4
      %v1038 = vadd.f32 %v1036, %v1037
      %v1039 = vrot.slane %v1038, 2
      %v1040 = vadd.f32 %v1038, %v1039
      %v1041 = vrot.slane %v1040, 1
      %v1042 = vadd.f32 %v1040, %v1041
      %1043 = vst.msk [vmem:[%s345 + $0x1] sm:$0x1] %vm988, %v1042
      %s1044 = smul.u32 16, %s23
      %p1045 = scmp.lt.s32.totalorder %s22, 1
      %s1046 = scalar_select %p1045, %s22, 1
      %p1047 = scmp.lt.s32.totalorder %s1044, 15
      %s1048 = scalar_select %p1047, %s1044, 15
      %s1049 = smul.addr %s1046, 16
      %s1050 = sadd.s32 %s1048, %s1049
      %s1051 = smul.addr %s1050, 4
      %s1052 = scalar_lea.vmem %s5, %s1051
      %p1053 = scmp.lt.s32.totalorder %s22, 1
      %s1054 = scalar_select %p1053, %s22, 1
      %p1055 = scmp.lt.s32.totalorder %s23, 0
      %s1056 = scalar_select %p1055, %s23, 0
      %s1057 = sadd.s32 %s1056, %s1054
      %s1058 = smul.addr %s1057, 2
      %s1059 = scalar_lea.vmem %s6, %s1058
      // Predicated region
      $region41: #{nested_residual_unet_forward.18} parent=39 // pred_check
        %p1060 = pneg %p169
      $region42: #{nested_residual_unet_forward.18} parent=39 // pred_check_branch
        %1062 = sbr.rel (%p1060) target = $region44
      $region43: #{nested_residual_unet_forward.18} parent=39 // pred_region
        %s1063 = smul.u32 16, %s23
      $region44: #{nested_residual_unet_forward.18} parent=39 // pred_fallthru
        _
      // Predicated region
      $region45: #{nested_residual_unet_forward.18} parent=39 // pred_check
        %p1064 = pneg %p197
      $region46: #{nested_residual_unet_forward.18} parent=39 // pred_check_branch
        %1066 = sbr.rel (%p1064) target = $region48
      $region47: #{nested_residual_unet_forward.18} parent=39 // pred_region
        _
      $region48: #{nested_residual_unet_forward.18} parent=39 // pred_fallthru
        _
    $region40: #{nested_residual_unet_forward.18} parent=5 // pred_fallthru
      _
    %p1067 = scmp.le.s32.totalorder 2, %s13
    // Predicated region
    $region49: #{nested_residual_unet_forward.18} parent=5 // pred_check
      %p1068 = pneg %p1067
    $region50: #{nested_residual_unet_forward.18} parent=5 // pred_check_branch
      %1070 = sbr.rel (%p1068) target = $region52
    $region51: #{nested_residual_unet_forward.18} parent=5 // pred_region
      %s1071 = ssub.s32 %s13, 2
      // Predicated region
      $region53: #{nested_residual_unet_forward.18} parent=51 // pred_check
        %p1072 = pneg %p175
      $region54: #{nested_residual_unet_forward.18} parent=51 // pred_check_branch
        %1074 = sbr.rel (%p1072) target = $region56
      $region55: #{nested_residual_unet_forward.18} parent=51 // pred_region
        %s1075 = smul.u32 16, %s25
        %p1076 = scmp.lt.s32.totalorder %s24, 1
        %s1077 = scalar_select %p1076, %s24, 1
        %p1078 = scmp.lt.s32.totalorder %s1075, 15
        %s1079 = scalar_select %p1078, %s1075, 15
        %s1080 = smul.addr %s1077, 16
        %s1081 = sadd.s32 %s1079, %s1080
        %s1082 = smul.addr %s1081, 4
        %s1083 = scalar_lea.vmem %s5, %s1082
      $region56: #{nested_residual_unet_forward.18} parent=51 // pred_fallthru
        _
      // Predicated region
      $region57: #{nested_residual_unet_forward.18} parent=51 // pred_check
        %p1084 = pneg %p203
      $region58: #{nested_residual_unet_forward.18} parent=51 // pred_check_branch
        %1086 = sbr.rel (%p1084) target = $region60
      $region59: #{nested_residual_unet_forward.18} parent=51 // pred_region
        %p1087 = scmp.lt.s32.totalorder %s24, 1
        %s1088 = scalar_select %p1087, %s24, 1
        %p1089 = scmp.lt.s32.totalorder %s25, 0
        %s1090 = scalar_select %p1089, %s25, 0
        %s1091 = sadd.s32 %s1090, %s1088
        %s1092 = smul.addr %s1091, 2
        %s1093 = scalar_lea.vmem %s6, %s1092
      $region60: #{nested_residual_unet_forward.18} parent=51 // pred_fallthru
        _
    $region52: #{nested_residual_unet_forward.18} parent=5 // pred_fallthru
      _
  $region6: #{nested_residual_unet_forward.18} parent=0 // loop_footer
    %s17 = sadd.s32 1, %s13
  $region7: #{nested_residual_unet_forward.18} parent=0 // loop_footer_branch
    %12 = sbr.rel target = $region3
  $region8: #{nested_residual_unet_forward.18} parent=0 // loop_exit
    _

// kernel: nested_residual_unet_forward.19
$region0: #{nested_residual_unet_forward.19}
  #allocation0 [shape = 'u32[]', space=smem, size = 0x4, offset = 0x4, fixed_abs, tag = 'smem constant byte address 0x4 - core index']
  #allocation1 [shape = 'u32[144,128]{1,0:T(1,128)}', space=vmem, size = 0x12000, scoped, tag = 'internal scratch']
  %s0 = inlined_call_operand.vmem [shape: bf16[2,2,1024], index: 0, kind: input, shape index: {}]
  %s1 = inlined_call_operand.vmem [shape: f32[2,1,1024], index: 1, kind: input, shape index: {}]
  %s2 = inlined_call_operand.vmem [shape: f32[2,1,1024], index: 2, kind: input, shape index: {}]
  %s3 = inlined_call_operand.vmem [shape: f32[2,2,1024], index: 3, kind: output, shape index: {}]
  %s4 = sld [smem:[#allocation0]]
  $region45: #{nested_residual_unet_forward.19} parent=0
    _
  %s6 = ssub.s32 1, %s4
  %s7 = scalar_select 0, %s6, %s4
  loop: start=0, step=1, limit=4
  $region2: #{nested_residual_unet_forward.19} parent=0 // loop_pre_header
    _
  $region3: #{nested_residual_unet_forward.19} parent=0 // loop_header
    %s9 = sphi 0, %s13
    %p10 = scmp.ge.s32.totalorder %s9, 4
    %s16 = sphi 0, %s28
    %s17 = sphi 0, %s24
    %s18 = sphi 0, %s16
    %s19 = sphi 0, %s17
    %s20 = sphi 0, %s18
    %s21 = sphi 0, %s19
    %s33 = sphi 0, %s35
    %s36 = sphi 0, %s33
    %s37 = sphi 0, %s36
    %s53 = sphi 0, %s37
    %s59 = sphi 0, %s61
    %s62 = sphi 0, %s59
    %s63 = sphi 0, %s62
    %s79 = sphi 0, %s63
    %s85 = sphi 0, %s87
    %s88 = sphi 0, %s85
    %s89 = sphi 0, %s88
    %s105 = sphi 0, %s89
    %s113 = sphi 0, %s115
    %s116 = sphi 0, %s113
    %s117 = sphi 0, %s116
    %s133 = sphi 0, %s117
  $region4: #{nested_residual_unet_forward.19} parent=0 // loop_header_branch
    %12 = sbr.rel (%p10) target = $region8
  $region5: #{nested_residual_unet_forward.19} parent=0 // loop_body
    %s14 = ssub.s32 %s9, 1
    %s15 = ssub.s32 %s9, 2
    %s22 = sadd.s32 1, %s17
    %p23 = scmp.ge.s32.totalorder %s22, 1
    %s24 = scalar_select %p23, 0, %s22
    %s25 = sadd.s32 1, %s16
    %s26 = scalar_select %p23, %s25, %s16
    %p27 = scmp.ge.s32.totalorder %s26, 2
    %s28 = scalar_select %p27, 0, %s26
    %s29 = ssub.s32 %s16, %s28
    %s30 = ssub.s32 %s17, %s24
    %s31 = sor.u32 %s29, %s30
    %p32 = scmp.eq.s32.totalorder %s31, 0
    %s34 = sadd.s32 %s33, 1
    %s35 = scalar_select %p32, %s33, %s34
    %p38 = pneg %p32
    %p39 = scmp.eq.s32.totalorder %s9, 1
    %p40 = por %p38, %p39
    %p41 = scmp.ne.s32.totalorder %s33, %s36
    %p42 = scmp.eq.s32.totalorder %s9, 0
    %p43 = por %p41, %p42
    %p44 = scmp.ne.s32.totalorder %s33, %s36
    %p45 = scmp.eq.s32.totalorder %s14, 1
    %p46 = por %p44, %p45
    %p47 = scmp.ne.s32.totalorder %s36, %s37
    %p48 = scmp.eq.s32.totalorder %s14, 0
    %p49 = por %p47, %p48
    %p50 = scmp.ne.s32.totalorder %s36, %s37
    %p51 = scmp.eq.s32.totalorder %s15, 1
    %p52 = por %p50, %p51
    %p54 = scmp.ne.s32.totalorder %s37, %s53
    %p55 = scmp.eq.s32.totalorder %s15, 0
    %p56 = por %p54, %p55
    %s57 = ssub.s32 %s16, %s28
    %p58 = scmp.eq.s32.totalorder %s57, 0
    %s60 = sadd.s32 %s59, 1
    %s61 = scalar_select %p58, %s59, %s60
    %p64 = pneg %p58
    %p65 = scmp.eq.s32.totalorder %s9, 1
    %p66 = por %p64, %p65
    %p67 = scmp.ne.s32.totalorder %s59, %s62
    %p68 = scmp.eq.s32.totalorder %s9, 0
    %p69 = por %p67, %p68
    %p70 = scmp.ne.s32.totalorder %s59, %s62
    %p71 = scmp.eq.s32.totalorder %s14, 1
    %p72 = por %p70, %p71
    %p73 = scmp.ne.s32.totalorder %s62, %s63
    %p74 = scmp.eq.s32.totalorder %s14, 0
    %p75 = por %p73, %p74
    %p76 = scmp.ne.s32.totalorder %s62, %s63
    %p77 = scmp.eq.s32.totalorder %s15, 1
    %p78 = por %p76, %p77
    %p80 = scmp.ne.s32.totalorder %s63, %s79
    %p81 = scmp.eq.s32.totalorder %s15, 0
    %p82 = por %p80, %p81
    %s83 = ssub.s32 %s16, %s28
    %p84 = scmp.eq.s32.totalorder %s83, 0
    %s86 = sadd.s32 %s85, 1
    %s87 = scalar_select %p84, %s85, %s86
    %p90 = pneg %p84
    %p91 = scmp.eq.s32.totalorder %s9, 1
    %p92 = por %p90, %p91
    %p93 = scmp.ne.s32.totalorder %s85, %s88
    %p94 = scmp.eq.s32.totalorder %s9, 0
    %p95 = por %p93, %p94
    %p96 = scmp.ne.s32.totalorder %s85, %s88
    %p97 = scmp.eq.s32.totalorder %s14, 1
    %p98 = por %p96, %p97
    %p99 = scmp.ne.s32.totalorder %s88, %s89
    %p100 = scmp.eq.s32.totalorder %s14, 0
    %p101 = por %p99, %p100
    %p102 = scmp.ne.s32.totalorder %s88, %s89
    %p103 = scmp.eq.s32.totalorder %s15, 1
    %p104 = por %p102, %p103
    %p106 = scmp.ne.s32.totalorder %s89, %s105
    %p107 = scmp.eq.s32.totalorder %s15, 0
    %p108 = por %p106, %p107
    %s109 = ssub.s32 %s16, %s28
    %s110 = ssub.s32 %s17, %s24
    %s111 = sor.u32 %s109, %s110
    %p112 = scmp.eq.s32.totalorder %s111, 0
    %s114 = sadd.s32 %s113, 1
    %s115 = scalar_select %p112, %s113, %s114
    %p118 = pneg %p112
    %p119 = scmp.eq.s32.totalorder %s9, 1
    %p120 = por %p118, %p119
    %p121 = scmp.ne.s32.totalorder %s113, %s116
    %p122 = scmp.eq.s32.totalorder %s9, 0
    %p123 = por %p121, %p122
    %p124 = scmp.ne.s32.totalorder %s113, %s116
    %p125 = scmp.eq.s32.totalorder %s14, 1
    %p126 = por %p124, %p125
    %p127 = scmp.ne.s32.totalorder %s116, %s117
    %p128 = scmp.eq.s32.totalorder %s14, 0
    %p129 = por %p127, %p128
    %p130 = scmp.ne.s32.totalorder %s116, %s117
    %p131 = scmp.eq.s32.totalorder %s15, 1
    %p132 = por %p130, %p131
    %p134 = scmp.ne.s32.totalorder %s117, %s133
    %p135 = scmp.eq.s32.totalorder %s15, 0
    %p136 = por %p134, %p135
    %p137 = scmp.le.s32.totalorder 1, %s9
    %p138 = scmp.lt.s32.totalorder %s9, 3
    %p139 = pnand %p137, %p138
    %p140 = pneg %p139
    // Predicated region
    $region9: #{nested_residual_unet_forward.19} parent=5 // pred_check
      _
    $region10: #{nested_residual_unet_forward.19} parent=5 // pred_check_branch
      %142 = sbr.rel (%p139) target = $region12
    $region11: #{nested_residual_unet_forward.19} parent=5 // pred_region
      %s143 = ssub.s32 %s9, 1
    $region12: #{nested_residual_unet_forward.19} parent=5 // pred_fallthru
      _
    %p144 = scmp.lt.s32.totalorder %s9, 2
    // Predicated region
    $region13: #{nested_residual_unet_forward.19} parent=5 // pred_check
      %p145 = pneg %p144
    $region14: #{nested_residual_unet_forward.19} parent=5 // pred_check_branch
      %147 = sbr.rel (%p145) target = $region16
    $region15: #{nested_residual_unet_forward.19} parent=5 // pred_region
      // Predicated region
      $region17: #{nested_residual_unet_forward.19} parent=15 // pred_check
        %p148 = pneg %p43
      $region18: #{nested_residual_unet_forward.19} parent=15 // pred_check_branch
        %150 = sbr.rel (%p148) target = $region20
      $region19: #{nested_residual_unet_forward.19} parent=15 // pred_region
        %p151 = scmp.lt.s32.totalorder %s16, 1
        %s152 = scalar_select %p151, %s16, 1
        %p153 = scmp.lt.s32.totalorder %s17, 0
        %s154 = scalar_select %p153, %s17, 0
        %s155 = smul.addr %s154, 8
        %s156 = smul.addr %s152, 8
        %s157 = sadd.s32 %s155, %s156
        %s158 = scalar_lea.vmem %s0, %s157
      $region20: #{nested_residual_unet_forward.19} parent=15 // pred_fallthru
        _
      // Predicated region
      $region21: #{nested_residual_unet_forward.19} parent=15 // pred_check
        %p159 = pneg %p69
      $region22: #{nested_residual_unet_forward.19} parent=15 // pred_check_branch
        %161 = sbr.rel (%p159) target = $region24
      $region23: #{nested_residual_unet_forward.19} parent=15 // pred_region
        %p162 = scmp.lt.s32.totalorder %s16, 1
        %s163 = scalar_select %p162, %s16, 1
        %s164 = smul.addr %s163, 8
        %s165 = scalar_lea.vmem %s1, %s164
      $region24: #{nested_residual_unet_forward.19} parent=15 // pred_fallthru
        _
      // Predicated region
      $region25: #{nested_residual_unet_forward.19} parent=15 // pred_check
        %p166 = pneg %p95
      $region26: #{nested_residual_unet_forward.19} parent=15 // pred_check_branch
        %168 = sbr.rel (%p166) target = $region28
      $region27: #{nested_residual_unet_forward.19} parent=15 // pred_region
        %p169 = scmp.lt.s32.totalorder %s16, 1
        %s170 = scalar_select %p169, %s16, 1
        %s171 = smul.addr %s170, 8
        %s172 = scalar_lea.vmem %s2, %s171
      $region28: #{nested_residual_unet_forward.19} parent=15 // pred_fallthru
        _
    $region16: #{nested_residual_unet_forward.19} parent=5 // pred_fallthru
      _
    %p173 = scmp.le.s32.totalorder 1, %s9
    %p174 = scmp.lt.s32.totalorder %s9, 3
    %p175 = pnand %p173, %p174
    %p176 = pneg %p175
    // Predicated region
    $region29: #{nested_residual_unet_forward.19} parent=5 // pred_check
      _
    $region30: #{nested_residual_unet_forward.19} parent=5 // pred_check_branch
      %178 = sbr.rel (%p175) target = $region32
    $region31: #{nested_residual_unet_forward.19} parent=5 // pred_region
      %s179 = ssub.s32 %s9, 1
      %p180 = scmp.lt.s32.totalorder %s18, 1
      %s181 = scalar_select %p180, %s18, 1
      %p182 = scmp.lt.s32.totalorder %s19, 0
      %s183 = scalar_select %p182, %s19, 0
      %s184 = smul.addr %s183, 8
      %s185 = smul.addr %s181, 8
      %s186 = sadd.s32 %s184, %s185
      %s187 = scalar_lea.vmem %s0, %s186
      %p188 = pneg %p49
      %p189 = pneg %p46
      %p190 = scmp.lt.s32.totalorder %s18, 1
      %s191 = scalar_select %p190, %s18, 1
      %s192 = smul.addr %s191, 8
      %s193 = scalar_lea.vmem %s1, %s192
      %p194 = pneg %p75
      %p195 = pneg %p72
      %p196 = scmp.lt.s32.totalorder %s18, 1
      %s197 = scalar_select %p196, %s18, 1
      %s198 = smul.addr %s197, 8
      %s199 = scalar_lea.vmem %s2, %s198
      %p200 = pneg %p101
      %p201 = pneg %p98
      %p202 = pneg %p129
      %p203 = pneg %p126
      %p204 = scmp.lt.s32.totalorder %s18, 1
      %s205 = scalar_select %p204, %s18, 1
      %p206 = scmp.lt.s32.totalorder %s19, 0
      %s207 = scalar_select %p206, %s19, 0
      %s208 = smul.addr %s207, 8
      %s209 = smul.addr %s205, 8
      %s210 = sadd.s32 %s208, %s209
      %s211 = smul.addr %s210, 2
      %s212 = scalar_lea.vmem %s3, %s211
      %p213 = scmp.lt.s32.totalorder %s18, 1
      %s214 = scalar_select %p213, %s18, 1
      %p215 = scmp.lt.s32.totalorder %s19, 0
      %s216 = scalar_select %p215, %s19, 0
      %s217 = smul.addr %s216, 8
      %s218 = smul.addr %s214, 8
      %s219 = sadd.s32 %s217, %s218
      %s220 = scalar_lea.vmem %s0, %s219
      %p221 = scmp.lt.s32.totalorder %s18, 1
      %s222 = scalar_select %p221, %s18, 1
      %s223 = smul.addr %s222, 8
      %s224 = scalar_lea.vmem %s1, %s223
      %p225 = scmp.lt.s32.totalorder %s18, 1
      %s226 = scalar_select %p225, %s18, 1
      %s227 = smul.addr %s226, 8
      %s228 = scalar_lea.vmem %s2, %s227
      %p229 = scmp.lt.s32.totalorder %s18, 1
      %s230 = scalar_select %p229, %s18, 1
      %p231 = scmp.lt.s32.totalorder %s19, 0
      %s232 = scalar_select %p231, %s19, 0
      %s233 = smul.addr %s232, 8
      %s234 = smul.addr %s230, 8
      %s235 = sadd.s32 %s233, %s234
      %s236 = smul.addr %s235, 2
      %s237 = scalar_lea.vmem %s3, %s236
      %v238 = vld [vmem:[%s220] sm:$0xff]
      %v239 = vunpack.c.l.bf16 %v238
      %v240 = vunpack.c.h.bf16 %v238
      %v241 = vld [vmem:[%s224] sm:$0xff]
      %v243 = vlaneseq
      %v244 = vshrl.u32 %v243, 7
      %v245 = vsub.s32 0, %v244
      %v246 = vrot.slane %v241, %v245
      %v247 = vlaneseq
      %v248 = vshrl.u32 %v247, 7
      %v249 = vsub.s32 1, %v248
      %v250 = vrot.slane %v241, %v249
      %v251 = vlaneseq
      %v252 = vshrl.u32 %v251, 7
      %v253 = vsub.s32 2, %v252
      %v254 = vrot.slane %v241, %v253
      %v255 = vlaneseq
      %v256 = vshrl.u32 %v255, 7
      %v257 = vsub.s32 3, %v256
      %v258 = vrot.slane %v241, %v257
      %v259 = vlaneseq
      %v260 = vshrl.u32 %v259, 7
      %v261 = vsub.s32 4, %v260
      %v262 = vrot.slane %v241, %v261
      %v263 = vlaneseq
      %v264 = vshrl.u32 %v263, 7
      %v265 = vsub.s32 5, %v264
      %v266 = vrot.slane %v241, %v265
      %v267 = vlaneseq
      %v268 = vshrl.u32 %v267, 7
      %v269 = vsub.s32 6, %v268
      %v270 = vrot.slane %v241, %v269
      %v271 = vlaneseq
      %v272 = vshrl.u32 %v271, 7
      %v273 = vsub.s32 7, %v272
      %v274 = vrot.slane %v241, %v273
      %v275 = vcombine.low %v246, %v250
      %v276 = vcombine.low %v254, %v258
      %v278 = vunpack.c.l.s4 1983009808
      %v279 = vunpack.c.0.s8 %v278
      %v280 = vlaneseq
      %v281 = vshrl.u32 %v280, 7
      %v282 = vsub.s32 %v279, %v281
      %v283 = vrot.slane %v275, %v282
      %v285 = vunpack.c.l.s4 1983009808
      %v286 = vunpack.c.0.s8 %v285
      %v287 = vlaneseq
      %v288 = vshrl.u32 %v287, 7
      %v289 = vsub.s32 %v286, %v288
      %v290 = vrot.slane %v276, %v289
      %v291 = vcombine.low %v283, %v290
      %v292 = vcombine.low %v262, %v266
      %v293 = vcombine.low %v270, %v274
      %v295 = vunpack.c.l.s4 1983009808
      %v296 = vunpack.c.0.s8 %v295
      %v297 = vlaneseq
      %v298 = vshrl.u32 %v297, 7
      %v299 = vsub.s32 %v296, %v298
      %v300 = vrot.slane %v292, %v299
      %v302 = vunpack.c.l.s4 1983009808
      %v303 = vunpack.c.0.s8 %v302
      %v304 = vlaneseq
      %v305 = vshrl.u32 %v304, 7
      %v306 = vsub.s32 %v303, %v305
      %v307 = vrot.slane %v293, %v306
      %v308 = vcombine.low %v300, %v307
      %v311 = vmul.f32 %v239, %v291
      %v312 = vmul.f32 %v240, %v308
      %v313 = vld [vmem:[%s228] sm:$0xff]
      %v315 = vlaneseq
      %v316 = vshrl.u32 %v315, 7
      %v317 = vsub.s32 0, %v316
      %v318 = vrot.slane %v313, %v317
      %v319 = vlaneseq
      %v320 = vshrl.u32 %v319, 7
      %v321 = vsub.s32 1, %v320
      %v322 = vrot.slane %v313, %v321
      %v323 = vlaneseq
      %v324 = vshrl.u32 %v323, 7
      %v325 = vsub.s32 2, %v324
      %v326 = vrot.slane %v313, %v325
      %v327 = vlaneseq
      %v328 = vshrl.u32 %v327, 7
      %v329 = vsub.s32 3, %v328
      %v330 = vrot.slane %v313, %v329
      %v331 = vlaneseq
      %v332 = vshrl.u32 %v331, 7
      %v333 = vsub.s32 4, %v332
      %v334 = vrot.slane %v313, %v333
      %v335 = vlaneseq
      %v336 = vshrl.u32 %v335, 7
      %v337 = vsub.s32 5, %v336
      %v338 = vrot.slane %v313, %v337
      %v339 = vlaneseq
      %v340 = vshrl.u32 %v339, 7
      %v341 = vsub.s32 6, %v340
      %v342 = vrot.slane %v313, %v341
      %v343 = vlaneseq
      %v344 = vshrl.u32 %v343, 7
      %v345 = vsub.s32 7, %v344
      %v346 = vrot.slane %v313, %v345
      %v347 = vcombine.low %v318, %v322
      %v348 = vcombine.low %v326, %v330
      %v350 = vunpack.c.l.s4 1983009808
      %v351 = vunpack.c.0.s8 %v350
      %v352 = vlaneseq
      %v353 = vshrl.u32 %v352, 7
      %v354 = vsub.s32 %v351, %v353
      %v355 = vrot.slane %v347, %v354
      %v357 = vunpack.c.l.s4 1983009808
      %v358 = vunpack.c.0.s8 %v357
      %v359 = vlaneseq
      %v360 = vshrl.u32 %v359, 7
      %v361 = vsub.s32 %v358, %v360
      %v362 = vrot.slane %v348, %v361
      %v363 = vcombine.low %v355, %v362
      %v364 = vcombine.low %v334, %v338
      %v365 = vcombine.low %v342, %v346
      %v367 = vunpack.c.l.s4 1983009808
      %v368 = vunpack.c.0.s8 %v367
      %v369 = vlaneseq
      %v370 = vshrl.u32 %v369, 7
      %v371 = vsub.s32 %v368, %v370
      %v372 = vrot.slane %v364, %v371
      %v374 = vunpack.c.l.s4 1983009808
      %v375 = vunpack.c.0.s8 %v374
      %v376 = vlaneseq
      %v377 = vshrl.u32 %v376, 7
      %v378 = vsub.s32 %v375, %v377
      %v379 = vrot.slane %v365, %v378
      %v380 = vcombine.low %v372, %v379
      %v383 = vadd.f32 %v311, %v363
      %v384 = vadd.f32 %v312, %v380
      %v385 = vxor.u32 %v383, 2147483648
      %v386 = vxor.u32 %v384, 2147483648
      %v387 = vmul.f32 %v385, 1.442695
      %v388 = vpow.pop %v387
      %v389 = vmul.f32 %v386, 1.442695
      %v390 = vpow.pop %v389
      %v391 = vadd.f32 %v388, 1.0
      %v392 = vadd.f32 %v390, 1.0
      %v393 = vrcp.pop %v391
      %v394 = vmul.f32 1.0, %v393
      %v395 = vrcp.pop %v392
      %v396 = vmul.f32 1.0, %v395
      %v397 = vmul.f32 %v383, %v394
      %v398 = vmul.f32 %v384, %v396
      %399 = vst [vmem:[%s237] sm:$0xff] %v397
      %400 = vst [vmem:[%s237 + $0x8] sm:$0xff] %v398
      %p401 = scmp.lt.s32.totalorder %s18, 1
      %s402 = scalar_select %p401, %s18, 1
      %p403 = scmp.lt.s32.totalorder %s19, 0
      %s404 = scalar_select %p403, %s19, 0
      %s405 = smul.addr %s404, 8
      %s406 = smul.addr %s402, 8
      %s407 = sadd.s32 %s405, %s406
      %s408 = smul.addr %s407, 2
      %s409 = scalar_lea.vmem %s3, %s408
      // Predicated region
      $region33: #{nested_residual_unet_forward.19} parent=31 // pred_check
        %p410 = pneg %p126
      $region34: #{nested_residual_unet_forward.19} parent=31 // pred_check_branch
        %412 = sbr.rel (%p410) target = $region36
      $region35: #{nested_residual_unet_forward.19} parent=31 // pred_region
        _
      $region36: #{nested_residual_unet_forward.19} parent=31 // pred_fallthru
        _
    $region32: #{nested_residual_unet_forward.19} parent=5 // pred_fallthru
      _
    %p413 = scmp.le.s32.totalorder 2, %s9
    // Predicated region
    $region37: #{nested_residual_unet_forward.19} parent=5 // pred_check
      %p414 = pneg %p413
    $region38: #{nested_residual_unet_forward.19} parent=5 // pred_check_branch
      %416 = sbr.rel (%p414) target = $region40
    $region39: #{nested_residual_unet_forward.19} parent=5 // pred_region
      %s417 = ssub.s32 %s9, 2
      // Predicated region
      $region41: #{nested_residual_unet_forward.19} parent=39 // pred_check
        %p418 = pneg %p132
      $region42: #{nested_residual_unet_forward.19} parent=39 // pred_check_branch
        %420 = sbr.rel (%p418) target = $region44
      $region43: #{nested_residual_unet_forward.19} parent=39 // pred_region
        %p421 = scmp.lt.s32.totalorder %s20, 1
        %s422 = scalar_select %p421, %s20, 1
        %p423 = scmp.lt.s32.totalorder %s21, 0
        %s424 = scalar_select %p423, %s21, 0
        %s425 = smul.addr %s424, 8
        %s426 = smul.addr %s422, 8
        %s427 = sadd.s32 %s425, %s426
        %s428 = smul.addr %s427, 2
        %s429 = scalar_lea.vmem %s3, %s428
      $region44: #{nested_residual_unet_forward.19} parent=39 // pred_fallthru
        _
    $region40: #{nested_residual_unet_forward.19} parent=5 // pred_fallthru
      _
  $region6: #{nested_residual_unet_forward.19} parent=0 // loop_footer
    %s13 = sadd.s32 1, %s9
  $region7: #{nested_residual_unet_forward.19} parent=0 // loop_footer_branch
    %8 = sbr.rel target = $region3
  $region8: #{nested_residual_unet_forward.19} parent=0 // loop_exit
    _

</llo_original>
